<compile_context>
chip_gen: v7x
topology: tpu7x:2x2x1
jax: 0.10.0
libtpu: 0.0.40
codegen_flags: <defaults>
</compile_context>

<pallas_src>
import functools

import jax
import jax.numpy as jnp
from jax.experimental import pallas as pl
from jax.experimental.pallas import tpu as pltpu


def _conv_stats_kernel(xp_ref, w_ref, conv_ref, stats_ref, patches_ref,
                       *, kh, kw, dh, dw, h_out, w_out):
    """Per batch element: conv (folded-K MXU dots) + BN stat partials.

    xp_ref:      (1, C_in, Hp, Wp)   padded input image (read once from HBM)
    w_ref:       (C_out, K)          folded conv weights, K = kh*kw*C_in
    conv_ref:    (1, C_out, Ho*Wo)   raw conv output (pre-BN), lane-dense
    stats_ref:   (1, C_out, 2)       per-batch per-channel [sum, sum_sq]
    patches_ref: (K, Ho, Wo) VMEM    scratch holding the gathered taps
    """
    c_in = xp_ref.shape[1]
    c_out = w_ref.shape[0]

    # 1) Gather the kh*kw taps into the VMEM scratch.  Pure ref slicing
    #    (no value reshape/concatenate), so it always lowers; the replication
    #    lives only in VMEM, never in HBM.
    for t in range(kh * kw):
        i, j = divmod(t, kw)
        patches_ref[t * c_in:(t + 1) * c_in] = (
            xp_ref[0, :, i * dh:i * dh + h_out, j * dw:j * dw + w_out])

    w = w_ref[...]                                     # (C_out, K) f32, hoisted
    s1 = jnp.zeros((c_out, 1), jnp.float32)
    s2 = jnp.zeros((c_out, 1), jnp.float32)

    # 2) One folded-K matmul per output row; each writes a 16-lane slice of the
    #    lane-dense (C_out, Ho*Wo) output block.  MXU utilization is irrelevant
    #    here (HBM-bound regime).  No conv bias: it cancels under training BN.
    for h in range(h_out):
        rhs = patches_ref[:, h, :]                                 # (K, Wo)
        acc = jnp.dot(w, rhs, preferred_element_type=jnp.float32)  # (C_out, Wo)
        conv_ref[0, :, h * w_out:(h + 1) * w_out] = acc.astype(conv_ref.dtype)
        s1 = s1 + jnp.sum(acc, axis=1, keepdims=True)
        s2 = s2 + jnp.sum(acc * acc, axis=1, keepdims=True)

    # Stats accumulated from the f32 acc (before any bf16 cast of conv_ref).
    stats_ref[0, :, 0:1] = s1
    stats_ref[0, :, 1:2] = s2


def _bn_elu_kernel(conv_ref, scale_ref, shift_ref, o_ref):
    """Per batch element: fused BN affine (y = x*scale + shift) + ELU(alpha=1)."""
    y = (conv_ref[...].astype(jnp.float32) * scale_ref[...] + shift_ref[...])
    o_ref[...] = jnp.where(y > 0, y,
                           jnp.exp(jnp.minimum(y, 0.0)) - 1.0).astype(o_ref.dtype)


def conv_block_forward(x_nchw, weight, bias, gamma, beta,
                       padding=(0, 0), dilation=(1, 1), eps=1e-5,
                       conv_dtype=jnp.bfloat16):
    """Forward pass of conv_block. x_nchw: (N, C_in, H, W) like PyTorch."""
    n, c_in, h, w = x_nchw.shape
    c_out, _, kh, kw = weight.shape
    ph, pw = padding
    dh, dw = dilation
    h_out = h + 2 * ph - dh * (kh - 1)
    w_out = w + 2 * pw - dw * (kw - 1)
    hw = h_out * w_out
    m = n * hw
    k_dim = kh * kw * c_in

    # `bias` is intentionally unused: under training-mode BatchNorm a per-channel
    # conv bias shifts the activations and their batch mean identically, so the
    # normalized output is bit-for-bit the same without it (variance unchanged).
    del bias

    # ---- glue (plain JAX): spatial zero-pad once (~1x input bytes), fold W ----
    xp = jnp.pad(x_nchw, ((0, 0), (0, 0), (ph, ph), (pw, pw))).astype(jnp.float32)
    hp, wp = h + 2 * ph, w + 2 * pw
    # PyTorch weight (C_out, C_in, kh, kw) -> (C_out, K) with K = (tap, c_in),
    # matching the patches_ref row order (tap-major, channel-minor).
    w_t = jnp.transpose(weight, (0, 2, 3, 1)).reshape(c_out, k_dim)
    w_t = w_t.astype(jnp.float32)

    # ---- pass 1: conv -> raw activations + per-batch BN stat partials ----
    kernel1 = functools.partial(_conv_stats_kernel, kh=kh, kw=kw, dh=dh, dw=dw,
                                h_out=h_out, w_out=w_out)
    conv_flat, stats = pl.pallas_call(
        kernel1,
        out_shape=(jax.ShapeDtypeStruct((n, c_out, hw), conv_dtype),
                   jax.ShapeDtypeStruct((n, c_out, 2), jnp.float32)),
        grid=(n,),
        in_specs=[
            pl.BlockSpec((1, c_in, hp, wp), lambda b: (b, 0, 0, 0)),
            pl.BlockSpec((c_out, k_dim), lambda b: (0, 0)),
        ],
        out_specs=(
            pl.BlockSpec((1, c_out, hw), lambda b: (b, 0, 0)),
            pl.BlockSpec((1, c_out, 2), lambda b: (b, 0, 0)),
        ),
        scratch_shapes=[pltpu.VMEM((k_dim, h_out, w_out), jnp.float32)],
        compiler_params=pltpu.CompilerParams(dimension_semantics=("parallel",)),
    )(xp, w_t)

    # ---- glue: finalize global BN stats, fold affine into scale/shift ----
    tot = jnp.sum(stats, axis=0)                        # (C_out, 2)
    mean = tot[:, 0] / m
    # E[x^2]-E[x]^2 in f32; clamp tiny negative values from cancellation.
    var = jnp.maximum(tot[:, 1] / m - mean * mean, 0.0)
    scale = gamma.astype(jnp.float32) * jax.lax.rsqrt(var + eps)
    shift = beta.astype(jnp.float32) - mean * scale

    # ---- pass 2: normalize + ELU, output directly in (N, C_out, Ho*Wo) ----
    out_flat = pl.pallas_call(
        _bn_elu_kernel,
        out_shape=jax.ShapeDtypeStruct((n, c_out, hw), x_nchw.dtype),
        grid=(n,),
        in_specs=[
            pl.BlockSpec((1, c_out, hw), lambda b: (b, 0, 0)),
            pl.BlockSpec((1, c_out, 1), lambda b: (0, 0, 0)),
            pl.BlockSpec((1, c_out, 1), lambda b: (0, 0, 0)),
        ],
        out_specs=pl.BlockSpec((1, c_out, hw), lambda b: (b, 0, 0)),
        compiler_params=pltpu.CompilerParams(dimension_semantics=("parallel",)),
    )(conv_flat, scale.reshape(1, c_out, 1), shift.reshape(1, c_out, 1))

    # Free metadata reshape (no transpose / data movement) back to NCHW.
    return out_flat.reshape(n, c_out, h_out, w_out)


def _reference(x, weight, bias, gamma, beta, padding, dilation, eps=1e-5):
    """Pure-JAX reference of Conv2d + BatchNorm2d(train) + ELU, NCHW."""
    y = jax.lax.conv_general_dilated(
        x, weight, window_strides=(1, 1),
        padding=[(padding[0], padding[0]), (padding[1], padding[1])],
        rhs_dilation=dilation,
        dimension_numbers=('NCHW', 'OIHW', 'NCHW'))
    y = y + bias.reshape(1, -1, 1, 1)
    mean = jnp.mean(y, axis=(0, 2, 3), keepdims=True)
    var = jnp.mean((y - mean) ** 2, axis=(0, 2, 3), keepdims=True)
    y = (y - mean) * jax.lax.rsqrt(var + eps)
    y = y * gamma.reshape(1, -1, 1, 1) + beta.reshape(1, -1, 1, 1)
    return jnp.where(y > 0, y, jnp.exp(jnp.minimum(y, 0.0)) - 1.0)


if __name__ == "__main__":
    # Module config: conv_block(in_ch=4, out_ch=8, kernel_size=(3,3),
    #                           padding=(1,1), dilation=(1,1))
    in_ch, out_ch = 4, 8
    kernel_size = (3, 3)
    padding = (1, 1)
    dilation = (1, 1)

    key = jax.random.PRNGKey(0)
    kx, kw_, kb, kg, kbe = jax.random.split(key, 5)

    x = jax.random.normal(kx, (2, in_ch, 16, 16), dtype=jnp.float32)
    weight = 0.1 * jax.random.normal(
        kw_, (out_ch, in_ch, kernel_size[0], kernel_size[1]), dtype=jnp.float32)
    bias = 0.1 * jax.random.normal(kb, (out_ch,), dtype=jnp.float32)
    gamma = 1.0 + 0.1 * jax.random.normal(kg, (out_ch,), dtype=jnp.float32)
    beta = 0.1 * jax.random.normal(kbe, (out_ch,), dtype=jnp.float32)

    ref = jax.block_until_ready(
        _reference(x, weight, bias, gamma, beta, padding, dilation))

    # Exactness check: f32 conv intermediate -> tight tolerance.
    out_f32 = jax.block_until_ready(conv_block_forward(
        x, weight, bias, gamma, beta,
        padding=padding, dilation=dilation, conv_dtype=jnp.float32))
    assert out_f32.shape == ref.shape == (2, out_ch, 16, 16)
    assert jnp.allclose(out_f32, ref, atol=1e-4, rtol=1e-4), (
        f"max abs err {jnp.max(jnp.abs(out_f32 - ref))}")

    # Default (perf) path: bf16 conv round-trip -> bf16-level tolerance.
    out_bf16 = jax.block_until_ready(conv_block_forward(
        x, weight, bias, gamma, beta,
        padding=padding, dilation=dilation))
    assert out_bf16.shape == ref.shape
    assert jnp.allclose(out_bf16, ref, atol=5e-2, rtol=5e-2), (
        f"max abs err {jnp.max(jnp.abs(out_bf16 - ref))}")

    print("KERNEL_OK")
</pallas_src>

<mosaic_0001>
module attributes {stable_mosaic.version = 11 : i64} {
  func.func @_conv_stats_kernel(%arg0: i32, %arg1: memref<1x4x18x18xf32, #tpu.memory_space<vmem>>, %arg2: memref<8x36xf32, #tpu.memory_space<vmem>>, %arg3: memref<1x8x256xf32, #tpu.memory_space<vmem>>, %arg4: memref<1x8x2xf32, #tpu.memory_space<vmem>>, %arg5: memref<36x16x16xf32, #tpu.memory_space<vmem>>) attributes {dimension_semantics = [#tpu.dimension_semantics<parallel>], iteration_bounds = array<i64: 2>, scalar_prefetch = 0 : i64, scratch_operands = 1 : i64, tpu.core_type = #tpu.core_type<tc>, window_params = [{transform_indices = @transform_0, window_bounds = array<i64: 1, 4, 18, 18>}, {pipeline_mode = #tpu.pipeline_mode<synchronous>, transform_indices = @transform_1, window_bounds = array<i64: 8, 36>}, {transform_indices = @transform_2, window_bounds = array<i64: 1, 8, 256>}, {transform_indices = @transform_3, window_bounds = array<i64: 1, 8, 2>}]} {
    %c0 = arith.constant 0 : index
    %c0_0 = arith.constant 0 : index
    %c0_1 = arith.constant 0 : index
    %c0_2 = arith.constant 0 : index
    %0 = vector.load %arg1[%c0, %c0_0, %c0_1, %c0_2] : memref<1x4x18x18xf32, #tpu.memory_space<vmem>>, vector<1x4x16x16xf32>
    %1 = vector.shape_cast %0 : vector<1x4x16x16xf32> to vector<4x16x16xf32>
    %c0_3 = arith.constant 0 : index
    %c0_4 = arith.constant 0 : index
    %c0_5 = arith.constant 0 : index
    %2 = vector.load %arg5[%c0_3, %c0_4, %c0_5] : memref<36x16x16xf32, #tpu.memory_space<vmem>>, vector<4x16x16xf32>
    tpu.vector_store %arg5[%c0_3, %c0_4, %c0_5], %1 {strides = array<i32>} : memref<36x16x16xf32, #tpu.memory_space<vmem>>, vector<4x16x16xf32>,
    %c0_6 = arith.constant 0 : index
    %c0_7 = arith.constant 0 : index
    %c0_8 = arith.constant 0 : index
    %c1 = arith.constant 1 : index
    %3 = vector.load %arg1[%c0_6, %c0_7, %c0_8, %c1] : memref<1x4x18x18xf32, #tpu.memory_space<vmem>>, vector<1x4x16x16xf32>
    %4 = vector.shape_cast %3 : vector<1x4x16x16xf32> to vector<4x16x16xf32>
    %c4 = arith.constant 4 : index
    %c0_9 = arith.constant 0 : index
    %c0_10 = arith.constant 0 : index
    %5 = vector.load %arg5[%c4, %c0_9, %c0_10] : memref<36x16x16xf32, #tpu.memory_space<vmem>>, vector<4x16x16xf32>
    tpu.vector_store %arg5[%c4, %c0_9, %c0_10], %4 {strides = array<i32>} : memref<36x16x16xf32, #tpu.memory_space<vmem>>, vector<4x16x16xf32>,
    %c0_11 = arith.constant 0 : index
    %c0_12 = arith.constant 0 : index
    %c0_13 = arith.constant 0 : index
    %c2 = arith.constant 2 : index
    %6 = vector.load %arg1[%c0_11, %c0_12, %c0_13, %c2] : memref<1x4x18x18xf32, #tpu.memory_space<vmem>>, vector<1x4x16x16xf32>
    %7 = vector.shape_cast %6 : vector<1x4x16x16xf32> to vector<4x16x16xf32>
    %c8 = arith.constant 8 : index
    %c0_14 = arith.constant 0 : index
    %c0_15 = arith.constant 0 : index
    %8 = vector.load %arg5[%c8, %c0_14, %c0_15] : memref<36x16x16xf32, #tpu.memory_space<vmem>>, vector<4x16x16xf32>
    tpu.vector_store %arg5[%c8, %c0_14, %c0_15], %7 {strides = array<i32>} : memref<36x16x16xf32, #tpu.memory_space<vmem>>, vector<4x16x16xf32>,
    %c0_16 = arith.constant 0 : index
    %c0_17 = arith.constant 0 : index
    %c1_18 = arith.constant 1 : index
    %c0_19 = arith.constant 0 : index
    %9 = vector.load %arg1[%c0_16, %c0_17, %c1_18, %c0_19] : memref<1x4x18x18xf32, #tpu.memory_space<vmem>>, vector<1x4x16x16xf32>
    %10 = vector.shape_cast %9 : vector<1x4x16x16xf32> to vector<4x16x16xf32>
    %c12 = arith.constant 12 : index
    %c0_20 = arith.constant 0 : index
    %c0_21 = arith.constant 0 : index
    %11 = vector.load %arg5[%c12, %c0_20, %c0_21] : memref<36x16x16xf32, #tpu.memory_space<vmem>>, vector<4x16x16xf32>
    tpu.vector_store %arg5[%c12, %c0_20, %c0_21], %10 {strides = array<i32>} : memref<36x16x16xf32, #tpu.memory_space<vmem>>, vector<4x16x16xf32>,
    %c0_22 = arith.constant 0 : index
    %c0_23 = arith.constant 0 : index
    %c1_24 = arith.constant 1 : index
    %c1_25 = arith.constant 1 : index
    %12 = vector.load %arg1[%c0_22, %c0_23, %c1_24, %c1_25] : memref<1x4x18x18xf32, #tpu.memory_space<vmem>>, vector<1x4x16x16xf32>
    %13 = vector.shape_cast %12 : vector<1x4x16x16xf32> to vector<4x16x16xf32>
    %c16 = arith.constant 16 : index
    %c0_26 = arith.constant 0 : index
    %c0_27 = arith.constant 0 : index
    %14 = vector.load %arg5[%c16, %c0_26, %c0_27] : memref<36x16x16xf32, #tpu.memory_space<vmem>>, vector<4x16x16xf32>
    tpu.vector_store %arg5[%c16, %c0_26, %c0_27], %13 {strides = array<i32>} : memref<36x16x16xf32, #tpu.memory_space<vmem>>, vector<4x16x16xf32>,
    %c0_28 = arith.constant 0 : index
    %c0_29 = arith.constant 0 : index
    %c1_30 = arith.constant 1 : index
    %c2_31 = arith.constant 2 : index
    %15 = vector.load %arg1[%c0_28, %c0_29, %c1_30, %c2_31] : memref<1x4x18x18xf32, #tpu.memory_space<vmem>>, vector<1x4x16x16xf32>
    %16 = vector.shape_cast %15 : vector<1x4x16x16xf32> to vector<4x16x16xf32>
    %c20 = arith.constant 20 : index
    %c0_32 = arith.constant 0 : index
    %c0_33 = arith.constant 0 : index
    %17 = vector.load %arg5[%c20, %c0_32, %c0_33] : memref<36x16x16xf32, #tpu.memory_space<vmem>>, vector<4x16x16xf32>
    tpu.vector_store %arg5[%c20, %c0_32, %c0_33], %16 {strides = array<i32>} : memref<36x16x16xf32, #tpu.memory_space<vmem>>, vector<4x16x16xf32>,
    %c0_34 = arith.constant 0 : index
    %c0_35 = arith.constant 0 : index
    %c2_36 = arith.constant 2 : index
    %c0_37 = arith.constant 0 : index
    %18 = vector.load %arg1[%c0_34, %c0_35, %c2_36, %c0_37] : memref<1x4x18x18xf32, #tpu.memory_space<vmem>>, vector<1x4x16x16xf32>
    %19 = vector.shape_cast %18 : vector<1x4x16x16xf32> to vector<4x16x16xf32>
    %c24 = arith.constant 24 : index
    %c0_38 = arith.constant 0 : index
    %c0_39 = arith.constant 0 : index
    %20 = vector.load %arg5[%c24, %c0_38, %c0_39] : memref<36x16x16xf32, #tpu.memory_space<vmem>>, vector<4x16x16xf32>
    tpu.vector_store %arg5[%c24, %c0_38, %c0_39], %19 {strides = array<i32>} : memref<36x16x16xf32, #tpu.memory_space<vmem>>, vector<4x16x16xf32>,
    %c0_40 = arith.constant 0 : index
    %c0_41 = arith.constant 0 : index
    %c2_42 = arith.constant 2 : index
    %c1_43 = arith.constant 1 : index
    %21 = vector.load %arg1[%c0_40, %c0_41, %c2_42, %c1_43] : memref<1x4x18x18xf32, #tpu.memory_space<vmem>>, vector<1x4x16x16xf32>
    %22 = vector.shape_cast %21 : vector<1x4x16x16xf32> to vector<4x16x16xf32>
    %c28 = arith.constant 28 : index
    %c0_44 = arith.constant 0 : index
    %c0_45 = arith.constant 0 : index
    %23 = vector.load %arg5[%c28, %c0_44, %c0_45] : memref<36x16x16xf32, #tpu.memory_space<vmem>>, vector<4x16x16xf32>
    tpu.vector_store %arg5[%c28, %c0_44, %c0_45], %22 {strides = array<i32>} : memref<36x16x16xf32, #tpu.memory_space<vmem>>, vector<4x16x16xf32>,
    %c0_46 = arith.constant 0 : index
    %c0_47 = arith.constant 0 : index
    %c2_48 = arith.constant 2 : index
    %c2_49 = arith.constant 2 : index
    %24 = vector.load %arg1[%c0_46, %c0_47, %c2_48, %c2_49] : memref<1x4x18x18xf32, #tpu.memory_space<vmem>>, vector<1x4x16x16xf32>
    %25 = vector.shape_cast %24 : vector<1x4x16x16xf32> to vector<4x16x16xf32>
    %c32 = arith.constant 32 : index
    %c0_50 = arith.constant 0 : index
    %c0_51 = arith.constant 0 : index
    %26 = vector.load %arg5[%c32, %c0_50, %c0_51] : memref<36x16x16xf32, #tpu.memory_space<vmem>>, vector<4x16x16xf32>
    tpu.vector_store %arg5[%c32, %c0_50, %c0_51], %25 {strides = array<i32>} : memref<36x16x16xf32, #tpu.memory_space<vmem>>, vector<4x16x16xf32>,
    %c0_52 = arith.constant 0 : index
    %c0_53 = arith.constant 0 : index
    %27 = vector.load %arg2[%c0_52, %c0_53] : memref<8x36xf32, #tpu.memory_space<vmem>>, vector<8x36xf32>
    %cst = arith.constant 0.000000e+00 : f32
    %28 = vector.broadcast %cst : f32 to vector<8x1xf32>
    %cst_54 = arith.constant 0.000000e+00 : f32
    %29 = vector.broadcast %cst_54 : f32 to vector<8x1xf32>
    %c0_55 = arith.constant 0 : index
    %c0_56 = arith.constant 0 : index
    %c0_57 = arith.constant 0 : index
    %30 = vector.load %arg5[%c0_55, %c0_56, %c0_57] : memref<36x16x16xf32, #tpu.memory_space<vmem>>, vector<36x1x16xf32>
    %31 = vector.shape_cast %30 : vector<36x1x16xf32> to vector<36x16xf32>
    %cst_58 = arith.constant dense<0.000000e+00> : vector<8x16xf32>
    %32 = tpu.matmul %27, %31, %cst_58 {dimension_numbers = #tpu.dot_dimension_numbers<[1], [0], [0], [1], [0, 0, 1, 1], [], []>} : vector<8x36xf32>, vector<36x16xf32>, vector<8x16xf32> -> vector<8x16xf32>
    %c0_59 = arith.constant 0 : index
    %c0_60 = arith.constant 0 : index
    %c0_61 = arith.constant 0 : index
    %33 = vector.load %arg3[%c0_59, %c0_60, %c0_61] : memref<1x8x256xf32, #tpu.memory_space<vmem>>, vector<1x8x16xf32>
    %34 = vector.shape_cast %33 : vector<1x8x16xf32> to vector<8x16xf32>
    %35 = vector.shape_cast %32 : vector<8x16xf32> to vector<1x8x16xf32>
    tpu.vector_store %arg3[%c0_59, %c0_60, %c0_61], %35 {strides = array<i32>} : memref<1x8x256xf32, #tpu.memory_space<vmem>>, vector<1x8x16xf32>,
    %cst_62 = arith.constant dense<0.000000e+00> : vector<8xf32>
    %36 = vector.multi_reduction <add>, %32, %cst_62 [1] : vector<8x16xf32> to vector<8xf32>
    %37 = vector.shape_cast %36 : vector<8xf32> to vector<8x1xf32>
    %38 = arith.addf %28, %37 : vector<8x1xf32>
    %39 = arith.mulf %32, %32 : vector<8x16xf32>
    %cst_63 = arith.constant dense<0.000000e+00> : vector<8xf32>
    %40 = vector.multi_reduction <add>, %39, %cst_63 [1] : vector<8x16xf32> to vector<8xf32>
    %41 = vector.shape_cast %40 : vector<8xf32> to vector<8x1xf32>
    %42 = arith.addf %29, %41 : vector<8x1xf32>
    %c0_64 = arith.constant 0 : index
    %c1_65 = arith.constant 1 : index
    %c0_66 = arith.constant 0 : index
    %43 = vector.load %arg5[%c0_64, %c1_65, %c0_66] : memref<36x16x16xf32, #tpu.memory_space<vmem>>, vector<36x1x16xf32>
    %44 = vector.shape_cast %43 : vector<36x1x16xf32> to vector<36x16xf32>
    %cst_67 = arith.constant dense<0.000000e+00> : vector<8x16xf32>
    %45 = tpu.matmul %27, %44, %cst_67 {dimension_numbers = #tpu.dot_dimension_numbers<[1], [0], [0], [1], [0, 0, 1, 1], [], []>} : vector<8x36xf32>, vector<36x16xf32>, vector<8x16xf32> -> vector<8x16xf32>
    %c0_68 = arith.constant 0 : index
    %c0_69 = arith.constant 0 : index
    %c16_70 = arith.constant 16 : index
    %46 = vector.load %arg3[%c0_68, %c0_69, %c16_70] : memref<1x8x256xf32, #tpu.memory_space<vmem>>, vector<1x8x16xf32>
    %47 = vector.shape_cast %46 : vector<1x8x16xf32> to vector<8x16xf32>
    %48 = vector.shape_cast %45 : vector<8x16xf32> to vector<1x8x16xf32>
    tpu.vector_store %arg3[%c0_68, %c0_69, %c16_70], %48 {strides = array<i32>} : memref<1x8x256xf32, #tpu.memory_space<vmem>>, vector<1x8x16xf32>,
    %cst_71 = arith.constant dense<0.000000e+00> : vector<8xf32>
    %49 = vector.multi_reduction <add>, %45, %cst_71 [1] : vector<8x16xf32> to vector<8xf32>
    %50 = vector.shape_cast %49 : vector<8xf32> to vector<8x1xf32>
    %51 = arith.addf %38, %50 : vector<8x1xf32>
    %52 = arith.mulf %45, %45 : vector<8x16xf32>
    %cst_72 = arith.constant dense<0.000000e+00> : vector<8xf32>
    %53 = vector.multi_reduction <add>, %52, %cst_72 [1] : vector<8x16xf32> to vector<8xf32>
    %54 = vector.shape_cast %53 : vector<8xf32> to vector<8x1xf32>
    %55 = arith.addf %42, %54 : vector<8x1xf32>
    %c0_73 = arith.constant 0 : index
    %c2_74 = arith.constant 2 : index
    %c0_75 = arith.constant 0 : index
    %56 = vector.load %arg5[%c0_73, %c2_74, %c0_75] : memref<36x16x16xf32, #tpu.memory_space<vmem>>, vector<36x1x16xf32>
    %57 = vector.shape_cast %56 : vector<36x1x16xf32> to vector<36x16xf32>
    %cst_76 = arith.constant dense<0.000000e+00> : vector<8x16xf32>
    %58 = tpu.matmul %27, %57, %cst_76 {dimension_numbers = #tpu.dot_dimension_numbers<[1], [0], [0], [1], [0, 0, 1, 1], [], []>} : vector<8x36xf32>, vector<36x16xf32>, vector<8x16xf32> -> vector<8x16xf32>
    %c0_77 = arith.constant 0 : index
    %c0_78 = arith.constant 0 : index
    %c32_79 = arith.constant 32 : index
    %59 = vector.load %arg3[%c0_77, %c0_78, %c32_79] : memref<1x8x256xf32, #tpu.memory_space<vmem>>, vector<1x8x16xf32>
    %60 = vector.shape_cast %59 : vector<1x8x16xf32> to vector<8x16xf32>
    %61 = vector.shape_cast %58 : vector<8x16xf32> to vector<1x8x16xf32>
    tpu.vector_store %arg3[%c0_77, %c0_78, %c32_79], %61 {strides = array<i32>} : memref<1x8x256xf32, #tpu.memory_space<vmem>>, vector<1x8x16xf32>,
    %cst_80 = arith.constant dense<0.000000e+00> : vector<8xf32>
    %62 = vector.multi_reduction <add>, %58, %cst_80 [1] : vector<8x16xf32> to vector<8xf32>
    %63 = vector.shape_cast %62 : vector<8xf32> to vector<8x1xf32>
    %64 = arith.addf %51, %63 : vector<8x1xf32>
    %65 = arith.mulf %58, %58 : vector<8x16xf32>
    %cst_81 = arith.constant dense<0.000000e+00> : vector<8xf32>
    %66 = vector.multi_reduction <add>, %65, %cst_81 [1] : vector<8x16xf32> to vector<8xf32>
    %67 = vector.shape_cast %66 : vector<8xf32> to vector<8x1xf32>
    %68 = arith.addf %55, %67 : vector<8x1xf32>
    %c0_82 = arith.constant 0 : index
    %c3 = arith.constant 3 : index
    %c0_83 = arith.constant 0 : index
    %69 = vector.load %arg5[%c0_82, %c3, %c0_83] : memref<36x16x16xf32, #tpu.memory_space<vmem>>, vector<36x1x16xf32>
    %70 = vector.shape_cast %69 : vector<36x1x16xf32> to vector<36x16xf32>
    %cst_84 = arith.constant dense<0.000000e+00> : vector<8x16xf32>
    %71 = tpu.matmul %27, %70, %cst_84 {dimension_numbers = #tpu.dot_dimension_numbers<[1], [0], [0], [1], [0, 0, 1, 1], [], []>} : vector<8x36xf32>, vector<36x16xf32>, vector<8x16xf32> -> vector<8x16xf32>
    %c0_85 = arith.constant 0 : index
    %c0_86 = arith.constant 0 : index
    %c48 = arith.constant 48 : index
    %72 = vector.load %arg3[%c0_85, %c0_86, %c48] : memref<1x8x256xf32, #tpu.memory_space<vmem>>, vector<1x8x16xf32>
    %73 = vector.shape_cast %72 : vector<1x8x16xf32> to vector<8x16xf32>
    %74 = vector.shape_cast %71 : vector<8x16xf32> to vector<1x8x16xf32>
    tpu.vector_store %arg3[%c0_85, %c0_86, %c48], %74 {strides = array<i32>} : memref<1x8x256xf32, #tpu.memory_space<vmem>>, vector<1x8x16xf32>,
    %cst_87 = arith.constant dense<0.000000e+00> : vector<8xf32>
    %75 = vector.multi_reduction <add>, %71, %cst_87 [1] : vector<8x16xf32> to vector<8xf32>
    %76 = vector.shape_cast %75 : vector<8xf32> to vector<8x1xf32>
    %77 = arith.addf %64, %76 : vector<8x1xf32>
    %78 = arith.mulf %71, %71 : vector<8x16xf32>
    %cst_88 = arith.constant dense<0.000000e+00> : vector<8xf32>
    %79 = vector.multi_reduction <add>, %78, %cst_88 [1] : vector<8x16xf32> to vector<8xf32>
    %80 = vector.shape_cast %79 : vector<8xf32> to vector<8x1xf32>
    %81 = arith.addf %68, %80 : vector<8x1xf32>
    %c0_89 = arith.constant 0 : index
    %c4_90 = arith.constant 4 : index
    %c0_91 = arith.constant 0 : index
    %82 = vector.load %arg5[%c0_89, %c4_90, %c0_91] : memref<36x16x16xf32, #tpu.memory_space<vmem>>, vector<36x1x16xf32>
    %83 = vector.shape_cast %82 : vector<36x1x16xf32> to vector<36x16xf32>
    %cst_92 = arith.constant dense<0.000000e+00> : vector<8x16xf32>
    %84 = tpu.matmul %27, %83, %cst_92 {dimension_numbers = #tpu.dot_dimension_numbers<[1], [0], [0], [1], [0, 0, 1, 1], [], []>} : vector<8x36xf32>, vector<36x16xf32>, vector<8x16xf32> -> vector<8x16xf32>
    %c0_93 = arith.constant 0 : index
    %c0_94 = arith.constant 0 : index
    %c64 = arith.constant 64 : index
    %85 = vector.load %arg3[%c0_93, %c0_94, %c64] : memref<1x8x256xf32, #tpu.memory_space<vmem>>, vector<1x8x16xf32>
    %86 = vector.shape_cast %85 : vector<1x8x16xf32> to vector<8x16xf32>
    %87 = vector.shape_cast %84 : vector<8x16xf32> to vector<1x8x16xf32>
    tpu.vector_store %arg3[%c0_93, %c0_94, %c64], %87 {strides = array<i32>} : memref<1x8x256xf32, #tpu.memory_space<vmem>>, vector<1x8x16xf32>,
    %cst_95 = arith.constant dense<0.000000e+00> : vector<8xf32>
    %88 = vector.multi_reduction <add>, %84, %cst_95 [1] : vector<8x16xf32> to vector<8xf32>
    %89 = vector.shape_cast %88 : vector<8xf32> to vector<8x1xf32>
    %90 = arith.addf %77, %89 : vector<8x1xf32>
    %91 = arith.mulf %84, %84 : vector<8x16xf32>
    %cst_96 = arith.constant dense<0.000000e+00> : vector<8xf32>
    %92 = vector.multi_reduction <add>, %91, %cst_96 [1] : vector<8x16xf32> to vector<8xf32>
    %93 = vector.shape_cast %92 : vector<8xf32> to vector<8x1xf32>
    %94 = arith.addf %81, %93 : vector<8x1xf32>
    %c0_97 = arith.constant 0 : index
    %c5 = arith.constant 5 : index
    %c0_98 = arith.constant 0 : index
    %95 = vector.load %arg5[%c0_97, %c5, %c0_98] : memref<36x16x16xf32, #tpu.memory_space<vmem>>, vector<36x1x16xf32>
    %96 = vector.shape_cast %95 : vector<36x1x16xf32> to vector<36x16xf32>
    %cst_99 = arith.constant dense<0.000000e+00> : vector<8x16xf32>
    %97 = tpu.matmul %27, %96, %cst_99 {dimension_numbers = #tpu.dot_dimension_numbers<[1], [0], [0], [1], [0, 0, 1, 1], [], []>} : vector<8x36xf32>, vector<36x16xf32>, vector<8x16xf32> -> vector<8x16xf32>
    %c0_100 = arith.constant 0 : index
    %c0_101 = arith.constant 0 : index
    %c80 = arith.constant 80 : index
    %98 = vector.load %arg3[%c0_100, %c0_101, %c80] : memref<1x8x256xf32, #tpu.memory_space<vmem>>, vector<1x8x16xf32>
    %99 = vector.shape_cast %98 : vector<1x8x16xf32> to vector<8x16xf32>
    %100 = vector.shape_cast %97 : vector<8x16xf32> to vector<1x8x16xf32>
    tpu.vector_store %arg3[%c0_100, %c0_101, %c80], %100 {strides = array<i32>} : memref<1x8x256xf32, #tpu.memory_space<vmem>>, vector<1x8x16xf32>,
    %cst_102 = arith.constant dense<0.000000e+00> : vector<8xf32>
    %101 = vector.multi_reduction <add>, %97, %cst_102 [1] : vector<8x16xf32> to vector<8xf32>
    %102 = vector.shape_cast %101 : vector<8xf32> to vector<8x1xf32>
    %103 = arith.addf %90, %102 : vector<8x1xf32>
    %104 = arith.mulf %97, %97 : vector<8x16xf32>
    %cst_103 = arith.constant dense<0.000000e+00> : vector<8xf32>
    %105 = vector.multi_reduction <add>, %104, %cst_103 [1] : vector<8x16xf32> to vector<8xf32>
    %106 = vector.shape_cast %105 : vector<8xf32> to vector<8x1xf32>
    %107 = arith.addf %94, %106 : vector<8x1xf32>
    %c0_104 = arith.constant 0 : index
    %c6 = arith.constant 6 : index
    %c0_105 = arith.constant 0 : index
    %108 = vector.load %arg5[%c0_104, %c6, %c0_105] : memref<36x16x16xf32, #tpu.memory_space<vmem>>, vector<36x1x16xf32>
    %109 = vector.shape_cast %108 : vector<36x1x16xf32> to vector<36x16xf32>
    %cst_106 = arith.constant dense<0.000000e+00> : vector<8x16xf32>
    %110 = tpu.matmul %27, %109, %cst_106 {dimension_numbers = #tpu.dot_dimension_numbers<[1], [0], [0], [1], [0, 0, 1, 1], [], []>} : vector<8x36xf32>, vector<36x16xf32>, vector<8x16xf32> -> vector<8x16xf32>
    %c0_107 = arith.constant 0 : index
    %c0_108 = arith.constant 0 : index
    %c96 = arith.constant 96 : index
    %111 = vector.load %arg3[%c0_107, %c0_108, %c96] : memref<1x8x256xf32, #tpu.memory_space<vmem>>, vector<1x8x16xf32>
    %112 = vector.shape_cast %111 : vector<1x8x16xf32> to vector<8x16xf32>
    %113 = vector.shape_cast %110 : vector<8x16xf32> to vector<1x8x16xf32>
    tpu.vector_store %arg3[%c0_107, %c0_108, %c96], %113 {strides = array<i32>} : memref<1x8x256xf32, #tpu.memory_space<vmem>>, vector<1x8x16xf32>,
    %cst_109 = arith.constant dense<0.000000e+00> : vector<8xf32>
    %114 = vector.multi_reduction <add>, %110, %cst_109 [1] : vector<8x16xf32> to vector<8xf32>
    %115 = vector.shape_cast %114 : vector<8xf32> to vector<8x1xf32>
    %116 = arith.addf %103, %115 : vector<8x1xf32>
    %117 = arith.mulf %110, %110 : vector<8x16xf32>
    %cst_110 = arith.constant dense<0.000000e+00> : vector<8xf32>
    %118 = vector.multi_reduction <add>, %117, %cst_110 [1] : vector<8x16xf32> to vector<8xf32>
    %119 = vector.shape_cast %118 : vector<8xf32> to vector<8x1xf32>
    %120 = arith.addf %107, %119 : vector<8x1xf32>
    %c0_111 = arith.constant 0 : index
    %c7 = arith.constant 7 : index
    %c0_112 = arith.constant 0 : index
    %121 = vector.load %arg5[%c0_111, %c7, %c0_112] : memref<36x16x16xf32, #tpu.memory_space<vmem>>, vector<36x1x16xf32>
    %122 = vector.shape_cast %121 : vector<36x1x16xf32> to vector<36x16xf32>
    %cst_113 = arith.constant dense<0.000000e+00> : vector<8x16xf32>
    %123 = tpu.matmul %27, %122, %cst_113 {dimension_numbers = #tpu.dot_dimension_numbers<[1], [0], [0], [1], [0, 0, 1, 1], [], []>} : vector<8x36xf32>, vector<36x16xf32>, vector<8x16xf32> -> vector<8x16xf32>
    %c0_114 = arith.constant 0 : index
    %c0_115 = arith.constant 0 : index
    %c112 = arith.constant 112 : index
    %124 = vector.load %arg3[%c0_114, %c0_115, %c112] : memref<1x8x256xf32, #tpu.memory_space<vmem>>, vector<1x8x16xf32>
    %125 = vector.shape_cast %124 : vector<1x8x16xf32> to vector<8x16xf32>
    %126 = vector.shape_cast %123 : vector<8x16xf32> to vector<1x8x16xf32>
    tpu.vector_store %arg3[%c0_114, %c0_115, %c112], %126 {strides = array<i32>} : memref<1x8x256xf32, #tpu.memory_space<vmem>>, vector<1x8x16xf32>,
    %cst_116 = arith.constant dense<0.000000e+00> : vector<8xf32>
    %127 = vector.multi_reduction <add>, %123, %cst_116 [1] : vector<8x16xf32> to vector<8xf32>
    %128 = vector.shape_cast %127 : vector<8xf32> to vector<8x1xf32>
    %129 = arith.addf %116, %128 : vector<8x1xf32>
    %130 = arith.mulf %123, %123 : vector<8x16xf32>
    %cst_117 = arith.constant dense<0.000000e+00> : vector<8xf32>
    %131 = vector.multi_reduction <add>, %130, %cst_117 [1] : vector<8x16xf32> to vector<8xf32>
    %132 = vector.shape_cast %131 : vector<8xf32> to vector<8x1xf32>
    %133 = arith.addf %120, %132 : vector<8x1xf32>
    %c0_118 = arith.constant 0 : index
    %c8_119 = arith.constant 8 : index
    %c0_120 = arith.constant 0 : index
    %134 = vector.load %arg5[%c0_118, %c8_119, %c0_120] : memref<36x16x16xf32, #tpu.memory_space<vmem>>, vector<36x1x16xf32>
    %135 = vector.shape_cast %134 : vector<36x1x16xf32> to vector<36x16xf32>
    %cst_121 = arith.constant dense<0.000000e+00> : vector<8x16xf32>
    %136 = tpu.matmul %27, %135, %cst_121 {dimension_numbers = #tpu.dot_dimension_numbers<[1], [0], [0], [1], [0, 0, 1, 1], [], []>} : vector<8x36xf32>, vector<36x16xf32>, vector<8x16xf32> -> vector<8x16xf32>
    %c0_122 = arith.constant 0 : index
    %c0_123 = arith.constant 0 : index
    %c128 = arith.constant 128 : index
    %137 = vector.load %arg3[%c0_122, %c0_123, %c128] : memref<1x8x256xf32, #tpu.memory_space<vmem>>, vector<1x8x16xf32>
    %138 = vector.shape_cast %137 : vector<1x8x16xf32> to vector<8x16xf32>
    %139 = vector.shape_cast %136 : vector<8x16xf32> to vector<1x8x16xf32>
    tpu.vector_store %arg3[%c0_122, %c0_123, %c128], %139 {strides = array<i32>} : memref<1x8x256xf32, #tpu.memory_space<vmem>>, vector<1x8x16xf32>,
    %cst_124 = arith.constant dense<0.000000e+00> : vector<8xf32>
    %140 = vector.multi_reduction <add>, %136, %cst_124 [1] : vector<8x16xf32> to vector<8xf32>
    %141 = vector.shape_cast %140 : vector<8xf32> to vector<8x1xf32>
    %142 = arith.addf %129, %141 : vector<8x1xf32>
    %143 = arith.mulf %136, %136 : vector<8x16xf32>
    %cst_125 = arith.constant dense<0.000000e+00> : vector<8xf32>
    %144 = vector.multi_reduction <add>, %143, %cst_125 [1] : vector<8x16xf32> to vector<8xf32>
    %145 = vector.shape_cast %144 : vector<8xf32> to vector<8x1xf32>
    %146 = arith.addf %133, %145 : vector<8x1xf32>
    %c0_126 = arith.constant 0 : index
    %c9 = arith.constant 9 : index
    %c0_127 = arith.constant 0 : index
    %147 = vector.load %arg5[%c0_126, %c9, %c0_127] : memref<36x16x16xf32, #tpu.memory_space<vmem>>, vector<36x1x16xf32>
    %148 = vector.shape_cast %147 : vector<36x1x16xf32> to vector<36x16xf32>
    %cst_128 = arith.constant dense<0.000000e+00> : vector<8x16xf32>
    %149 = tpu.matmul %27, %148, %cst_128 {dimension_numbers = #tpu.dot_dimension_numbers<[1], [0], [0], [1], [0, 0, 1, 1], [], []>} : vector<8x36xf32>, vector<36x16xf32>, vector<8x16xf32> -> vector<8x16xf32>
    %c0_129 = arith.constant 0 : index
    %c0_130 = arith.constant 0 : index
    %c144 = arith.constant 144 : index
    %150 = vector.load %arg3[%c0_129, %c0_130, %c144] : memref<1x8x256xf32, #tpu.memory_space<vmem>>, vector<1x8x16xf32>
    %151 = vector.shape_cast %150 : vector<1x8x16xf32> to vector<8x16xf32>
    %152 = vector.shape_cast %149 : vector<8x16xf32> to vector<1x8x16xf32>
    tpu.vector_store %arg3[%c0_129, %c0_130, %c144], %152 {strides = array<i32>} : memref<1x8x256xf32, #tpu.memory_space<vmem>>, vector<1x8x16xf32>,
    %cst_131 = arith.constant dense<0.000000e+00> : vector<8xf32>
    %153 = vector.multi_reduction <add>, %149, %cst_131 [1] : vector<8x16xf32> to vector<8xf32>
    %154 = vector.shape_cast %153 : vector<8xf32> to vector<8x1xf32>
    %155 = arith.addf %142, %154 : vector<8x1xf32>
    %156 = arith.mulf %149, %149 : vector<8x16xf32>
    %cst_132 = arith.constant dense<0.000000e+00> : vector<8xf32>
    %157 = vector.multi_reduction <add>, %156, %cst_132 [1] : vector<8x16xf32> to vector<8xf32>
    %158 = vector.shape_cast %157 : vector<8xf32> to vector<8x1xf32>
    %159 = arith.addf %146, %158 : vector<8x1xf32>
    %c0_133 = arith.constant 0 : index
    %c10 = arith.constant 10 : index
    %c0_134 = arith.constant 0 : index
    %160 = vector.load %arg5[%c0_133, %c10, %c0_134] : memref<36x16x16xf32, #tpu.memory_space<vmem>>, vector<36x1x16xf32>
    %161 = vector.shape_cast %160 : vector<36x1x16xf32> to vector<36x16xf32>
    %cst_135 = arith.constant dense<0.000000e+00> : vector<8x16xf32>
    %162 = tpu.matmul %27, %161, %cst_135 {dimension_numbers = #tpu.dot_dimension_numbers<[1], [0], [0], [1], [0, 0, 1, 1], [], []>} : vector<8x36xf32>, vector<36x16xf32>, vector<8x16xf32> -> vector<8x16xf32>
    %c0_136 = arith.constant 0 : index
    %c0_137 = arith.constant 0 : index
    %c160 = arith.constant 160 : index
    %163 = vector.load %arg3[%c0_136, %c0_137, %c160] : memref<1x8x256xf32, #tpu.memory_space<vmem>>, vector<1x8x16xf32>
    %164 = vector.shape_cast %163 : vector<1x8x16xf32> to vector<8x16xf32>
    %165 = vector.shape_cast %162 : vector<8x16xf32> to vector<1x8x16xf32>
    tpu.vector_store %arg3[%c0_136, %c0_137, %c160], %165 {strides = array<i32>} : memref<1x8x256xf32, #tpu.memory_space<vmem>>, vector<1x8x16xf32>,
    %cst_138 = arith.constant dense<0.000000e+00> : vector<8xf32>
    %166 = vector.multi_reduction <add>, %162, %cst_138 [1] : vector<8x16xf32> to vector<8xf32>
    %167 = vector.shape_cast %166 : vector<8xf32> to vector<8x1xf32>
    %168 = arith.addf %155, %167 : vector<8x1xf32>
    %169 = arith.mulf %162, %162 : vector<8x16xf32>
    %cst_139 = arith.constant dense<0.000000e+00> : vector<8xf32>
    %170 = vector.multi_reduction <add>, %169, %cst_139 [1] : vector<8x16xf32> to vector<8xf32>
    %171 = vector.shape_cast %170 : vector<8xf32> to vector<8x1xf32>
    %172 = arith.addf %159, %171 : vector<8x1xf32>
    %c0_140 = arith.constant 0 : index
    %c11 = arith.constant 11 : index
    %c0_141 = arith.constant 0 : index
    %173 = vector.load %arg5[%c0_140, %c11, %c0_141] : memref<36x16x16xf32, #tpu.memory_space<vmem>>, vector<36x1x16xf32>
    %174 = vector.shape_cast %173 : vector<36x1x16xf32> to vector<36x16xf32>
    %cst_142 = arith.constant dense<0.000000e+00> : vector<8x16xf32>
    %175 = tpu.matmul %27, %174, %cst_142 {dimension_numbers = #tpu.dot_dimension_numbers<[1], [0], [0], [1], [0, 0, 1, 1], [], []>} : vector<8x36xf32>, vector<36x16xf32>, vector<8x16xf32> -> vector<8x16xf32>
    %c0_143 = arith.constant 0 : index
    %c0_144 = arith.constant 0 : index
    %c176 = arith.constant 176 : index
    %176 = vector.load %arg3[%c0_143, %c0_144, %c176] : memref<1x8x256xf32, #tpu.memory_space<vmem>>, vector<1x8x16xf32>
    %177 = vector.shape_cast %176 : vector<1x8x16xf32> to vector<8x16xf32>
    %178 = vector.shape_cast %175 : vector<8x16xf32> to vector<1x8x16xf32>
    tpu.vector_store %arg3[%c0_143, %c0_144, %c176], %178 {strides = array<i32>} : memref<1x8x256xf32, #tpu.memory_space<vmem>>, vector<1x8x16xf32>,
    %cst_145 = arith.constant dense<0.000000e+00> : vector<8xf32>
    %179 = vector.multi_reduction <add>, %175, %cst_145 [1] : vector<8x16xf32> to vector<8xf32>
    %180 = vector.shape_cast %179 : vector<8xf32> to vector<8x1xf32>
    %181 = arith.addf %168, %180 : vector<8x1xf32>
    %182 = arith.mulf %175, %175 : vector<8x16xf32>
    %cst_146 = arith.constant dense<0.000000e+00> : vector<8xf32>
    %183 = vector.multi_reduction <add>, %182, %cst_146 [1] : vector<8x16xf32> to vector<8xf32>
    %184 = vector.shape_cast %183 : vector<8xf32> to vector<8x1xf32>
    %185 = arith.addf %172, %184 : vector<8x1xf32>
    %c0_147 = arith.constant 0 : index
    %c12_148 = arith.constant 12 : index
    %c0_149 = arith.constant 0 : index
    %186 = vector.load %arg5[%c0_147, %c12_148, %c0_149] : memref<36x16x16xf32, #tpu.memory_space<vmem>>, vector<36x1x16xf32>
    %187 = vector.shape_cast %186 : vector<36x1x16xf32> to vector<36x16xf32>
    %cst_150 = arith.constant dense<0.000000e+00> : vector<8x16xf32>
    %188 = tpu.matmul %27, %187, %cst_150 {dimension_numbers = #tpu.dot_dimension_numbers<[1], [0], [0], [1], [0, 0, 1, 1], [], []>} : vector<8x36xf32>, vector<36x16xf32>, vector<8x16xf32> -> vector<8x16xf32>
    %c0_151 = arith.constant 0 : index
    %c0_152 = arith.constant 0 : index
    %c192 = arith.constant 192 : index
    %189 = vector.load %arg3[%c0_151, %c0_152, %c192] : memref<1x8x256xf32, #tpu.memory_space<vmem>>, vector<1x8x16xf32>
    %190 = vector.shape_cast %189 : vector<1x8x16xf32> to vector<8x16xf32>
    %191 = vector.shape_cast %188 : vector<8x16xf32> to vector<1x8x16xf32>
    tpu.vector_store %arg3[%c0_151, %c0_152, %c192], %191 {strides = array<i32>} : memref<1x8x256xf32, #tpu.memory_space<vmem>>, vector<1x8x16xf32>,
    %cst_153 = arith.constant dense<0.000000e+00> : vector<8xf32>
    %192 = vector.multi_reduction <add>, %188, %cst_153 [1] : vector<8x16xf32> to vector<8xf32>
    %193 = vector.shape_cast %192 : vector<8xf32> to vector<8x1xf32>
    %194 = arith.addf %181, %193 : vector<8x1xf32>
    %195 = arith.mulf %188, %188 : vector<8x16xf32>
    %cst_154 = arith.constant dense<0.000000e+00> : vector<8xf32>
    %196 = vector.multi_reduction <add>, %195, %cst_154 [1] : vector<8x16xf32> to vector<8xf32>
    %197 = vector.shape_cast %196 : vector<8xf32> to vector<8x1xf32>
    %198 = arith.addf %185, %197 : vector<8x1xf32>
    %c0_155 = arith.constant 0 : index
    %c13 = arith.constant 13 : index
    %c0_156 = arith.constant 0 : index
    %199 = vector.load %arg5[%c0_155, %c13, %c0_156] : memref<36x16x16xf32, #tpu.memory_space<vmem>>, vector<36x1x16xf32>
    %200 = vector.shape_cast %199 : vector<36x1x16xf32> to vector<36x16xf32>
    %cst_157 = arith.constant dense<0.000000e+00> : vector<8x16xf32>
    %201 = tpu.matmul %27, %200, %cst_157 {dimension_numbers = #tpu.dot_dimension_numbers<[1], [0], [0], [1], [0, 0, 1, 1], [], []>} : vector<8x36xf32>, vector<36x16xf32>, vector<8x16xf32> -> vector<8x16xf32>
    %c0_158 = arith.constant 0 : index
    %c0_159 = arith.constant 0 : index
    %c208 = arith.constant 208 : index
    %202 = vector.load %arg3[%c0_158, %c0_159, %c208] : memref<1x8x256xf32, #tpu.memory_space<vmem>>, vector<1x8x16xf32>
    %203 = vector.shape_cast %202 : vector<1x8x16xf32> to vector<8x16xf32>
    %204 = vector.shape_cast %201 : vector<8x16xf32> to vector<1x8x16xf32>
    tpu.vector_store %arg3[%c0_158, %c0_159, %c208], %204 {strides = array<i32>} : memref<1x8x256xf32, #tpu.memory_space<vmem>>, vector<1x8x16xf32>,
    %cst_160 = arith.constant dense<0.000000e+00> : vector<8xf32>
    %205 = vector.multi_reduction <add>, %201, %cst_160 [1] : vector<8x16xf32> to vector<8xf32>
    %206 = vector.shape_cast %205 : vector<8xf32> to vector<8x1xf32>
    %207 = arith.addf %194, %206 : vector<8x1xf32>
    %208 = arith.mulf %201, %201 : vector<8x16xf32>
    %cst_161 = arith.constant dense<0.000000e+00> : vector<8xf32>
    %209 = vector.multi_reduction <add>, %208, %cst_161 [1] : vector<8x16xf32> to vector<8xf32>
    %210 = vector.shape_cast %209 : vector<8xf32> to vector<8x1xf32>
    %211 = arith.addf %198, %210 : vector<8x1xf32>
    %c0_162 = arith.constant 0 : index
    %c14 = arith.constant 14 : index
    %c0_163 = arith.constant 0 : index
    %212 = vector.load %arg5[%c0_162, %c14, %c0_163] : memref<36x16x16xf32, #tpu.memory_space<vmem>>, vector<36x1x16xf32>
    %213 = vector.shape_cast %212 : vector<36x1x16xf32> to vector<36x16xf32>
    %cst_164 = arith.constant dense<0.000000e+00> : vector<8x16xf32>
    %214 = tpu.matmul %27, %213, %cst_164 {dimension_numbers = #tpu.dot_dimension_numbers<[1], [0], [0], [1], [0, 0, 1, 1], [], []>} : vector<8x36xf32>, vector<36x16xf32>, vector<8x16xf32> -> vector<8x16xf32>
    %c0_165 = arith.constant 0 : index
    %c0_166 = arith.constant 0 : index
    %c224 = arith.constant 224 : index
    %215 = vector.load %arg3[%c0_165, %c0_166, %c224] : memref<1x8x256xf32, #tpu.memory_space<vmem>>, vector<1x8x16xf32>
    %216 = vector.shape_cast %215 : vector<1x8x16xf32> to vector<8x16xf32>
    %217 = vector.shape_cast %214 : vector<8x16xf32> to vector<1x8x16xf32>
    tpu.vector_store %arg3[%c0_165, %c0_166, %c224], %217 {strides = array<i32>} : memref<1x8x256xf32, #tpu.memory_space<vmem>>, vector<1x8x16xf32>,
    %cst_167 = arith.constant dense<0.000000e+00> : vector<8xf32>
    %218 = vector.multi_reduction <add>, %214, %cst_167 [1] : vector<8x16xf32> to vector<8xf32>
    %219 = vector.shape_cast %218 : vector<8xf32> to vector<8x1xf32>
    %220 = arith.addf %207, %219 : vector<8x1xf32>
    %221 = arith.mulf %214, %214 : vector<8x16xf32>
    %cst_168 = arith.constant dense<0.000000e+00> : vector<8xf32>
    %222 = vector.multi_reduction <add>, %221, %cst_168 [1] : vector<8x16xf32> to vector<8xf32>
    %223 = vector.shape_cast %222 : vector<8xf32> to vector<8x1xf32>
    %224 = arith.addf %211, %223 : vector<8x1xf32>
    %c0_169 = arith.constant 0 : index
    %c15 = arith.constant 15 : index
    %c0_170 = arith.constant 0 : index
    %225 = vector.load %arg5[%c0_169, %c15, %c0_170] : memref<36x16x16xf32, #tpu.memory_space<vmem>>, vector<36x1x16xf32>
    %226 = vector.shape_cast %225 : vector<36x1x16xf32> to vector<36x16xf32>
    %cst_171 = arith.constant dense<0.000000e+00> : vector<8x16xf32>
    %227 = tpu.matmul %27, %226, %cst_171 {dimension_numbers = #tpu.dot_dimension_numbers<[1], [0], [0], [1], [0, 0, 1, 1], [], []>} : vector<8x36xf32>, vector<36x16xf32>, vector<8x16xf32> -> vector<8x16xf32>
    %c0_172 = arith.constant 0 : index
    %c0_173 = arith.constant 0 : index
    %c240 = arith.constant 240 : index
    %228 = vector.load %arg3[%c0_172, %c0_173, %c240] : memref<1x8x256xf32, #tpu.memory_space<vmem>>, vector<1x8x16xf32>
    %229 = vector.shape_cast %228 : vector<1x8x16xf32> to vector<8x16xf32>
    %230 = vector.shape_cast %227 : vector<8x16xf32> to vector<1x8x16xf32>
    tpu.vector_store %arg3[%c0_172, %c0_173, %c240], %230 {strides = array<i32>} : memref<1x8x256xf32, #tpu.memory_space<vmem>>, vector<1x8x16xf32>,
    %cst_174 = arith.constant dense<0.000000e+00> : vector<8xf32>
    %231 = vector.multi_reduction <add>, %227, %cst_174 [1] : vector<8x16xf32> to vector<8xf32>
    %232 = vector.shape_cast %231 : vector<8xf32> to vector<8x1xf32>
    %233 = arith.addf %220, %232 : vector<8x1xf32>
    %234 = arith.mulf %227, %227 : vector<8x16xf32>
    %cst_175 = arith.constant dense<0.000000e+00> : vector<8xf32>
    %235 = vector.multi_reduction <add>, %234, %cst_175 [1] : vector<8x16xf32> to vector<8xf32>
    %236 = vector.shape_cast %235 : vector<8xf32> to vector<8x1xf32>
    %237 = arith.addf %224, %236 : vector<8x1xf32>
    %c0_176 = arith.constant 0 : index
    %c0_177 = arith.constant 0 : index
    %c0_178 = arith.constant 0 : index
    %238 = vector.load %arg4[%c0_176, %c0_177, %c0_178] : memref<1x8x2xf32, #tpu.memory_space<vmem>>, vector<1x8x1xf32>
    %239 = vector.shape_cast %238 : vector<1x8x1xf32> to vector<8x1xf32>
    %240 = vector.shape_cast %233 : vector<8x1xf32> to vector<1x8x1xf32>
    tpu.vector_store %arg4[%c0_176, %c0_177, %c0_178], %240 {strides = array<i32>} : memref<1x8x2xf32, #tpu.memory_space<vmem>>, vector<1x8x1xf32>,
    %c0_179 = arith.constant 0 : index
    %c0_180 = arith.constant 0 : index
    %c1_181 = arith.constant 1 : index
    %241 = vector.load %arg4[%c0_179, %c0_180, %c1_181] : memref<1x8x2xf32, #tpu.memory_space<vmem>>, vector<1x8x1xf32>
    %242 = vector.shape_cast %241 : vector<1x8x1xf32> to vector<8x1xf32>
    %243 = vector.shape_cast %237 : vector<8x1xf32> to vector<1x8x1xf32>
    tpu.vector_store %arg4[%c0_179, %c0_180, %c1_181], %243 {strides = array<i32>} : memref<1x8x2xf32, #tpu.memory_space<vmem>>, vector<1x8x1xf32>,
    return
  }
  func.func @transform_0(%arg0: i32) -> (i32, i32, i32, i32) {
    %c0_i32 = arith.constant 0 : i32
    %c0_i32_0 = arith.constant 0 : i32
    %c0_i32_1 = arith.constant 0 : i32
    %c0_i32_2 = arith.constant 0 : i32
    return %arg0, %c0_i32, %c0_i32_0, %c0_i32_1 : i32, i32, i32, i32
  }
  func.func @transform_1(%arg0: i32) -> (i32, i32) {
    %c0_i32 = arith.constant 0 : i32
    %c0_i32_0 = arith.constant 0 : i32
    %c0_i32_1 = arith.constant 0 : i32
    return %c0_i32, %c0_i32_0 : i32, i32
  }
  func.func @transform_2(%arg0: i32) -> (i32, i32, i32) {
    %c0_i32 = arith.constant 0 : i32
    %c0_i32_0 = arith.constant 0 : i32
    %c0_i32_1 = arith.constant 0 : i32
    return %arg0, %c0_i32, %c0_i32_0 : i32, i32, i32
  }
  func.func @transform_3(%arg0: i32) -> (i32, i32, i32) {
    %c0_i32 = arith.constant 0 : i32
    %c0_i32_0 = arith.constant 0 : i32
    %c0_i32_1 = arith.constant 0 : i32
    return %arg0, %c0_i32, %c0_i32_0 : i32, i32, i32
  }
}

</mosaic_0001>

<llo_original>
// kernel: tpu_custom_call.1
$region0: #{tpu_custom_call.1}
  #allocation0 [shape = 'u32[]', space=smem, size = 0x4, offset = 0x4, fixed_abs, tag = 'smem constant byte address 0x4 - core index']
  #allocation1 [shape = 'u32[144,128]{1,0:T(1,128)}', space=vmem, size = 0x12000, scoped, tag = 'internal scratch']
  #allocation2 [shape = 'f32[36,16,16]{2,1,0:T(8,128)}', space=vmem, size = 0x48000, scoped, tag = 'scratch operand']
  %s0 = inlined_call_operand.vmem [shape: f32[2,4,18,18], index: 0, kind: input, shape index: {}]
  %s1 = inlined_call_operand.vmem [shape: f32[8,36], index: 1, kind: input, shape index: {}]
  %s2 = inlined_call_operand.hbm [shape: f32[2,8,256], index: 2, kind: output, shape index: {0}]
  %s3 = inlined_call_operand.vmem [shape: f32[2,8,2], index: 3, kind: output, shape index: {1}]
  %4 = xla_tuple %s2, %s3
  %s5 = sld [smem:[#allocation0]]
  $region49: #{tpu_custom_call.1} parent=0
    _
  %s7 = ssub.s32 1, %s5
  %s8 = scalar_select 0, %s7, %s5
  $region1: #{tpu_custom_call.1} parent=0
    #allocation3 [shape = 'u8[16384]{0}', space=vmem, size = 0x4000, scoped, tag = 'output window, operand 0']
    #allocation4 [shape = 's32[2]{0}', space=sflag, size = 0x8, scoped, tag = 'scoped memory for tpu_custom_call.1']
    %9 = vsyncpa [#allocation4], 0
    %s10 = scalar_lea.sflag [#allocation4], 1
    %11 = vsyncpa %s10, 0
    loop: start=0, step=1, limit=4
    $region2: #{tpu_custom_call.1} parent=1 // loop_pre_header
      _
    $region3: #{tpu_custom_call.1} parent=1 // loop_header
      %s13 = sphi 0, %s17
      %p14 = scmp.ge.s32.totalorder %s13, 4
      %s23 = sphi 0, %s25
      %s26 = sphi 0, %s23
      %s27 = sphi 0, %s26
      %s43 = sphi 0, %s27
      %s47 = sphi 0, %s47
      %s49 = sphi 0, %s47
      %s50 = sphi 0, %s49
      %s64 = sphi 0, %s50
      %s70 = sphi 0, %s72
      %s73 = sphi 0, %s70
      %s74 = sphi 0, %s73
      %s90 = sphi 0, %s74
      %s96 = sphi 0, %s98
      %s99 = sphi 0, %s96
      %s100 = sphi 0, %s99
      %s116 = sphi 0, %s100
    $region4: #{tpu_custom_call.1} parent=1 // loop_header_branch
      %16 = sbr.rel (%p14) target = $region8
    $region5: #{tpu_custom_call.1} parent=1 // loop_body
      %s18 = ssub.s32 %s13, 1
      %s19 = ssub.s32 %s13, 2
      %s20 = sadd.s32 %s13, 1
      %s21 = ssub.s32 %s13, %s20
      %p22 = scmp.eq.s32.totalorder %s21, 0
      %s24 = sadd.s32 %s23, 1
      %s25 = scalar_select %p22, %s23, %s24
      %p28 = pneg %p22
      %p29 = scmp.eq.s32.totalorder %s13, 1
      %p30 = por %p28, %p29
      %p31 = scmp.ne.s32.totalorder %s23, %s26
      %p32 = scmp.eq.s32.totalorder %s13, 0
      %p33 = por %p31, %p32
      %p34 = scmp.ne.s32.totalorder %s23, %s26
      %p35 = scmp.eq.s32.totalorder %s18, 1
      %p36 = por %p34, %p35
      %p37 = scmp.ne.s32.totalorder %s26, %s27
      %p38 = scmp.eq.s32.totalorder %s18, 0
      %p39 = por %p37, %p38
      %p40 = scmp.ne.s32.totalorder %s26, %s27
      %p41 = scmp.eq.s32.totalorder %s19, 1
      %p42 = por %p40, %p41
      %p44 = scmp.ne.s32.totalorder %s27, %s43
      %p45 = scmp.eq.s32.totalorder %s19, 0
      %p46 = por %p44, %p45
      %s48 = sadd.s32 %s47, 1
      %p51 = scmp.eq.s32.totalorder %s13, 1
      %p52 = scmp.ne.s32.totalorder %s47, %s49
      %p53 = scmp.eq.s32.totalorder %s13, 0
      %p54 = por %p52, %p53
      %p55 = scmp.ne.s32.totalorder %s47, %s49
      %p56 = scmp.eq.s32.totalorder %s18, 1
      %p57 = por %p55, %p56
      %p58 = scmp.ne.s32.totalorder %s49, %s50
      %p59 = scmp.eq.s32.totalorder %s18, 0
      %p60 = por %p58, %p59
      %p61 = scmp.ne.s32.totalorder %s49, %s50
      %p62 = scmp.eq.s32.totalorder %s19, 1
      %p63 = por %p61, %p62
      %p65 = scmp.ne.s32.totalorder %s50, %s64
      %p66 = scmp.eq.s32.totalorder %s19, 0
      %p67 = por %p65, %p66
      %s68 = ssub.s32 %s13, %s20
      %p69 = scmp.eq.s32.totalorder %s68, 0
      %s71 = sadd.s32 %s70, 1
      %s72 = scalar_select %p69, %s70, %s71
      %p75 = pneg %p69
      %p76 = scmp.eq.s32.totalorder %s13, 1
      %p77 = por %p75, %p76
      %p78 = scmp.ne.s32.totalorder %s70, %s73
      %p79 = scmp.eq.s32.totalorder %s13, 0
      %p80 = por %p78, %p79
      %p81 = scmp.ne.s32.totalorder %s70, %s73
      %p82 = scmp.eq.s32.totalorder %s18, 1
      %p83 = por %p81, %p82
      %p84 = scmp.ne.s32.totalorder %s73, %s74
      %p85 = scmp.eq.s32.totalorder %s18, 0
      %p86 = por %p84, %p85
      %p87 = scmp.ne.s32.totalorder %s73, %s74
      %p88 = scmp.eq.s32.totalorder %s19, 1
      %p89 = por %p87, %p88
      %p91 = scmp.ne.s32.totalorder %s74, %s90
      %p92 = scmp.eq.s32.totalorder %s19, 0
      %p93 = por %p91, %p92
      %s94 = ssub.s32 %s13, %s20
      %p95 = scmp.eq.s32.totalorder %s94, 0
      %s97 = sadd.s32 %s96, 1
      %s98 = scalar_select %p95, %s96, %s97
      %p101 = pneg %p95
      %p102 = scmp.eq.s32.totalorder %s13, 1
      %p103 = por %p101, %p102
      %p104 = scmp.ne.s32.totalorder %s96, %s99
      %p105 = scmp.eq.s32.totalorder %s13, 0
      %p106 = por %p104, %p105
      %p107 = scmp.ne.s32.totalorder %s96, %s99
      %p108 = scmp.eq.s32.totalorder %s18, 1
      %p109 = por %p107, %p108
      %p110 = scmp.ne.s32.totalorder %s99, %s100
      %p111 = scmp.eq.s32.totalorder %s18, 0
      %p112 = por %p110, %p111
      %p113 = scmp.ne.s32.totalorder %s99, %s100
      %p114 = scmp.eq.s32.totalorder %s19, 1
      %p115 = por %p113, %p114
      %p117 = scmp.ne.s32.totalorder %s100, %s116
      %p118 = scmp.eq.s32.totalorder %s19, 0
      %p119 = por %p117, %p118
      %p120 = scmp.le.s32.totalorder 1, %s13
      %p121 = scmp.lt.s32.totalorder %s13, 3
      %p122 = pnand %p120, %p121
      %p123 = pneg %p122
      // Predicated region
      $region9: #{tpu_custom_call.1} parent=5 // pred_check
        _
      $region10: #{tpu_custom_call.1} parent=5 // pred_check_branch
        %125 = sbr.rel (%p122) target = $region12
      $region11: #{tpu_custom_call.1} parent=5 // pred_region
        %s126 = ssub.s32 %s13, 1
        // Predicated region
        $region13: #{tpu_custom_call.1} parent=11 // pred_check
          %p127 = pneg %p60
        $region14: #{tpu_custom_call.1} parent=11 // pred_check_branch
          %129 = sbr.rel (%p127) target = $region16
        $region15: #{tpu_custom_call.1} parent=11 // pred_region
          _
        $region16: #{tpu_custom_call.1} parent=11 // pred_fallthru
          _
      $region12: #{tpu_custom_call.1} parent=5 // pred_fallthru
        _
      %p130 = scmp.lt.s32.totalorder %s13, 2
      // Predicated region
      $region17: #{tpu_custom_call.1} parent=5 // pred_check
        %p131 = pneg %p130
      $region18: #{tpu_custom_call.1} parent=5 // pred_check_branch
        %133 = sbr.rel (%p131) target = $region20
      $region19: #{tpu_custom_call.1} parent=5 // pred_region
        // Predicated region
        $region21: #{tpu_custom_call.1} parent=19 // pred_check
          %p134 = pneg %p33
        $region22: #{tpu_custom_call.1} parent=19 // pred_check_branch
          %136 = sbr.rel (%p134) target = $region24
        $region23: #{tpu_custom_call.1} parent=19 // pred_region
          %p137 = scmp.lt.s32.totalorder %s13, 1
          %s138 = scalar_select %p137, %s13, 1
          %s139 = smul.addr %s138, 12
          %s140 = smul.addr %s139, 8
          %s141 = scalar_lea.vmem %s0, %s140
        $region24: #{tpu_custom_call.1} parent=19 // pred_fallthru
          _
      $region20: #{tpu_custom_call.1} parent=5 // pred_fallthru
        _
      %p142 = scmp.le.s32.totalorder 1, %s13
      %p143 = scmp.lt.s32.totalorder %s13, 3
      %p144 = pnand %p142, %p143
      %p145 = pneg %p144
      // Predicated region
      $region25: #{tpu_custom_call.1} parent=5 // pred_check
        _
      $region26: #{tpu_custom_call.1} parent=5 // pred_check_branch
        %147 = sbr.rel (%p144) target = $region28
      $region27: #{tpu_custom_call.1} parent=5 // pred_region
        %s148 = ssub.s32 %s13, 1
        %p149 = scmp.lt.s32.totalorder %s18, 1
        %s150 = scalar_select %p149, %s18, 1
        %s151 = smul.addr %s150, 12
        %s152 = smul.addr %s151, 8
        %s153 = scalar_lea.vmem %s0, %s152
        %p154 = pneg %p39
        %p155 = pneg %p36
        %p156 = pneg %p60
        %p157 = pneg %p57
        %p158 = pneg %p86
        %p159 = pneg %p83
        %s160 = sand.u32 %s73, 1
        %s161 = scalar_lea.sflag [#allocation4], %s160
        %s162 = sand.u32 %s73, 1
        %s163 = smul.addr %s162, 16
        %s164 = scalar_lea.vmem [#allocation3], %s163
        %p165 = pneg %p112
        %p166 = pneg %p109
        %p167 = scmp.lt.s32.totalorder %s18, 1
        %s168 = scalar_select %p167, %s18, 1
        %s169 = smul.addr %s168, 8
        %s170 = scalar_lea.vmem %s3, %s169
        %p171 = scmp.lt.s32.totalorder %s18, 1
        %s172 = scalar_select %p171, %s18, 1
        %s173 = smul.addr %s172, 12
        %s174 = smul.addr %s173, 8
        %s175 = scalar_lea.vmem %s0, %s174
        %p176 = scmp.lt.s32.totalorder %s18, 1
        %s177 = scalar_select %p176, %s18, 1
        %s178 = smul.addr %s177, 8
        %s179 = scalar_lea.vmem %s3, %s178
        %v180 = vld [vmem:[%s175] sm:$0xff]
        %v181 = vld [vmem:[%s175 + $0x8] sm:$0xff]
        %v182 = vld [vmem:[%s175 + $0x18] sm:$0xff]
        %v183 = vld [vmem:[%s175 + $0x20] sm:$0xff]
        %v184 = vld [vmem:[%s175 + $0x30] sm:$0xff]
        %v185 = vld [vmem:[%s175 + $0x38] sm:$0xff]
        %v186 = vld [vmem:[%s175 + $0x48] sm:$0xff]
        %v187 = vld [vmem:[%s175 + $0x50] sm:$0xff]
        %vm188 = vcmask 130048
        %189 = vst.msk [vmem:[#allocation2] sm:$0xff] %vm188, %v180
        %190 = vst.msk [vmem:[#allocation2 + $0x8] sm:$0xff] %vm188, %v181
        %191 = vst.msk [vmem:[#allocation2 + $0x10] sm:$0xff] %vm188, %v182
        %192 = vst.msk [vmem:[#allocation2 + $0x18] sm:$0xff] %vm188, %v183
        %193 = vst.msk [vmem:[#allocation2 + $0x20] sm:$0xff] %vm188, %v184
        %194 = vst.msk [vmem:[#allocation2 + $0x28] sm:$0xff] %vm188, %v185
        %195 = vst.msk [vmem:[#allocation2 + $0x30] sm:$0xff] %vm188, %v186
        %196 = vst.msk [vmem:[#allocation2 + $0x38] sm:$0xff] %vm188, %v187
        %v197 = vld [vmem:[%s175] sm:$0xff]
        %v198 = vld [vmem:[%s175 + $0x8] sm:$0xff]
        %v199 = vld [vmem:[%s175 + $0x18] sm:$0xff]
        %v200 = vld [vmem:[%s175 + $0x20] sm:$0xff]
        %v201 = vld [vmem:[%s175 + $0x30] sm:$0xff]
        %v202 = vld [vmem:[%s175 + $0x38] sm:$0xff]
        %v203 = vld [vmem:[%s175 + $0x48] sm:$0xff]
        %v204 = vld [vmem:[%s175 + $0x50] sm:$0xff]
        %213 = vrot.lane.b32.xlu0 %v197, 127
        %v214 = vpop.permute.xlu0 %213
        %215 = vrot.lane.b32.xlu0 %v198, 127
        %v216 = vpop.permute.xlu0 %215
        %217 = vrot.lane.b32.xlu0 %v199, 127
        %v218 = vpop.permute.xlu0 %217
        %219 = vrot.lane.b32.xlu0 %v200, 127
        %v220 = vpop.permute.xlu0 %219
        %221 = vrot.lane.b32.xlu0 %v201, 127
        %v222 = vpop.permute.xlu0 %221
        %223 = vrot.lane.b32.xlu0 %v202, 127
        %v224 = vpop.permute.xlu0 %223
        %225 = vrot.lane.b32.xlu0 %v203, 127
        %v226 = vpop.permute.xlu0 %225
        %227 = vrot.lane.b32.xlu0 %v204, 127
        %v228 = vpop.permute.xlu0 %227
        %s237 = scalar_lea.vmem [#allocation2], 64
        %238 = vst.msk [vmem:[%s237] sm:$0xff] %vm188, %v214
        %239 = vst.msk [vmem:[%s237 + $0x8] sm:$0xff] %vm188, %v216
        %240 = vst.msk [vmem:[%s237 + $0x10] sm:$0xff] %vm188, %v218
        %241 = vst.msk [vmem:[%s237 + $0x18] sm:$0xff] %vm188, %v220
        %242 = vst.msk [vmem:[%s237 + $0x20] sm:$0xff] %vm188, %v222
        %243 = vst.msk [vmem:[%s237 + $0x28] sm:$0xff] %vm188, %v224
        %244 = vst.msk [vmem:[%s237 + $0x30] sm:$0xff] %vm188, %v226
        %245 = vst.msk [vmem:[%s237 + $0x38] sm:$0xff] %vm188, %v228
        %v246 = vld [vmem:[%s175] sm:$0xff]
        %v247 = vld [vmem:[%s175 + $0x8] sm:$0xff]
        %v248 = vld [vmem:[%s175 + $0x18] sm:$0xff]
        %v249 = vld [vmem:[%s175 + $0x20] sm:$0xff]
        %v250 = vld [vmem:[%s175 + $0x30] sm:$0xff]
        %v251 = vld [vmem:[%s175 + $0x38] sm:$0xff]
        %v252 = vld [vmem:[%s175 + $0x48] sm:$0xff]
        %v253 = vld [vmem:[%s175 + $0x50] sm:$0xff]
        %262 = vrot.lane.b32.xlu0 %v246, 126
        %v263 = vpop.permute.xlu0 %262
        %264 = vrot.lane.b32.xlu0 %v247, 126
        %v265 = vpop.permute.xlu0 %264
        %266 = vrot.lane.b32.xlu0 %v248, 126
        %v267 = vpop.permute.xlu0 %266
        %268 = vrot.lane.b32.xlu0 %v249, 126
        %v269 = vpop.permute.xlu0 %268
        %270 = vrot.lane.b32.xlu0 %v250, 126
        %v271 = vpop.permute.xlu0 %270
        %272 = vrot.lane.b32.xlu0 %v251, 126
        %v273 = vpop.permute.xlu0 %272
        %274 = vrot.lane.b32.xlu0 %v252, 126
        %v275 = vpop.permute.xlu0 %274
        %276 = vrot.lane.b32.xlu0 %v253, 126
        %v277 = vpop.permute.xlu0 %276
        %s286 = scalar_lea.vmem [#allocation2], 128
        %287 = vst.msk [vmem:[%s286] sm:$0xff] %vm188, %v263
        %288 = vst.msk [vmem:[%s286 + $0x8] sm:$0xff] %vm188, %v265
        %289 = vst.msk [vmem:[%s286 + $0x10] sm:$0xff] %vm188, %v267
        %290 = vst.msk [vmem:[%s286 + $0x18] sm:$0xff] %vm188, %v269
        %291 = vst.msk [vmem:[%s286 + $0x20] sm:$0xff] %vm188, %v271
        %292 = vst.msk [vmem:[%s286 + $0x28] sm:$0xff] %vm188, %v273
        %293 = vst.msk [vmem:[%s286 + $0x30] sm:$0xff] %vm188, %v275
        %294 = vst.msk [vmem:[%s286 + $0x38] sm:$0xff] %vm188, %v277
        %v295 = vld [vmem:[%s175 + $0x1] sm:$0xff]
        %v296 = vld [vmem:[%s175 + $0x9] sm:$0xff]
        %v297 = vld [vmem:[%s175 + $0x19] sm:$0xff]
        %v298 = vld [vmem:[%s175 + $0x21] sm:$0xff]
        %v299 = vld [vmem:[%s175 + $0x31] sm:$0xff]
        %v300 = vld [vmem:[%s175 + $0x39] sm:$0xff]
        %v301 = vld [vmem:[%s175 + $0x49] sm:$0xff]
        %v302 = vld [vmem:[%s175 + $0x51] sm:$0xff]
        %s303 = scalar_lea.vmem [#allocation2], 192
        %304 = vst.msk [vmem:[%s303] sm:$0xff] %vm188, %v295
        %305 = vst.msk [vmem:[%s303 + $0x8] sm:$0xff] %vm188, %v296
        %306 = vst.msk [vmem:[%s303 + $0x10] sm:$0xff] %vm188, %v297
        %307 = vst.msk [vmem:[%s303 + $0x18] sm:$0xff] %vm188, %v298
        %308 = vst.msk [vmem:[%s303 + $0x20] sm:$0xff] %vm188, %v299
        %309 = vst.msk [vmem:[%s303 + $0x28] sm:$0xff] %vm188, %v300
        %310 = vst.msk [vmem:[%s303 + $0x30] sm:$0xff] %vm188, %v301
        %311 = vst.msk [vmem:[%s303 + $0x38] sm:$0xff] %vm188, %v302
        %v312 = vld [vmem:[%s175 + $0x1] sm:$0xff]
        %v313 = vld [vmem:[%s175 + $0x9] sm:$0xff]
        %v314 = vld [vmem:[%s175 + $0x19] sm:$0xff]
        %v315 = vld [vmem:[%s175 + $0x21] sm:$0xff]
        %v316 = vld [vmem:[%s175 + $0x31] sm:$0xff]
        %v317 = vld [vmem:[%s175 + $0x39] sm:$0xff]
        %v318 = vld [vmem:[%s175 + $0x49] sm:$0xff]
        %v319 = vld [vmem:[%s175 + $0x51] sm:$0xff]
        %328 = vrot.lane.b32.xlu0 %v312, 127
        %v329 = vpop.permute.xlu0 %328
        %330 = vrot.lane.b32.xlu0 %v313, 127
        %v331 = vpop.permute.xlu0 %330
        %332 = vrot.lane.b32.xlu0 %v314, 127
        %v333 = vpop.permute.xlu0 %332
        %334 = vrot.lane.b32.xlu0 %v315, 127
        %v335 = vpop.permute.xlu0 %334
        %336 = vrot.lane.b32.xlu0 %v316, 127
        %v337 = vpop.permute.xlu0 %336
        %338 = vrot.lane.b32.xlu0 %v317, 127
        %v339 = vpop.permute.xlu0 %338
        %340 = vrot.lane.b32.xlu0 %v318, 127
        %v341 = vpop.permute.xlu0 %340
        %342 = vrot.lane.b32.xlu0 %v319, 127
        %v343 = vpop.permute.xlu0 %342
        %s352 = scalar_lea.vmem [#allocation2], 256
        %353 = vst.msk [vmem:[%s352] sm:$0xff] %vm188, %v329
        %354 = vst.msk [vmem:[%s352 + $0x8] sm:$0xff] %vm188, %v331
        %355 = vst.msk [vmem:[%s352 + $0x10] sm:$0xff] %vm188, %v333
        %356 = vst.msk [vmem:[%s352 + $0x18] sm:$0xff] %vm188, %v335
        %357 = vst.msk [vmem:[%s352 + $0x20] sm:$0xff] %vm188, %v337
        %358 = vst.msk [vmem:[%s352 + $0x28] sm:$0xff] %vm188, %v339
        %359 = vst.msk [vmem:[%s352 + $0x30] sm:$0xff] %vm188, %v341
        %360 = vst.msk [vmem:[%s352 + $0x38] sm:$0xff] %vm188, %v343
        %v361 = vld [vmem:[%s175 + $0x1] sm:$0xff]
        %v362 = vld [vmem:[%s175 + $0x9] sm:$0xff]
        %v363 = vld [vmem:[%s175 + $0x19] sm:$0xff]
        %v364 = vld [vmem:[%s175 + $0x21] sm:$0xff]
        %v365 = vld [vmem:[%s175 + $0x31] sm:$0xff]
        %v366 = vld [vmem:[%s175 + $0x39] sm:$0xff]
        %v367 = vld [vmem:[%s175 + $0x49] sm:$0xff]
        %v368 = vld [vmem:[%s175 + $0x51] sm:$0xff]
        %377 = vrot.lane.b32.xlu0 %v361, 126
        %v378 = vpop.permute.xlu0 %377
        %379 = vrot.lane.b32.xlu0 %v362, 126
        %v380 = vpop.permute.xlu0 %379
        %381 = vrot.lane.b32.xlu0 %v363, 126
        %v382 = vpop.permute.xlu0 %381
        %383 = vrot.lane.b32.xlu0 %v364, 126
        %v384 = vpop.permute.xlu0 %383
        %385 = vrot.lane.b32.xlu0 %v365, 126
        %v386 = vpop.permute.xlu0 %385
        %387 = vrot.lane.b32.xlu0 %v366, 126
        %v388 = vpop.permute.xlu0 %387
        %389 = vrot.lane.b32.xlu0 %v367, 126
        %v390 = vpop.permute.xlu0 %389
        %391 = vrot.lane.b32.xlu0 %v368, 126
        %v392 = vpop.permute.xlu0 %391
        %s401 = scalar_lea.vmem [#allocation2], 320
        %402 = vst.msk [vmem:[%s401] sm:$0xff] %vm188, %v378
        %403 = vst.msk [vmem:[%s401 + $0x8] sm:$0xff] %vm188, %v380
        %404 = vst.msk [vmem:[%s401 + $0x10] sm:$0xff] %vm188, %v382
        %405 = vst.msk [vmem:[%s401 + $0x18] sm:$0xff] %vm188, %v384
        %406 = vst.msk [vmem:[%s401 + $0x20] sm:$0xff] %vm188, %v386
        %407 = vst.msk [vmem:[%s401 + $0x28] sm:$0xff] %vm188, %v388
        %408 = vst.msk [vmem:[%s401 + $0x30] sm:$0xff] %vm188, %v390
        %409 = vst.msk [vmem:[%s401 + $0x38] sm:$0xff] %vm188, %v392
        %v410 = vld [vmem:[%s175 + $0x2] sm:$0xff]
        %v411 = vld [vmem:[%s175 + $0xa] sm:$0xff]
        %v412 = vld [vmem:[%s175 + $0x1a] sm:$0xff]
        %v413 = vld [vmem:[%s175 + $0x22] sm:$0xff]
        %v414 = vld [vmem:[%s175 + $0x32] sm:$0xff]
        %v415 = vld [vmem:[%s175 + $0x3a] sm:$0xff]
        %v416 = vld [vmem:[%s175 + $0x4a] sm:$0xff]
        %v417 = vld [vmem:[%s175 + $0x52] sm:$0xff]
        %s418 = scalar_lea.vmem [#allocation2], 384
        %419 = vst.msk [vmem:[%s418] sm:$0xff] %vm188, %v410
        %420 = vst.msk [vmem:[%s418 + $0x8] sm:$0xff] %vm188, %v411
        %421 = vst.msk [vmem:[%s418 + $0x10] sm:$0xff] %vm188, %v412
        %422 = vst.msk [vmem:[%s418 + $0x18] sm:$0xff] %vm188, %v413
        %423 = vst.msk [vmem:[%s418 + $0x20] sm:$0xff] %vm188, %v414
        %424 = vst.msk [vmem:[%s418 + $0x28] sm:$0xff] %vm188, %v415
        %425 = vst.msk [vmem:[%s418 + $0x30] sm:$0xff] %vm188, %v416
        %426 = vst.msk [vmem:[%s418 + $0x38] sm:$0xff] %vm188, %v417
        %v427 = vld [vmem:[%s175 + $0x2] sm:$0xff]
        %v428 = vld [vmem:[%s175 + $0xa] sm:$0xff]
        %v429 = vld [vmem:[%s175 + $0x1a] sm:$0xff]
        %v430 = vld [vmem:[%s175 + $0x22] sm:$0xff]
        %v431 = vld [vmem:[%s175 + $0x32] sm:$0xff]
        %v432 = vld [vmem:[%s175 + $0x3a] sm:$0xff]
        %v433 = vld [vmem:[%s175 + $0x4a] sm:$0xff]
        %v434 = vld [vmem:[%s175 + $0x52] sm:$0xff]
        %443 = vrot.lane.b32.xlu0 %v427, 127
        %v444 = vpop.permute.xlu0 %443
        %445 = vrot.lane.b32.xlu0 %v428, 127
        %v446 = vpop.permute.xlu0 %445
        %447 = vrot.lane.b32.xlu0 %v429, 127
        %v448 = vpop.permute.xlu0 %447
        %449 = vrot.lane.b32.xlu0 %v430, 127
        %v450 = vpop.permute.xlu0 %449
        %451 = vrot.lane.b32.xlu0 %v431, 127
        %v452 = vpop.permute.xlu0 %451
        %453 = vrot.lane.b32.xlu0 %v432, 127
        %v454 = vpop.permute.xlu0 %453
        %455 = vrot.lane.b32.xlu0 %v433, 127
        %v456 = vpop.permute.xlu0 %455
        %457 = vrot.lane.b32.xlu0 %v434, 127
        %v458 = vpop.permute.xlu0 %457
        %s467 = scalar_lea.vmem [#allocation2], 448
        %468 = vst.msk [vmem:[%s467] sm:$0xff] %vm188, %v444
        %469 = vst.msk [vmem:[%s467 + $0x8] sm:$0xff] %vm188, %v446
        %470 = vst.msk [vmem:[%s467 + $0x10] sm:$0xff] %vm188, %v448
        %471 = vst.msk [vmem:[%s467 + $0x18] sm:$0xff] %vm188, %v450
        %472 = vst.msk [vmem:[%s467 + $0x20] sm:$0xff] %vm188, %v452
        %473 = vst.msk [vmem:[%s467 + $0x28] sm:$0xff] %vm188, %v454
        %474 = vst.msk [vmem:[%s467 + $0x30] sm:$0xff] %vm188, %v456
        %475 = vst.msk [vmem:[%s467 + $0x38] sm:$0xff] %vm188, %v458
        %v476 = vld [vmem:[%s175 + $0x2] sm:$0xff]
        %v477 = vld [vmem:[%s175 + $0xa] sm:$0xff]
        %v478 = vld [vmem:[%s175 + $0x1a] sm:$0xff]
        %v479 = vld [vmem:[%s175 + $0x22] sm:$0xff]
        %v480 = vld [vmem:[%s175 + $0x32] sm:$0xff]
        %v481 = vld [vmem:[%s175 + $0x3a] sm:$0xff]
        %v482 = vld [vmem:[%s175 + $0x4a] sm:$0xff]
        %v483 = vld [vmem:[%s175 + $0x52] sm:$0xff]
        %492 = vrot.lane.b32.xlu0 %v476, 126
        %v493 = vpop.permute.xlu0 %492
        %494 = vrot.lane.b32.xlu0 %v477, 126
        %v495 = vpop.permute.xlu0 %494
        %496 = vrot.lane.b32.xlu0 %v478, 126
        %v497 = vpop.permute.xlu0 %496
        %498 = vrot.lane.b32.xlu0 %v479, 126
        %v499 = vpop.permute.xlu0 %498
        %500 = vrot.lane.b32.xlu0 %v480, 126
        %v501 = vpop.permute.xlu0 %500
        %502 = vrot.lane.b32.xlu0 %v481, 126
        %v503 = vpop.permute.xlu0 %502
        %504 = vrot.lane.b32.xlu0 %v482, 126
        %v505 = vpop.permute.xlu0 %504
        %506 = vrot.lane.b32.xlu0 %v483, 126
        %v507 = vpop.permute.xlu0 %506
        %s516 = scalar_lea.vmem [#allocation2], 512
        %517 = vst.msk [vmem:[%s516] sm:$0xff] %vm188, %v493
        %518 = vst.msk [vmem:[%s516 + $0x8] sm:$0xff] %vm188, %v495
        %519 = vst.msk [vmem:[%s516 + $0x10] sm:$0xff] %vm188, %v497
        %520 = vst.msk [vmem:[%s516 + $0x18] sm:$0xff] %vm188, %v499
        %521 = vst.msk [vmem:[%s516 + $0x20] sm:$0xff] %vm188, %v501
        %522 = vst.msk [vmem:[%s516 + $0x28] sm:$0xff] %vm188, %v503
        %523 = vst.msk [vmem:[%s516 + $0x30] sm:$0xff] %vm188, %v505
        %524 = vst.msk [vmem:[%s516 + $0x38] sm:$0xff] %vm188, %v507
        %v525 = vld [vmem:[%s1] sm:$0xff]
        %v526 = vld [vmem:[#allocation2] sm:$0x1]
        %v527 = vld [vmem:[#allocation2 + $0x10] sm:$0x1]
        %v528 = vld [vmem:[#allocation2 + $0x20] sm:$0x1]
        %v529 = vld [vmem:[#allocation2 + $0x30] sm:$0x1]
        %v530 = vld [vmem:[#allocation2 + $0x40] sm:$0x1]
        %v531 = vld [vmem:[#allocation2 + $0x50] sm:$0x1]
        %v532 = vld [vmem:[#allocation2 + $0x60] sm:$0x1]
        %v533 = vld [vmem:[#allocation2 + $0x70] sm:$0x1]
        %v534 = vld [vmem:[#allocation2 + $0x80] sm:$0x1]
        %v535 = vld [vmem:[#allocation2 + $0x90] sm:$0x1]
        %v536 = vld [vmem:[#allocation2 + $0xa0] sm:$0x1]
        %v537 = vld [vmem:[#allocation2 + $0xb0] sm:$0x1]
        %v538 = vld [vmem:[#allocation2 + $0xc0] sm:$0x1]
        %v539 = vld [vmem:[#allocation2 + $0xd0] sm:$0x1]
        %v540 = vld [vmem:[#allocation2 + $0xe0] sm:$0x1]
        %v541 = vld [vmem:[#allocation2 + $0xf0] sm:$0x1]
        %v542 = vld [vmem:[#allocation2 + $0x100] sm:$0x1]
        %v543 = vld [vmem:[#allocation2 + $0x110] sm:$0x1]
        %v544 = vld [vmem:[#allocation2 + $0x120] sm:$0x1]
        %v545 = vld [vmem:[#allocation2 + $0x130] sm:$0x1]
        %v546 = vld [vmem:[#allocation2 + $0x140] sm:$0x1]
        %v547 = vld [vmem:[#allocation2 + $0x150] sm:$0x1]
        %v548 = vld [vmem:[#allocation2 + $0x160] sm:$0x1]
        %v549 = vld [vmem:[#allocation2 + $0x170] sm:$0x1]
        %v550 = vld [vmem:[#allocation2 + $0x180] sm:$0x1]
        %v551 = vld [vmem:[#allocation2 + $0x190] sm:$0x1]
        %v552 = vld [vmem:[#allocation2 + $0x1a0] sm:$0x1]
        %v553 = vld [vmem:[#allocation2 + $0x1b0] sm:$0x1]
        %v554 = vld [vmem:[#allocation2 + $0x1c0] sm:$0x1]
        %v555 = vld [vmem:[#allocation2 + $0x1d0] sm:$0x1]
        %v556 = vld [vmem:[#allocation2 + $0x1e0] sm:$0x1]
        %v557 = vld [vmem:[#allocation2 + $0x1f0] sm:$0x1]
        %v558 = vld [vmem:[#allocation2 + $0x200] sm:$0x1]
        %v559 = vld [vmem:[#allocation2 + $0x210] sm:$0x1]
        %v560 = vld [vmem:[#allocation2 + $0x220] sm:$0x1]
        %v561 = vld [vmem:[#allocation2 + $0x230] sm:$0x1]
        %v598 = vrot.slane %v527, 7
        %vm599 = vcmask 1041409
        %v600 = vsel %vm599, %v598, %v526
        %v601 = vrot.slane %v528, 6
        %vm602 = vcmask 1042434
        %v603 = vsel %vm602, %v601, %v600
        %v604 = vrot.slane %v529, 5
        %vm605 = vcmask 1043459
        %v606 = vsel %vm605, %v604, %v603
        %v607 = vrot.slane %v530, 4
        %vm608 = vcmask 1044484
        %v609 = vsel %vm608, %v607, %v606
        %v610 = vrot.slane %v531, 3
        %vm611 = vcmask 1045509
        %v612 = vsel %vm611, %v610, %v609
        %v613 = vrot.slane %v532, 2
        %vm614 = vcmask 1046534
        %v615 = vsel %vm614, %v613, %v612
        %v616 = vrot.slane %v533, 1
        %vm617 = vcmask 1047559
        %v618 = vsel %vm617, %v616, %v615
        %v619 = vrot.slane %v535, 7
        %v620 = vsel %vm599, %v619, %v534
        %v621 = vrot.slane %v536, 6
        %v622 = vsel %vm602, %v621, %v620
        %v623 = vrot.slane %v537, 5
        %v624 = vsel %vm605, %v623, %v622
        %v625 = vrot.slane %v538, 4
        %v626 = vsel %vm608, %v625, %v624
        %v627 = vrot.slane %v539, 3
        %v628 = vsel %vm611, %v627, %v626
        %v629 = vrot.slane %v540, 2
        %v630 = vsel %vm614, %v629, %v628
        %v631 = vrot.slane %v541, 1
        %v632 = vsel %vm617, %v631, %v630
        %v633 = vrot.slane %v543, 7
        %v634 = vsel %vm599, %v633, %v542
        %v635 = vrot.slane %v544, 6
        %v636 = vsel %vm602, %v635, %v634
        %v637 = vrot.slane %v545, 5
        %v638 = vsel %vm605, %v637, %v636
        %v639 = vrot.slane %v546, 4
        %v640 = vsel %vm608, %v639, %v638
        %v641 = vrot.slane %v547, 3
        %v642 = vsel %vm611, %v641, %v640
        %v643 = vrot.slane %v548, 2
        %v644 = vsel %vm614, %v643, %v642
        %v645 = vrot.slane %v549, 1
        %v646 = vsel %vm617, %v645, %v644
        %v647 = vrot.slane %v551, 7
        %v648 = vsel %vm599, %v647, %v550
        %v649 = vrot.slane %v552, 6
        %v650 = vsel %vm602, %v649, %v648
        %v651 = vrot.slane %v553, 5
        %v652 = vsel %vm605, %v651, %v650
        %v653 = vrot.slane %v554, 4
        %v654 = vsel %vm608, %v653, %v652
        %v655 = vrot.slane %v555, 3
        %v656 = vsel %vm611, %v655, %v654
        %v657 = vrot.slane %v556, 2
        %v658 = vsel %vm614, %v657, %v656
        %v659 = vrot.slane %v557, 1
        %v660 = vsel %vm617, %v659, %v658
        %v661 = vrot.slane %v559, 7
        %v662 = vsel %vm599, %v661, %v558
        %v663 = vrot.slane %v560, 6
        %v664 = vsel %vm602, %v663, %v662
        %v665 = vrot.slane %v561, 5
        %v666 = vsel %vm605, %v665, %v664
        %vm671 = vcmask 293888
        %v673 = vsel %vm671, %v525, 0
        %vm675 = vcmask 1043456
        %v676 = vsel %vm675, %v666, 0
        %678 = vmatprep.subr.mxu0 0.0
        %679 = vmatpush1.msra.mxu0 %v618
        %680 = vmatprep.subr.mxu0 0.0
        %681 = vmatpush1.msra.mxu0 %v632
        %682 = vmatprep.subr.mxu0 0.0
        %683 = vmatpush1.msra.mxu0 %v646
        %684 = vmatprep.subr.mxu0 0.0
        %685 = vmatpush1.msra.mxu0 %v660
        %686 = vmatprep.subr.mxu0 0.0
        %687 = vmatpush1.msra.mxu0 %v676
        %688 = vmatprep.subr.mxu0 0.0
        %689 = vmatpush1.msra.mxu0 0.0
        %690 = vmatprep.subr.mxu0 0.0
        %691 = vmatpush1.msra.mxu0 0.0
        %692 = vmatprep.subr.mxu0 0.0
        %693 = vmatpush1.msra.mxu0 0.0
        %694 = vmatprep.subr.mxu0 0.0
        %695 = vmatpush1.msra.mxu0 0.0
        %696 = vmatprep.subr.mxu0 0.0
        %697 = vmatpush1.msra.mxu0 0.0
        %698 = vmatprep.subr.mxu0 0.0
        %699 = vmatpush1.msra.mxu0 0.0
        %700 = vmatprep.subr.mxu0 0.0
        %701 = vmatpush1.msra.mxu0 0.0
        %702 = vmatprep.subr.mxu0 0.0
        %703 = vmatpush1.msra.mxu0 0.0
        %704 = vmatprep.subr.mxu0 0.0
        %705 = vmatpush1.msra.mxu0 0.0
        %706 = vmatprep.subr.mxu0 0.0
        %707 = vmatpush1.msra.mxu0 0.0
        %708 = vmatprep.subr.mxu0 0.0
        %709 = vmatpush1.msra.mxu0 0.0
        %710 = vmatprep.subr.mxu0 0.0
        %711 = vmatpush1.msra.mxu0 0.0
        %712 = vmatprep.subr.mxu0 0.0
        %713 = vmatpush1.msra.mxu0 0.0
        %714 = vmatprep.subr.mxu0 0.0
        %715 = vmatpush1.msra.mxu0 0.0
        %716 = vmatprep.subr.mxu0 0.0
        %717 = vmatpush1.msra.mxu0 0.0
        %718 = vmatprep.subr.mxu0 0.0
        %719 = vmatpush1.msra.mxu0 0.0
        %720 = vmatprep.subr.mxu0 0.0
        %721 = vmatpush1.msra.mxu0 0.0
        %722 = vmatprep.subr.mxu0 0.0
        %723 = vmatpush1.msra.mxu0 0.0
        %724 = vmatprep.subr.mxu0 0.0
        %725 = vmatpush1.msra.mxu0 0.0
        %726 = vmatprep.subr.mxu0 0.0
        %727 = vmatpush1.msra.mxu0 0.0
        %728 = vmatprep.subr.mxu0 0.0
        %729 = vmatpush1.msra.mxu0 0.0
        %730 = vmatprep.subr.mxu0 0.0
        %731 = vmatpush1.msra.mxu0 0.0
        %732 = vmatprep.subr.mxu0 0.0
        %733 = vmatpush1.msra.mxu0 0.0
        %734 = vmatprep.subr.mxu0 0.0
        %735 = vmatpush1.msra.mxu0 0.0
        %736 = vmatprep.subr.mxu0 0.0
        %737 = vmatpush1.msra.mxu0 0.0
        %738 = vmatprep.subr.mxu0 0.0
        %739 = vmatpush1.msra.mxu0 0.0
        %740 = vmatprep.subr.mxu0 0.0
        %741 = vmatpush1.msra.mxu0 0.0
        %742 = vmatprep.mubr.f32.mxu0 0.0
        %743 = vmatmul.mubr.f32.gmra.mrb[0].mxu0 %v673
        %v744 = vpop.f32.mrb[0].mxu0
        %v745 = vadd.f32 0.0, %v744
        %v746 = vpop.f32.mrb[0].mxu0
        %747 = vdwg.mxu0
        %748 = vst.msk [vmem:[%s164] sm:$0xff] %vm188, %v745
        %v749 = vsel %vm188, %v745, 0.0
        %750 = vadd.xlane.f32.xlu0 %v749
        %v751 = vpop.xlane.xlu0 %750
        %v752 = vadd.f32 %v751, 0.0
        %v753 = vmul.f32 %v745, %v745
        %v754 = vsel %vm188, %v753, 0.0
        %755 = vadd.xlane.f32.xlu0 %v754
        %v756 = vpop.xlane.xlu0 %755
        %v757 = vadd.f32 %v756, 0.0
        %v758 = vld [vmem:[#allocation2 + $0x1] sm:$0x1]
        %v759 = vld [vmem:[#allocation2 + $0x11] sm:$0x1]
        %v760 = vld [vmem:[#allocation2 + $0x21] sm:$0x1]
        %v761 = vld [vmem:[#allocation2 + $0x31] sm:$0x1]
        %v762 = vld [vmem:[#allocation2 + $0x41] sm:$0x1]
        %v763 = vld [vmem:[#allocation2 + $0x51] sm:$0x1]
        %v764 = vld [vmem:[#allocation2 + $0x61] sm:$0x1]
        %v765 = vld [vmem:[#allocation2 + $0x71] sm:$0x1]
        %v766 = vld [vmem:[#allocation2 + $0x81] sm:$0x1]
        %v767 = vld [vmem:[#allocation2 + $0x91] sm:$0x1]
        %v768 = vld [vmem:[#allocation2 + $0xa1] sm:$0x1]
        %v769 = vld [vmem:[#allocation2 + $0xb1] sm:$0x1]
        %v770 = vld [vmem:[#allocation2 + $0xc1] sm:$0x1]
        %v771 = vld [vmem:[#allocation2 + $0xd1] sm:$0x1]
        %v772 = vld [vmem:[#allocation2 + $0xe1] sm:$0x1]
        %v773 = vld [vmem:[#allocation2 + $0xf1] sm:$0x1]
        %v774 = vld [vmem:[#allocation2 + $0x101] sm:$0x1]
        %v775 = vld [vmem:[#allocation2 + $0x111] sm:$0x1]
        %v776 = vld [vmem:[#allocation2 + $0x121] sm:$0x1]
        %v777 = vld [vmem:[#allocation2 + $0x131] sm:$0x1]
        %v778 = vld [vmem:[#allocation2 + $0x141] sm:$0x1]
        %v779 = vld [vmem:[#allocation2 + $0x151] sm:$0x1]
        %v780 = vld [vmem:[#allocation2 + $0x161] sm:$0x1]
        %v781 = vld [vmem:[#allocation2 + $0x171] sm:$0x1]
        %v782 = vld [vmem:[#allocation2 + $0x181] sm:$0x1]
        %v783 = vld [vmem:[#allocation2 + $0x191] sm:$0x1]
        %v784 = vld [vmem:[#allocation2 + $0x1a1] sm:$0x1]
        %v785 = vld [vmem:[#allocation2 + $0x1b1] sm:$0x1]
        %v786 = vld [vmem:[#allocation2 + $0x1c1] sm:$0x1]
        %v787 = vld [vmem:[#allocation2 + $0x1d1] sm:$0x1]
        %v788 = vld [vmem:[#allocation2 + $0x1e1] sm:$0x1]
        %v789 = vld [vmem:[#allocation2 + $0x1f1] sm:$0x1]
        %v790 = vld [vmem:[#allocation2 + $0x201] sm:$0x1]
        %v791 = vld [vmem:[#allocation2 + $0x211] sm:$0x1]
        %v792 = vld [vmem:[#allocation2 + $0x221] sm:$0x1]
        %v793 = vld [vmem:[#allocation2 + $0x231] sm:$0x1]
        %v830 = vrot.slane %v759, 7
        %v831 = vsel %vm599, %v830, %v758
        %v832 = vrot.slane %v760, 6
        %v833 = vsel %vm602, %v832, %v831
        %v834 = vrot.slane %v761, 5
        %v835 = vsel %vm605, %v834, %v833
        %v836 = vrot.slane %v762, 4
        %v837 = vsel %vm608, %v836, %v835
        %v838 = vrot.slane %v763, 3
        %v839 = vsel %vm611, %v838, %v837
        %v840 = vrot.slane %v764, 2
        %v841 = vsel %vm614, %v840, %v839
        %v842 = vrot.slane %v765, 1
        %v843 = vsel %vm617, %v842, %v841
        %v844 = vrot.slane %v767, 7
        %v845 = vsel %vm599, %v844, %v766
        %v846 = vrot.slane %v768, 6
        %v847 = vsel %vm602, %v846, %v845
        %v848 = vrot.slane %v769, 5
        %v849 = vsel %vm605, %v848, %v847
        %v850 = vrot.slane %v770, 4
        %v851 = vsel %vm608, %v850, %v849
        %v852 = vrot.slane %v771, 3
        %v853 = vsel %vm611, %v852, %v851
        %v854 = vrot.slane %v772, 2
        %v855 = vsel %vm614, %v854, %v853
        %v856 = vrot.slane %v773, 1
        %v857 = vsel %vm617, %v856, %v855
        %v858 = vrot.slane %v775, 7
        %v859 = vsel %vm599, %v858, %v774
        %v860 = vrot.slane %v776, 6
        %v861 = vsel %vm602, %v860, %v859
        %v862 = vrot.slane %v777, 5
        %v863 = vsel %vm605, %v862, %v861
        %v864 = vrot.slane %v778, 4
        %v865 = vsel %vm608, %v864, %v863
        %v866 = vrot.slane %v779, 3
        %v867 = vsel %vm611, %v866, %v865
        %v868 = vrot.slane %v780, 2
        %v869 = vsel %vm614, %v868, %v867
        %v870 = vrot.slane %v781, 1
        %v871 = vsel %vm617, %v870, %v869
        %v872 = vrot.slane %v783, 7
        %v873 = vsel %vm599, %v872, %v782
        %v874 = vrot.slane %v784, 6
        %v875 = vsel %vm602, %v874, %v873
        %v876 = vrot.slane %v785, 5
        %v877 = vsel %vm605, %v876, %v875
        %v878 = vrot.slane %v786, 4
        %v879 = vsel %vm608, %v878, %v877
        %v880 = vrot.slane %v787, 3
        %v881 = vsel %vm611, %v880, %v879
        %v882 = vrot.slane %v788, 2
        %v883 = vsel %vm614, %v882, %v881
        %v884 = vrot.slane %v789, 1
        %v885 = vsel %vm617, %v884, %v883
        %v886 = vrot.slane %v791, 7
        %v887 = vsel %vm599, %v886, %v790
        %v888 = vrot.slane %v792, 6
        %v889 = vsel %vm602, %v888, %v887
        %v890 = vrot.slane %v793, 5
        %v891 = vsel %vm605, %v890, %v889
        %v896 = vsel %vm675, %v891, 0
        %898 = vmatprep.subr.mxu0 0.0
        %899 = vmatpush1.msra.mxu0 %v843
        %900 = vmatprep.subr.mxu0 0.0
        %901 = vmatpush1.msra.mxu0 %v857
        %902 = vmatprep.subr.mxu0 0.0
        %903 = vmatpush1.msra.mxu0 %v871
        %904 = vmatprep.subr.mxu0 0.0
        %905 = vmatpush1.msra.mxu0 %v885
        %906 = vmatprep.subr.mxu0 0.0
        %907 = vmatpush1.msra.mxu0 %v896
        %908 = vmatprep.subr.mxu0 0.0
        %909 = vmatpush1.msra.mxu0 0.0
        %910 = vmatprep.subr.mxu0 0.0
        %911 = vmatpush1.msra.mxu0 0.0
        %912 = vmatprep.subr.mxu0 0.0
        %913 = vmatpush1.msra.mxu0 0.0
        %914 = vmatprep.subr.mxu0 0.0
        %915 = vmatpush1.msra.mxu0 0.0
        %916 = vmatprep.subr.mxu0 0.0
        %917 = vmatpush1.msra.mxu0 0.0
        %918 = vmatprep.subr.mxu0 0.0
        %919 = vmatpush1.msra.mxu0 0.0
        %920 = vmatprep.subr.mxu0 0.0
        %921 = vmatpush1.msra.mxu0 0.0
        %922 = vmatprep.subr.mxu0 0.0
        %923 = vmatpush1.msra.mxu0 0.0
        %924 = vmatprep.subr.mxu0 0.0
        %925 = vmatpush1.msra.mxu0 0.0
        %926 = vmatprep.subr.mxu0 0.0
        %927 = vmatpush1.msra.mxu0 0.0
        %928 = vmatprep.subr.mxu0 0.0
        %929 = vmatpush1.msra.mxu0 0.0
        %930 = vmatprep.subr.mxu0 0.0
        %931 = vmatpush1.msra.mxu0 0.0
        %932 = vmatprep.subr.mxu0 0.0
        %933 = vmatpush1.msra.mxu0 0.0
        %934 = vmatprep.subr.mxu0 0.0
        %935 = vmatpush1.msra.mxu0 0.0
        %936 = vmatprep.subr.mxu0 0.0
        %937 = vmatpush1.msra.mxu0 0.0
        %938 = vmatprep.subr.mxu0 0.0
        %939 = vmatpush1.msra.mxu0 0.0
        %940 = vmatprep.subr.mxu0 0.0
        %941 = vmatpush1.msra.mxu0 0.0
        %942 = vmatprep.subr.mxu0 0.0
        %943 = vmatpush1.msra.mxu0 0.0
        %944 = vmatprep.subr.mxu0 0.0
        %945 = vmatpush1.msra.mxu0 0.0
        %946 = vmatprep.subr.mxu0 0.0
        %947 = vmatpush1.msra.mxu0 0.0
        %948 = vmatprep.subr.mxu0 0.0
        %949 = vmatpush1.msra.mxu0 0.0
        %950 = vmatprep.subr.mxu0 0.0
        %951 = vmatpush1.msra.mxu0 0.0
        %952 = vmatprep.subr.mxu0 0.0
        %953 = vmatpush1.msra.mxu0 0.0
        %954 = vmatprep.subr.mxu0 0.0
        %955 = vmatpush1.msra.mxu0 0.0
        %956 = vmatprep.subr.mxu0 0.0
        %957 = vmatpush1.msra.mxu0 0.0
        %958 = vmatprep.subr.mxu0 0.0
        %959 = vmatpush1.msra.mxu0 0.0
        %960 = vmatprep.subr.mxu0 0.0
        %961 = vmatpush1.msra.mxu0 0.0
        %962 = vmatprep.mubr.f32.mxu0 0.0
        %963 = vmatmul.mubr.f32.gmra.mrb[0].mxu0 %v673
        %v964 = vpop.f32.mrb[0].mxu0
        %v965 = vadd.f32 0.0, %v964
        %v966 = vpop.f32.mrb[0].mxu0
        %967 = vdwg.mxu0
        %969 = vrot.lane.b32.xlu0 %v965, 16
        %v970 = vpop.permute.xlu0 %969
        %vm972 = vcmask 261248
        %973 = vst.msk [vmem:[%s164] sm:$0xff] %vm972, %v970
        %v974 = vsel %vm188, %v965, 0.0
        %975 = vadd.xlane.f32.xlu0 %v974
        %v976 = vpop.xlane.xlu0 %975
        %v977 = vadd.f32 %v752, %v976
        %v978 = vmul.f32 %v965, %v965
        %v979 = vsel %vm188, %v978, 0.0
        %980 = vadd.xlane.f32.xlu0 %v979
        %v981 = vpop.xlane.xlu0 %980
        %v982 = vadd.f32 %v757, %v981
        %v983 = vld [vmem:[#allocation2 + $0x2] sm:$0x1]
        %v984 = vld [vmem:[#allocation2 + $0x12] sm:$0x1]
        %v985 = vld [vmem:[#allocation2 + $0x22] sm:$0x1]
        %v986 = vld [vmem:[#allocation2 + $0x32] sm:$0x1]
        %v987 = vld [vmem:[#allocation2 + $0x42] sm:$0x1]
        %v988 = vld [vmem:[#allocation2 + $0x52] sm:$0x1]
        %v989 = vld [vmem:[#allocation2 + $0x62] sm:$0x1]
        %v990 = vld [vmem:[#allocation2 + $0x72] sm:$0x1]
        %v991 = vld [vmem:[#allocation2 + $0x82] sm:$0x1]
        %v992 = vld [vmem:[#allocation2 + $0x92] sm:$0x1]
        %v993 = vld [vmem:[#allocation2 + $0xa2] sm:$0x1]
        %v994 = vld [vmem:[#allocation2 + $0xb2] sm:$0x1]
        %v995 = vld [vmem:[#allocation2 + $0xc2] sm:$0x1]
        %v996 = vld [vmem:[#allocation2 + $0xd2] sm:$0x1]
        %v997 = vld [vmem:[#allocation2 + $0xe2] sm:$0x1]
        %v998 = vld [vmem:[#allocation2 + $0xf2] sm:$0x1]
        %v999 = vld [vmem:[#allocation2 + $0x102] sm:$0x1]
        %v1000 = vld [vmem:[#allocation2 + $0x112] sm:$0x1]
        %v1001 = vld [vmem:[#allocation2 + $0x122] sm:$0x1]
        %v1002 = vld [vmem:[#allocation2 + $0x132] sm:$0x1]
        %v1003 = vld [vmem:[#allocation2 + $0x142] sm:$0x1]
        %v1004 = vld [vmem:[#allocation2 + $0x152] sm:$0x1]
        %v1005 = vld [vmem:[#allocation2 + $0x162] sm:$0x1]
        %v1006 = vld [vmem:[#allocation2 + $0x172] sm:$0x1]
        %v1007 = vld [vmem:[#allocation2 + $0x182] sm:$0x1]
        %v1008 = vld [vmem:[#allocation2 + $0x192] sm:$0x1]
        %v1009 = vld [vmem:[#allocation2 + $0x1a2] sm:$0x1]
        %v1010 = vld [vmem:[#allocation2 + $0x1b2] sm:$0x1]
        %v1011 = vld [vmem:[#allocation2 + $0x1c2] sm:$0x1]
        %v1012 = vld [vmem:[#allocation2 + $0x1d2] sm:$0x1]
        %v1013 = vld [vmem:[#allocation2 + $0x1e2] sm:$0x1]
        %v1014 = vld [vmem:[#allocation2 + $0x1f2] sm:$0x1]
        %v1015 = vld [vmem:[#allocation2 + $0x202] sm:$0x1]
        %v1016 = vld [vmem:[#allocation2 + $0x212] sm:$0x1]
        %v1017 = vld [vmem:[#allocation2 + $0x222] sm:$0x1]
        %v1018 = vld [vmem:[#allocation2 + $0x232] sm:$0x1]
        %v1055 = vrot.slane %v984, 7
        %v1056 = vsel %vm599, %v1055, %v983
        %v1057 = vrot.slane %v985, 6
        %v1058 = vsel %vm602, %v1057, %v1056
        %v1059 = vrot.slane %v986, 5
        %v1060 = vsel %vm605, %v1059, %v1058
        %v1061 = vrot.slane %v987, 4
        %v1062 = vsel %vm608, %v1061, %v1060
        %v1063 = vrot.slane %v988, 3
        %v1064 = vsel %vm611, %v1063, %v1062
        %v1065 = vrot.slane %v989, 2
        %v1066 = vsel %vm614, %v1065, %v1064
        %v1067 = vrot.slane %v990, 1
        %v1068 = vsel %vm617, %v1067, %v1066
        %v1069 = vrot.slane %v992, 7
        %v1070 = vsel %vm599, %v1069, %v991
        %v1071 = vrot.slane %v993, 6
        %v1072 = vsel %vm602, %v1071, %v1070
        %v1073 = vrot.slane %v994, 5
        %v1074 = vsel %vm605, %v1073, %v1072
        %v1075 = vrot.slane %v995, 4
        %v1076 = vsel %vm608, %v1075, %v1074
        %v1077 = vrot.slane %v996, 3
        %v1078 = vsel %vm611, %v1077, %v1076
        %v1079 = vrot.slane %v997, 2
        %v1080 = vsel %vm614, %v1079, %v1078
        %v1081 = vrot.slane %v998, 1
        %v1082 = vsel %vm617, %v1081, %v1080
        %v1083 = vrot.slane %v1000, 7
        %v1084 = vsel %vm599, %v1083, %v999
        %v1085 = vrot.slane %v1001, 6
        %v1086 = vsel %vm602, %v1085, %v1084
        %v1087 = vrot.slane %v1002, 5
        %v1088 = vsel %vm605, %v1087, %v1086
        %v1089 = vrot.slane %v1003, 4
        %v1090 = vsel %vm608, %v1089, %v1088
        %v1091 = vrot.slane %v1004, 3
        %v1092 = vsel %vm611, %v1091, %v1090
        %v1093 = vrot.slane %v1005, 2
        %v1094 = vsel %vm614, %v1093, %v1092
        %v1095 = vrot.slane %v1006, 1
        %v1096 = vsel %vm617, %v1095, %v1094
        %v1097 = vrot.slane %v1008, 7
        %v1098 = vsel %vm599, %v1097, %v1007
        %v1099 = vrot.slane %v1009, 6
        %v1100 = vsel %vm602, %v1099, %v1098
        %v1101 = vrot.slane %v1010, 5
        %v1102 = vsel %vm605, %v1101, %v1100
        %v1103 = vrot.slane %v1011, 4
        %v1104 = vsel %vm608, %v1103, %v1102
        %v1105 = vrot.slane %v1012, 3
        %v1106 = vsel %vm611, %v1105, %v1104
        %v1107 = vrot.slane %v1013, 2
        %v1108 = vsel %vm614, %v1107, %v1106
        %v1109 = vrot.slane %v1014, 1
        %v1110 = vsel %vm617, %v1109, %v1108
        %v1111 = vrot.slane %v1016, 7
        %v1112 = vsel %vm599, %v1111, %v1015
        %v1113 = vrot.slane %v1017, 6
        %v1114 = vsel %vm602, %v1113, %v1112
        %v1115 = vrot.slane %v1018, 5
        %v1116 = vsel %vm605, %v1115, %v1114
        %v1121 = vsel %vm675, %v1116, 0
        %1123 = vmatprep.subr.mxu0 0.0
        %1124 = vmatpush1.msra.mxu0 %v1068
        %1125 = vmatprep.subr.mxu0 0.0
        %1126 = vmatpush1.msra.mxu0 %v1082
        %1127 = vmatprep.subr.mxu0 0.0
        %1128 = vmatpush1.msra.mxu0 %v1096
        %1129 = vmatprep.subr.mxu0 0.0
        %1130 = vmatpush1.msra.mxu0 %v1110
        %1131 = vmatprep.subr.mxu0 0.0
        %1132 = vmatpush1.msra.mxu0 %v1121
        %1133 = vmatprep.subr.mxu0 0.0
        %1134 = vmatpush1.msra.mxu0 0.0
        %1135 = vmatprep.subr.mxu0 0.0
        %1136 = vmatpush1.msra.mxu0 0.0
        %1137 = vmatprep.subr.mxu0 0.0
        %1138 = vmatpush1.msra.mxu0 0.0
        %1139 = vmatprep.subr.mxu0 0.0
        %1140 = vmatpush1.msra.mxu0 0.0
        %1141 = vmatprep.subr.mxu0 0.0
        %1142 = vmatpush1.msra.mxu0 0.0
        %1143 = vmatprep.subr.mxu0 0.0
        %1144 = vmatpush1.msra.mxu0 0.0
        %1145 = vmatprep.subr.mxu0 0.0
        %1146 = vmatpush1.msra.mxu0 0.0
        %1147 = vmatprep.subr.mxu0 0.0
        %1148 = vmatpush1.msra.mxu0 0.0
        %1149 = vmatprep.subr.mxu0 0.0
        %1150 = vmatpush1.msra.mxu0 0.0
        %1151 = vmatprep.subr.mxu0 0.0
        %1152 = vmatpush1.msra.mxu0 0.0
        %1153 = vmatprep.subr.mxu0 0.0
        %1154 = vmatpush1.msra.mxu0 0.0
        %1155 = vmatprep.subr.mxu0 0.0
        %1156 = vmatpush1.msra.mxu0 0.0
        %1157 = vmatprep.subr.mxu0 0.0
        %1158 = vmatpush1.msra.mxu0 0.0
        %1159 = vmatprep.subr.mxu0 0.0
        %1160 = vmatpush1.msra.mxu0 0.0
        %1161 = vmatprep.subr.mxu0 0.0
        %1162 = vmatpush1.msra.mxu0 0.0
        %1163 = vmatprep.subr.mxu0 0.0
        %1164 = vmatpush1.msra.mxu0 0.0
        %1165 = vmatprep.subr.mxu0 0.0
        %1166 = vmatpush1.msra.mxu0 0.0
        %1167 = vmatprep.subr.mxu0 0.0
        %1168 = vmatpush1.msra.mxu0 0.0
        %1169 = vmatprep.subr.mxu0 0.0
        %1170 = vmatpush1.msra.mxu0 0.0
        %1171 = vmatprep.subr.mxu0 0.0
        %1172 = vmatpush1.msra.mxu0 0.0
        %1173 = vmatprep.subr.mxu0 0.0
        %1174 = vmatpush1.msra.mxu0 0.0
        %1175 = vmatprep.subr.mxu0 0.0
        %1176 = vmatpush1.msra.mxu0 0.0
        %1177 = vmatprep.subr.mxu0 0.0
        %1178 = vmatpush1.msra.mxu0 0.0
        %1179 = vmatprep.subr.mxu0 0.0
        %1180 = vmatpush1.msra.mxu0 0.0
        %1181 = vmatprep.subr.mxu0 0.0
        %1182 = vmatpush1.msra.mxu0 0.0
        %1183 = vmatprep.subr.mxu0 0.0
        %1184 = vmatpush1.msra.mxu0 0.0
        %1185 = vmatprep.subr.mxu0 0.0
        %1186 = vmatpush1.msra.mxu0 0.0
        %1187 = vmatprep.mubr.f32.mxu0 0.0
        %1188 = vmatmul.mubr.f32.gmra.mrb[0].mxu0 %v673
        %v1189 = vpop.f32.mrb[0].mxu0
        %v1190 = vadd.f32 0.0, %v1189
        %v1191 = vpop.f32.mrb[0].mxu0
        %1192 = vdwg.mxu0
        %1194 = vrot.lane.b32.xlu0 %v1190, 32
        %v1195 = vpop.permute.xlu0 %1194
        %vm1197 = vcmask 392448
        %1198 = vst.msk [vmem:[%s164] sm:$0xff] %vm1197, %v1195
        %v1199 = vsel %vm188, %v1190, 0.0
        %1200 = vadd.xlane.f32.xlu0 %v1199
        %v1201 = vpop.xlane.xlu0 %1200
        %v1202 = vadd.f32 %v977, %v1201
        %v1203 = vmul.f32 %v1190, %v1190
        %v1204 = vsel %vm188, %v1203, 0.0
        %1205 = vadd.xlane.f32.xlu0 %v1204
        %v1206 = vpop.xlane.xlu0 %1205
        %v1207 = vadd.f32 %v982, %v1206
        %v1208 = vld [vmem:[#allocation2 + $0x3] sm:$0x1]
        %v1209 = vld [vmem:[#allocation2 + $0x13] sm:$0x1]
        %v1210 = vld [vmem:[#allocation2 + $0x23] sm:$0x1]
        %v1211 = vld [vmem:[#allocation2 + $0x33] sm:$0x1]
        %v1212 = vld [vmem:[#allocation2 + $0x43] sm:$0x1]
        %v1213 = vld [vmem:[#allocation2 + $0x53] sm:$0x1]
        %v1214 = vld [vmem:[#allocation2 + $0x63] sm:$0x1]
        %v1215 = vld [vmem:[#allocation2 + $0x73] sm:$0x1]
        %v1216 = vld [vmem:[#allocation2 + $0x83] sm:$0x1]
        %v1217 = vld [vmem:[#allocation2 + $0x93] sm:$0x1]
        %v1218 = vld [vmem:[#allocation2 + $0xa3] sm:$0x1]
        %v1219 = vld [vmem:[#allocation2 + $0xb3] sm:$0x1]
        %v1220 = vld [vmem:[#allocation2 + $0xc3] sm:$0x1]
        %v1221 = vld [vmem:[#allocation2 + $0xd3] sm:$0x1]
        %v1222 = vld [vmem:[#allocation2 + $0xe3] sm:$0x1]
        %v1223 = vld [vmem:[#allocation2 + $0xf3] sm:$0x1]
        %v1224 = vld [vmem:[#allocation2 + $0x103] sm:$0x1]
        %v1225 = vld [vmem:[#allocation2 + $0x113] sm:$0x1]
        %v1226 = vld [vmem:[#allocation2 + $0x123] sm:$0x1]
        %v1227 = vld [vmem:[#allocation2 + $0x133] sm:$0x1]
        %v1228 = vld [vmem:[#allocation2 + $0x143] sm:$0x1]
        %v1229 = vld [vmem:[#allocation2 + $0x153] sm:$0x1]
        %v1230 = vld [vmem:[#allocation2 + $0x163] sm:$0x1]
        %v1231 = vld [vmem:[#allocation2 + $0x173] sm:$0x1]
        %v1232 = vld [vmem:[#allocation2 + $0x183] sm:$0x1]
        %v1233 = vld [vmem:[#allocation2 + $0x193] sm:$0x1]
        %v1234 = vld [vmem:[#allocation2 + $0x1a3] sm:$0x1]
        %v1235 = vld [vmem:[#allocation2 + $0x1b3] sm:$0x1]
        %v1236 = vld [vmem:[#allocation2 + $0x1c3] sm:$0x1]
        %v1237 = vld [vmem:[#allocation2 + $0x1d3] sm:$0x1]
        %v1238 = vld [vmem:[#allocation2 + $0x1e3] sm:$0x1]
        %v1239 = vld [vmem:[#allocation2 + $0x1f3] sm:$0x1]
        %v1240 = vld [vmem:[#allocation2 + $0x203] sm:$0x1]
        %v1241 = vld [vmem:[#allocation2 + $0x213] sm:$0x1]
        %v1242 = vld [vmem:[#allocation2 + $0x223] sm:$0x1]
        %v1243 = vld [vmem:[#allocation2 + $0x233] sm:$0x1]
        %v1280 = vrot.slane %v1209, 7
        %v1281 = vsel %vm599, %v1280, %v1208
        %v1282 = vrot.slane %v1210, 6
        %v1283 = vsel %vm602, %v1282, %v1281
        %v1284 = vrot.slane %v1211, 5
        %v1285 = vsel %vm605, %v1284, %v1283
        %v1286 = vrot.slane %v1212, 4
        %v1287 = vsel %vm608, %v1286, %v1285
        %v1288 = vrot.slane %v1213, 3
        %v1289 = vsel %vm611, %v1288, %v1287
        %v1290 = vrot.slane %v1214, 2
        %v1291 = vsel %vm614, %v1290, %v1289
        %v1292 = vrot.slane %v1215, 1
        %v1293 = vsel %vm617, %v1292, %v1291
        %v1294 = vrot.slane %v1217, 7
        %v1295 = vsel %vm599, %v1294, %v1216
        %v1296 = vrot.slane %v1218, 6
        %v1297 = vsel %vm602, %v1296, %v1295
        %v1298 = vrot.slane %v1219, 5
        %v1299 = vsel %vm605, %v1298, %v1297
        %v1300 = vrot.slane %v1220, 4
        %v1301 = vsel %vm608, %v1300, %v1299
        %v1302 = vrot.slane %v1221, 3
        %v1303 = vsel %vm611, %v1302, %v1301
        %v1304 = vrot.slane %v1222, 2
        %v1305 = vsel %vm614, %v1304, %v1303
        %v1306 = vrot.slane %v1223, 1
        %v1307 = vsel %vm617, %v1306, %v1305
        %v1308 = vrot.slane %v1225, 7
        %v1309 = vsel %vm599, %v1308, %v1224
        %v1310 = vrot.slane %v1226, 6
        %v1311 = vsel %vm602, %v1310, %v1309
        %v1312 = vrot.slane %v1227, 5
        %v1313 = vsel %vm605, %v1312, %v1311
        %v1314 = vrot.slane %v1228, 4
        %v1315 = vsel %vm608, %v1314, %v1313
        %v1316 = vrot.slane %v1229, 3
        %v1317 = vsel %vm611, %v1316, %v1315
        %v1318 = vrot.slane %v1230, 2
        %v1319 = vsel %vm614, %v1318, %v1317
        %v1320 = vrot.slane %v1231, 1
        %v1321 = vsel %vm617, %v1320, %v1319
        %v1322 = vrot.slane %v1233, 7
        %v1323 = vsel %vm599, %v1322, %v1232
        %v1324 = vrot.slane %v1234, 6
        %v1325 = vsel %vm602, %v1324, %v1323
        %v1326 = vrot.slane %v1235, 5
        %v1327 = vsel %vm605, %v1326, %v1325
        %v1328 = vrot.slane %v1236, 4
        %v1329 = vsel %vm608, %v1328, %v1327
        %v1330 = vrot.slane %v1237, 3
        %v1331 = vsel %vm611, %v1330, %v1329
        %v1332 = vrot.slane %v1238, 2
        %v1333 = vsel %vm614, %v1332, %v1331
        %v1334 = vrot.slane %v1239, 1
        %v1335 = vsel %vm617, %v1334, %v1333
        %v1336 = vrot.slane %v1241, 7
        %v1337 = vsel %vm599, %v1336, %v1240
        %v1338 = vrot.slane %v1242, 6
        %v1339 = vsel %vm602, %v1338, %v1337
        %v1340 = vrot.slane %v1243, 5
        %v1341 = vsel %vm605, %v1340, %v1339
        %v1346 = vsel %vm675, %v1341, 0
        %1348 = vmatprep.subr.mxu0 0.0
        %1349 = vmatpush1.msra.mxu0 %v1293
        %1350 = vmatprep.subr.mxu0 0.0
        %1351 = vmatpush1.msra.mxu0 %v1307
        %1352 = vmatprep.subr.mxu0 0.0
        %1353 = vmatpush1.msra.mxu0 %v1321
        %1354 = vmatprep.subr.mxu0 0.0
        %1355 = vmatpush1.msra.mxu0 %v1335
        %1356 = vmatprep.subr.mxu0 0.0
        %1357 = vmatpush1.msra.mxu0 %v1346
        %1358 = vmatprep.subr.mxu0 0.0
        %1359 = vmatpush1.msra.mxu0 0.0
        %1360 = vmatprep.subr.mxu0 0.0
        %1361 = vmatpush1.msra.mxu0 0.0
        %1362 = vmatprep.subr.mxu0 0.0
        %1363 = vmatpush1.msra.mxu0 0.0
        %1364 = vmatprep.subr.mxu0 0.0
        %1365 = vmatpush1.msra.mxu0 0.0
        %1366 = vmatprep.subr.mxu0 0.0
        %1367 = vmatpush1.msra.mxu0 0.0
        %1368 = vmatprep.subr.mxu0 0.0
        %1369 = vmatpush1.msra.mxu0 0.0
        %1370 = vmatprep.subr.mxu0 0.0
        %1371 = vmatpush1.msra.mxu0 0.0
        %1372 = vmatprep.subr.mxu0 0.0
        %1373 = vmatpush1.msra.mxu0 0.0
        %1374 = vmatprep.subr.mxu0 0.0
        %1375 = vmatpush1.msra.mxu0 0.0
        %1376 = vmatprep.subr.mxu0 0.0
        %1377 = vmatpush1.msra.mxu0 0.0
        %1378 = vmatprep.subr.mxu0 0.0
        %1379 = vmatpush1.msra.mxu0 0.0
        %1380 = vmatprep.subr.mxu0 0.0
        %1381 = vmatpush1.msra.mxu0 0.0
        %1382 = vmatprep.subr.mxu0 0.0
        %1383 = vmatpush1.msra.mxu0 0.0
        %1384 = vmatprep.subr.mxu0 0.0
        %1385 = vmatpush1.msra.mxu0 0.0
        %1386 = vmatprep.subr.mxu0 0.0
        %1387 = vmatpush1.msra.mxu0 0.0
        %1388 = vmatprep.subr.mxu0 0.0
        %1389 = vmatpush1.msra.mxu0 0.0
        %1390 = vmatprep.subr.mxu0 0.0
        %1391 = vmatpush1.msra.mxu0 0.0
        %1392 = vmatprep.subr.mxu0 0.0
        %1393 = vmatpush1.msra.mxu0 0.0
        %1394 = vmatprep.subr.mxu0 0.0
        %1395 = vmatpush1.msra.mxu0 0.0
        %1396 = vmatprep.subr.mxu0 0.0
        %1397 = vmatpush1.msra.mxu0 0.0
        %1398 = vmatprep.subr.mxu0 0.0
        %1399 = vmatpush1.msra.mxu0 0.0
        %1400 = vmatprep.subr.mxu0 0.0
        %1401 = vmatpush1.msra.mxu0 0.0
        %1402 = vmatprep.subr.mxu0 0.0
        %1403 = vmatpush1.msra.mxu0 0.0
        %1404 = vmatprep.subr.mxu0 0.0
        %1405 = vmatpush1.msra.mxu0 0.0
        %1406 = vmatprep.subr.mxu0 0.0
        %1407 = vmatpush1.msra.mxu0 0.0
        %1408 = vmatprep.subr.mxu0 0.0
        %1409 = vmatpush1.msra.mxu0 0.0
        %1410 = vmatprep.subr.mxu0 0.0
        %1411 = vmatpush1.msra.mxu0 0.0
        %1412 = vmatprep.mubr.f32.mxu0 0.0
        %1413 = vmatmul.mubr.f32.gmra.mrb[0].mxu0 %v673
        %v1414 = vpop.f32.mrb[0].mxu0
        %v1415 = vadd.f32 0.0, %v1414
        %v1416 = vpop.f32.mrb[0].mxu0
        %1417 = vdwg.mxu0
        %1419 = vrot.lane.b32.xlu0 %v1415, 48
        %v1420 = vpop.permute.xlu0 %1419
        %vm1422 = vcmask 523648
        %1423 = vst.msk [vmem:[%s164] sm:$0xff] %vm1422, %v1420
        %v1424 = vsel %vm188, %v1415, 0.0
        %1425 = vadd.xlane.f32.xlu0 %v1424
        %v1426 = vpop.xlane.xlu0 %1425
        %v1427 = vadd.f32 %v1202, %v1426
        %v1428 = vmul.f32 %v1415, %v1415
        %v1429 = vsel %vm188, %v1428, 0.0
        %1430 = vadd.xlane.f32.xlu0 %v1429
        %v1431 = vpop.xlane.xlu0 %1430
        %v1432 = vadd.f32 %v1207, %v1431
        %v1433 = vld [vmem:[#allocation2 + $0x4] sm:$0x1]
        %v1434 = vld [vmem:[#allocation2 + $0x14] sm:$0x1]
        %v1435 = vld [vmem:[#allocation2 + $0x24] sm:$0x1]
        %v1436 = vld [vmem:[#allocation2 + $0x34] sm:$0x1]
        %v1437 = vld [vmem:[#allocation2 + $0x44] sm:$0x1]
        %v1438 = vld [vmem:[#allocation2 + $0x54] sm:$0x1]
        %v1439 = vld [vmem:[#allocation2 + $0x64] sm:$0x1]
        %v1440 = vld [vmem:[#allocation2 + $0x74] sm:$0x1]
        %v1441 = vld [vmem:[#allocation2 + $0x84] sm:$0x1]
        %v1442 = vld [vmem:[#allocation2 + $0x94] sm:$0x1]
        %v1443 = vld [vmem:[#allocation2 + $0xa4] sm:$0x1]
        %v1444 = vld [vmem:[#allocation2 + $0xb4] sm:$0x1]
        %v1445 = vld [vmem:[#allocation2 + $0xc4] sm:$0x1]
        %v1446 = vld [vmem:[#allocation2 + $0xd4] sm:$0x1]
        %v1447 = vld [vmem:[#allocation2 + $0xe4] sm:$0x1]
        %v1448 = vld [vmem:[#allocation2 + $0xf4] sm:$0x1]
        %v1449 = vld [vmem:[#allocation2 + $0x104] sm:$0x1]
        %v1450 = vld [vmem:[#allocation2 + $0x114] sm:$0x1]
        %v1451 = vld [vmem:[#allocation2 + $0x124] sm:$0x1]
        %v1452 = vld [vmem:[#allocation2 + $0x134] sm:$0x1]
        %v1453 = vld [vmem:[#allocation2 + $0x144] sm:$0x1]
        %v1454 = vld [vmem:[#allocation2 + $0x154] sm:$0x1]
        %v1455 = vld [vmem:[#allocation2 + $0x164] sm:$0x1]
        %v1456 = vld [vmem:[#allocation2 + $0x174] sm:$0x1]
        %v1457 = vld [vmem:[#allocation2 + $0x184] sm:$0x1]
        %v1458 = vld [vmem:[#allocation2 + $0x194] sm:$0x1]
        %v1459 = vld [vmem:[#allocation2 + $0x1a4] sm:$0x1]
        %v1460 = vld [vmem:[#allocation2 + $0x1b4] sm:$0x1]
        %v1461 = vld [vmem:[#allocation2 + $0x1c4] sm:$0x1]
        %v1462 = vld [vmem:[#allocation2 + $0x1d4] sm:$0x1]
        %v1463 = vld [vmem:[#allocation2 + $0x1e4] sm:$0x1]
        %v1464 = vld [vmem:[#allocation2 + $0x1f4] sm:$0x1]
        %v1465 = vld [vmem:[#allocation2 + $0x204] sm:$0x1]
        %v1466 = vld [vmem:[#allocation2 + $0x214] sm:$0x1]
        %v1467 = vld [vmem:[#allocation2 + $0x224] sm:$0x1]
        %v1468 = vld [vmem:[#allocation2 + $0x234] sm:$0x1]
        %v1505 = vrot.slane %v1434, 7
        %v1506 = vsel %vm599, %v1505, %v1433
        %v1507 = vrot.slane %v1435, 6
        %v1508 = vsel %vm602, %v1507, %v1506
        %v1509 = vrot.slane %v1436, 5
        %v1510 = vsel %vm605, %v1509, %v1508
        %v1511 = vrot.slane %v1437, 4
        %v1512 = vsel %vm608, %v1511, %v1510
        %v1513 = vrot.slane %v1438, 3
        %v1514 = vsel %vm611, %v1513, %v1512
        %v1515 = vrot.slane %v1439, 2
        %v1516 = vsel %vm614, %v1515, %v1514
        %v1517 = vrot.slane %v1440, 1
        %v1518 = vsel %vm617, %v1517, %v1516
        %v1519 = vrot.slane %v1442, 7
        %v1520 = vsel %vm599, %v1519, %v1441
        %v1521 = vrot.slane %v1443, 6
        %v1522 = vsel %vm602, %v1521, %v1520
        %v1523 = vrot.slane %v1444, 5
        %v1524 = vsel %vm605, %v1523, %v1522
        %v1525 = vrot.slane %v1445, 4
        %v1526 = vsel %vm608, %v1525, %v1524
        %v1527 = vrot.slane %v1446, 3
        %v1528 = vsel %vm611, %v1527, %v1526
        %v1529 = vrot.slane %v1447, 2
        %v1530 = vsel %vm614, %v1529, %v1528
        %v1531 = vrot.slane %v1448, 1
        %v1532 = vsel %vm617, %v1531, %v1530
        %v1533 = vrot.slane %v1450, 7
        %v1534 = vsel %vm599, %v1533, %v1449
        %v1535 = vrot.slane %v1451, 6
        %v1536 = vsel %vm602, %v1535, %v1534
        %v1537 = vrot.slane %v1452, 5
        %v1538 = vsel %vm605, %v1537, %v1536
        %v1539 = vrot.slane %v1453, 4
        %v1540 = vsel %vm608, %v1539, %v1538
        %v1541 = vrot.slane %v1454, 3
        %v1542 = vsel %vm611, %v1541, %v1540
        %v1543 = vrot.slane %v1455, 2
        %v1544 = vsel %vm614, %v1543, %v1542
        %v1545 = vrot.slane %v1456, 1
        %v1546 = vsel %vm617, %v1545, %v1544
        %v1547 = vrot.slane %v1458, 7
        %v1548 = vsel %vm599, %v1547, %v1457
        %v1549 = vrot.slane %v1459, 6
        %v1550 = vsel %vm602, %v1549, %v1548
        %v1551 = vrot.slane %v1460, 5
        %v1552 = vsel %vm605, %v1551, %v1550
        %v1553 = vrot.slane %v1461, 4
        %v1554 = vsel %vm608, %v1553, %v1552
        %v1555 = vrot.slane %v1462, 3
        %v1556 = vsel %vm611, %v1555, %v1554
        %v1557 = vrot.slane %v1463, 2
        %v1558 = vsel %vm614, %v1557, %v1556
        %v1559 = vrot.slane %v1464, 1
        %v1560 = vsel %vm617, %v1559, %v1558
        %v1561 = vrot.slane %v1466, 7
        %v1562 = vsel %vm599, %v1561, %v1465
        %v1563 = vrot.slane %v1467, 6
        %v1564 = vsel %vm602, %v1563, %v1562
        %v1565 = vrot.slane %v1468, 5
        %v1566 = vsel %vm605, %v1565, %v1564
        %v1571 = vsel %vm675, %v1566, 0
        %1573 = vmatprep.subr.mxu0 0.0
        %1574 = vmatpush1.msra.mxu0 %v1518
        %1575 = vmatprep.subr.mxu0 0.0
        %1576 = vmatpush1.msra.mxu0 %v1532
        %1577 = vmatprep.subr.mxu0 0.0
        %1578 = vmatpush1.msra.mxu0 %v1546
        %1579 = vmatprep.subr.mxu0 0.0
        %1580 = vmatpush1.msra.mxu0 %v1560
        %1581 = vmatprep.subr.mxu0 0.0
        %1582 = vmatpush1.msra.mxu0 %v1571
        %1583 = vmatprep.subr.mxu0 0.0
        %1584 = vmatpush1.msra.mxu0 0.0
        %1585 = vmatprep.subr.mxu0 0.0
        %1586 = vmatpush1.msra.mxu0 0.0
        %1587 = vmatprep.subr.mxu0 0.0
        %1588 = vmatpush1.msra.mxu0 0.0
        %1589 = vmatprep.subr.mxu0 0.0
        %1590 = vmatpush1.msra.mxu0 0.0
        %1591 = vmatprep.subr.mxu0 0.0
        %1592 = vmatpush1.msra.mxu0 0.0
        %1593 = vmatprep.subr.mxu0 0.0
        %1594 = vmatpush1.msra.mxu0 0.0
        %1595 = vmatprep.subr.mxu0 0.0
        %1596 = vmatpush1.msra.mxu0 0.0
        %1597 = vmatprep.subr.mxu0 0.0
        %1598 = vmatpush1.msra.mxu0 0.0
        %1599 = vmatprep.subr.mxu0 0.0
        %1600 = vmatpush1.msra.mxu0 0.0
        %1601 = vmatprep.subr.mxu0 0.0
        %1602 = vmatpush1.msra.mxu0 0.0
        %1603 = vmatprep.subr.mxu0 0.0
        %1604 = vmatpush1.msra.mxu0 0.0
        %1605 = vmatprep.subr.mxu0 0.0
        %1606 = vmatpush1.msra.mxu0 0.0
        %1607 = vmatprep.subr.mxu0 0.0
        %1608 = vmatpush1.msra.mxu0 0.0
        %1609 = vmatprep.subr.mxu0 0.0
        %1610 = vmatpush1.msra.mxu0 0.0
        %1611 = vmatprep.subr.mxu0 0.0
        %1612 = vmatpush1.msra.mxu0 0.0
        %1613 = vmatprep.subr.mxu0 0.0
        %1614 = vmatpush1.msra.mxu0 0.0
        %1615 = vmatprep.subr.mxu0 0.0
        %1616 = vmatpush1.msra.mxu0 0.0
        %1617 = vmatprep.subr.mxu0 0.0
        %1618 = vmatpush1.msra.mxu0 0.0
        %1619 = vmatprep.subr.mxu0 0.0
        %1620 = vmatpush1.msra.mxu0 0.0
        %1621 = vmatprep.subr.mxu0 0.0
        %1622 = vmatpush1.msra.mxu0 0.0
        %1623 = vmatprep.subr.mxu0 0.0
        %1624 = vmatpush1.msra.mxu0 0.0
        %1625 = vmatprep.subr.mxu0 0.0
        %1626 = vmatpush1.msra.mxu0 0.0
        %1627 = vmatprep.subr.mxu0 0.0
        %1628 = vmatpush1.msra.mxu0 0.0
        %1629 = vmatprep.subr.mxu0 0.0
        %1630 = vmatpush1.msra.mxu0 0.0
        %1631 = vmatprep.subr.mxu0 0.0
        %1632 = vmatpush1.msra.mxu0 0.0
        %1633 = vmatprep.subr.mxu0 0.0
        %1634 = vmatpush1.msra.mxu0 0.0
        %1635 = vmatprep.subr.mxu0 0.0
        %1636 = vmatpush1.msra.mxu0 0.0
        %1637 = vmatprep.mubr.f32.mxu0 0.0
        %1638 = vmatmul.mubr.f32.gmra.mrb[0].mxu0 %v673
        %v1639 = vpop.f32.mrb[0].mxu0
        %v1640 = vadd.f32 0.0, %v1639
        %v1641 = vpop.f32.mrb[0].mxu0
        %1642 = vdwg.mxu0
        %1644 = vrot.lane.b32.xlu0 %v1640, 64
        %v1645 = vpop.permute.xlu0 %1644
        %vm1647 = vcmask 654848
        %1648 = vst.msk [vmem:[%s164] sm:$0xff] %vm1647, %v1645
        %v1649 = vsel %vm188, %v1640, 0.0
        %1650 = vadd.xlane.f32.xlu0 %v1649
        %v1651 = vpop.xlane.xlu0 %1650
        %v1652 = vadd.f32 %v1427, %v1651
        %v1653 = vmul.f32 %v1640, %v1640
        %v1654 = vsel %vm188, %v1653, 0.0
        %1655 = vadd.xlane.f32.xlu0 %v1654
        %v1656 = vpop.xlane.xlu0 %1655
        %v1657 = vadd.f32 %v1432, %v1656
        %v1658 = vld [vmem:[#allocation2 + $0x5] sm:$0x1]
        %v1659 = vld [vmem:[#allocation2 + $0x15] sm:$0x1]
        %v1660 = vld [vmem:[#allocation2 + $0x25] sm:$0x1]
        %v1661 = vld [vmem:[#allocation2 + $0x35] sm:$0x1]
        %v1662 = vld [vmem:[#allocation2 + $0x45] sm:$0x1]
        %v1663 = vld [vmem:[#allocation2 + $0x55] sm:$0x1]
        %v1664 = vld [vmem:[#allocation2 + $0x65] sm:$0x1]
        %v1665 = vld [vmem:[#allocation2 + $0x75] sm:$0x1]
        %v1666 = vld [vmem:[#allocation2 + $0x85] sm:$0x1]
        %v1667 = vld [vmem:[#allocation2 + $0x95] sm:$0x1]
        %v1668 = vld [vmem:[#allocation2 + $0xa5] sm:$0x1]
        %v1669 = vld [vmem:[#allocation2 + $0xb5] sm:$0x1]
        %v1670 = vld [vmem:[#allocation2 + $0xc5] sm:$0x1]
        %v1671 = vld [vmem:[#allocation2 + $0xd5] sm:$0x1]
        %v1672 = vld [vmem:[#allocation2 + $0xe5] sm:$0x1]
        %v1673 = vld [vmem:[#allocation2 + $0xf5] sm:$0x1]
        %v1674 = vld [vmem:[#allocation2 + $0x105] sm:$0x1]
        %v1675 = vld [vmem:[#allocation2 + $0x115] sm:$0x1]
        %v1676 = vld [vmem:[#allocation2 + $0x125] sm:$0x1]
        %v1677 = vld [vmem:[#allocation2 + $0x135] sm:$0x1]
        %v1678 = vld [vmem:[#allocation2 + $0x145] sm:$0x1]
        %v1679 = vld [vmem:[#allocation2 + $0x155] sm:$0x1]
        %v1680 = vld [vmem:[#allocation2 + $0x165] sm:$0x1]
        %v1681 = vld [vmem:[#allocation2 + $0x175] sm:$0x1]
        %v1682 = vld [vmem:[#allocation2 + $0x185] sm:$0x1]
        %v1683 = vld [vmem:[#allocation2 + $0x195] sm:$0x1]
        %v1684 = vld [vmem:[#allocation2 + $0x1a5] sm:$0x1]
        %v1685 = vld [vmem:[#allocation2 + $0x1b5] sm:$0x1]
        %v1686 = vld [vmem:[#allocation2 + $0x1c5] sm:$0x1]
        %v1687 = vld [vmem:[#allocation2 + $0x1d5] sm:$0x1]
        %v1688 = vld [vmem:[#allocation2 + $0x1e5] sm:$0x1]
        %v1689 = vld [vmem:[#allocation2 + $0x1f5] sm:$0x1]
        %v1690 = vld [vmem:[#allocation2 + $0x205] sm:$0x1]
        %v1691 = vld [vmem:[#allocation2 + $0x215] sm:$0x1]
        %v1692 = vld [vmem:[#allocation2 + $0x225] sm:$0x1]
        %v1693 = vld [vmem:[#allocation2 + $0x235] sm:$0x1]
        %v1730 = vrot.slane %v1659, 7
        %v1731 = vsel %vm599, %v1730, %v1658
        %v1732 = vrot.slane %v1660, 6
        %v1733 = vsel %vm602, %v1732, %v1731
        %v1734 = vrot.slane %v1661, 5
        %v1735 = vsel %vm605, %v1734, %v1733
        %v1736 = vrot.slane %v1662, 4
        %v1737 = vsel %vm608, %v1736, %v1735
        %v1738 = vrot.slane %v1663, 3
        %v1739 = vsel %vm611, %v1738, %v1737
        %v1740 = vrot.slane %v1664, 2
        %v1741 = vsel %vm614, %v1740, %v1739
        %v1742 = vrot.slane %v1665, 1
        %v1743 = vsel %vm617, %v1742, %v1741
        %v1744 = vrot.slane %v1667, 7
        %v1745 = vsel %vm599, %v1744, %v1666
        %v1746 = vrot.slane %v1668, 6
        %v1747 = vsel %vm602, %v1746, %v1745
        %v1748 = vrot.slane %v1669, 5
        %v1749 = vsel %vm605, %v1748, %v1747
        %v1750 = vrot.slane %v1670, 4
        %v1751 = vsel %vm608, %v1750, %v1749
        %v1752 = vrot.slane %v1671, 3
        %v1753 = vsel %vm611, %v1752, %v1751
        %v1754 = vrot.slane %v1672, 2
        %v1755 = vsel %vm614, %v1754, %v1753
        %v1756 = vrot.slane %v1673, 1
        %v1757 = vsel %vm617, %v1756, %v1755
        %v1758 = vrot.slane %v1675, 7
        %v1759 = vsel %vm599, %v1758, %v1674
        %v1760 = vrot.slane %v1676, 6
        %v1761 = vsel %vm602, %v1760, %v1759
        %v1762 = vrot.slane %v1677, 5
        %v1763 = vsel %vm605, %v1762, %v1761
        %v1764 = vrot.slane %v1678, 4
        %v1765 = vsel %vm608, %v1764, %v1763
        %v1766 = vrot.slane %v1679, 3
        %v1767 = vsel %vm611, %v1766, %v1765
        %v1768 = vrot.slane %v1680, 2
        %v1769 = vsel %vm614, %v1768, %v1767
        %v1770 = vrot.slane %v1681, 1
        %v1771 = vsel %vm617, %v1770, %v1769
        %v1772 = vrot.slane %v1683, 7
        %v1773 = vsel %vm599, %v1772, %v1682
        %v1774 = vrot.slane %v1684, 6
        %v1775 = vsel %vm602, %v1774, %v1773
        %v1776 = vrot.slane %v1685, 5
        %v1777 = vsel %vm605, %v1776, %v1775
        %v1778 = vrot.slane %v1686, 4
        %v1779 = vsel %vm608, %v1778, %v1777
        %v1780 = vrot.slane %v1687, 3
        %v1781 = vsel %vm611, %v1780, %v1779
        %v1782 = vrot.slane %v1688, 2
        %v1783 = vsel %vm614, %v1782, %v1781
        %v1784 = vrot.slane %v1689, 1
        %v1785 = vsel %vm617, %v1784, %v1783
        %v1786 = vrot.slane %v1691, 7
        %v1787 = vsel %vm599, %v1786, %v1690
        %v1788 = vrot.slane %v1692, 6
        %v1789 = vsel %vm602, %v1788, %v1787
        %v1790 = vrot.slane %v1693, 5
        %v1791 = vsel %vm605, %v1790, %v1789
        %v1796 = vsel %vm675, %v1791, 0
        %1798 = vmatprep.subr.mxu0 0.0
        %1799 = vmatpush1.msra.mxu0 %v1743
        %1800 = vmatprep.subr.mxu0 0.0
        %1801 = vmatpush1.msra.mxu0 %v1757
        %1802 = vmatprep.subr.mxu0 0.0
        %1803 = vmatpush1.msra.mxu0 %v1771
        %1804 = vmatprep.subr.mxu0 0.0
        %1805 = vmatpush1.msra.mxu0 %v1785
        %1806 = vmatprep.subr.mxu0 0.0
        %1807 = vmatpush1.msra.mxu0 %v1796
        %1808 = vmatprep.subr.mxu0 0.0
        %1809 = vmatpush1.msra.mxu0 0.0
        %1810 = vmatprep.subr.mxu0 0.0
        %1811 = vmatpush1.msra.mxu0 0.0
        %1812 = vmatprep.subr.mxu0 0.0
        %1813 = vmatpush1.msra.mxu0 0.0
        %1814 = vmatprep.subr.mxu0 0.0
        %1815 = vmatpush1.msra.mxu0 0.0
        %1816 = vmatprep.subr.mxu0 0.0
        %1817 = vmatpush1.msra.mxu0 0.0
        %1818 = vmatprep.subr.mxu0 0.0
        %1819 = vmatpush1.msra.mxu0 0.0
        %1820 = vmatprep.subr.mxu0 0.0
        %1821 = vmatpush1.msra.mxu0 0.0
        %1822 = vmatprep.subr.mxu0 0.0
        %1823 = vmatpush1.msra.mxu0 0.0
        %1824 = vmatprep.subr.mxu0 0.0
        %1825 = vmatpush1.msra.mxu0 0.0
        %1826 = vmatprep.subr.mxu0 0.0
        %1827 = vmatpush1.msra.mxu0 0.0
        %1828 = vmatprep.subr.mxu0 0.0
        %1829 = vmatpush1.msra.mxu0 0.0
        %1830 = vmatprep.subr.mxu0 0.0
        %1831 = vmatpush1.msra.mxu0 0.0
        %1832 = vmatprep.subr.mxu0 0.0
        %1833 = vmatpush1.msra.mxu0 0.0
        %1834 = vmatprep.subr.mxu0 0.0
        %1835 = vmatpush1.msra.mxu0 0.0
        %1836 = vmatprep.subr.mxu0 0.0
        %1837 = vmatpush1.msra.mxu0 0.0
        %1838 = vmatprep.subr.mxu0 0.0
        %1839 = vmatpush1.msra.mxu0 0.0
        %1840 = vmatprep.subr.mxu0 0.0
        %1841 = vmatpush1.msra.mxu0 0.0
        %1842 = vmatprep.subr.mxu0 0.0
        %1843 = vmatpush1.msra.mxu0 0.0
        %1844 = vmatprep.subr.mxu0 0.0
        %1845 = vmatpush1.msra.mxu0 0.0
        %1846 = vmatprep.subr.mxu0 0.0
        %1847 = vmatpush1.msra.mxu0 0.0
        %1848 = vmatprep.subr.mxu0 0.0
        %1849 = vmatpush1.msra.mxu0 0.0
        %1850 = vmatprep.subr.mxu0 0.0
        %1851 = vmatpush1.msra.mxu0 0.0
        %1852 = vmatprep.subr.mxu0 0.0
        %1853 = vmatpush1.msra.mxu0 0.0
        %1854 = vmatprep.subr.mxu0 0.0
        %1855 = vmatpush1.msra.mxu0 0.0
        %1856 = vmatprep.subr.mxu0 0.0
        %1857 = vmatpush1.msra.mxu0 0.0
        %1858 = vmatprep.subr.mxu0 0.0
        %1859 = vmatpush1.msra.mxu0 0.0
        %1860 = vmatprep.subr.mxu0 0.0
        %1861 = vmatpush1.msra.mxu0 0.0
        %1862 = vmatprep.mubr.f32.mxu0 0.0
        %1863 = vmatmul.mubr.f32.gmra.mrb[0].mxu0 %v673
        %v1864 = vpop.f32.mrb[0].mxu0
        %v1865 = vadd.f32 0.0, %v1864
        %v1866 = vpop.f32.mrb[0].mxu0
        %1867 = vdwg.mxu0
        %1869 = vrot.lane.b32.xlu0 %v1865, 80
        %v1870 = vpop.permute.xlu0 %1869
        %vm1872 = vcmask 786048
        %1873 = vst.msk [vmem:[%s164] sm:$0xff] %vm1872, %v1870
        %v1874 = vsel %vm188, %v1865, 0.0
        %1875 = vadd.xlane.f32.xlu0 %v1874
        %v1876 = vpop.xlane.xlu0 %1875
        %v1877 = vadd.f32 %v1652, %v1876
        %v1878 = vmul.f32 %v1865, %v1865
        %v1879 = vsel %vm188, %v1878, 0.0
        %1880 = vadd.xlane.f32.xlu0 %v1879
        %v1881 = vpop.xlane.xlu0 %1880
        %v1882 = vadd.f32 %v1657, %v1881
        %v1883 = vld [vmem:[#allocation2 + $0x6] sm:$0x1]
        %v1884 = vld [vmem:[#allocation2 + $0x16] sm:$0x1]
        %v1885 = vld [vmem:[#allocation2 + $0x26] sm:$0x1]
        %v1886 = vld [vmem:[#allocation2 + $0x36] sm:$0x1]
        %v1887 = vld [vmem:[#allocation2 + $0x46] sm:$0x1]
        %v1888 = vld [vmem:[#allocation2 + $0x56] sm:$0x1]
        %v1889 = vld [vmem:[#allocation2 + $0x66] sm:$0x1]
        %v1890 = vld [vmem:[#allocation2 + $0x76] sm:$0x1]
        %v1891 = vld [vmem:[#allocation2 + $0x86] sm:$0x1]
        %v1892 = vld [vmem:[#allocation2 + $0x96] sm:$0x1]
        %v1893 = vld [vmem:[#allocation2 + $0xa6] sm:$0x1]
        %v1894 = vld [vmem:[#allocation2 + $0xb6] sm:$0x1]
        %v1895 = vld [vmem:[#allocation2 + $0xc6] sm:$0x1]
        %v1896 = vld [vmem:[#allocation2 + $0xd6] sm:$0x1]
        %v1897 = vld [vmem:[#allocation2 + $0xe6] sm:$0x1]
        %v1898 = vld [vmem:[#allocation2 + $0xf6] sm:$0x1]
        %v1899 = vld [vmem:[#allocation2 + $0x106] sm:$0x1]
        %v1900 = vld [vmem:[#allocation2 + $0x116] sm:$0x1]
        %v1901 = vld [vmem:[#allocation2 + $0x126] sm:$0x1]
        %v1902 = vld [vmem:[#allocation2 + $0x136] sm:$0x1]
        %v1903 = vld [vmem:[#allocation2 + $0x146] sm:$0x1]
        %v1904 = vld [vmem:[#allocation2 + $0x156] sm:$0x1]
        %v1905 = vld [vmem:[#allocation2 + $0x166] sm:$0x1]
        %v1906 = vld [vmem:[#allocation2 + $0x176] sm:$0x1]
        %v1907 = vld [vmem:[#allocation2 + $0x186] sm:$0x1]
        %v1908 = vld [vmem:[#allocation2 + $0x196] sm:$0x1]
        %v1909 = vld [vmem:[#allocation2 + $0x1a6] sm:$0x1]
        %v1910 = vld [vmem:[#allocation2 + $0x1b6] sm:$0x1]
        %v1911 = vld [vmem:[#allocation2 + $0x1c6] sm:$0x1]
        %v1912 = vld [vmem:[#allocation2 + $0x1d6] sm:$0x1]
        %v1913 = vld [vmem:[#allocation2 + $0x1e6] sm:$0x1]
        %v1914 = vld [vmem:[#allocation2 + $0x1f6] sm:$0x1]
        %v1915 = vld [vmem:[#allocation2 + $0x206] sm:$0x1]
        %v1916 = vld [vmem:[#allocation2 + $0x216] sm:$0x1]
        %v1917 = vld [vmem:[#allocation2 + $0x226] sm:$0x1]
        %v1918 = vld [vmem:[#allocation2 + $0x236] sm:$0x1]
        %v1955 = vrot.slane %v1884, 7
        %v1956 = vsel %vm599, %v1955, %v1883
        %v1957 = vrot.slane %v1885, 6
        %v1958 = vsel %vm602, %v1957, %v1956
        %v1959 = vrot.slane %v1886, 5
        %v1960 = vsel %vm605, %v1959, %v1958
        %v1961 = vrot.slane %v1887, 4
        %v1962 = vsel %vm608, %v1961, %v1960
        %v1963 = vrot.slane %v1888, 3
        %v1964 = vsel %vm611, %v1963, %v1962
        %v1965 = vrot.slane %v1889, 2
        %v1966 = vsel %vm614, %v1965, %v1964
        %v1967 = vrot.slane %v1890, 1
        %v1968 = vsel %vm617, %v1967, %v1966
        %v1969 = vrot.slane %v1892, 7
        %v1970 = vsel %vm599, %v1969, %v1891
        %v1971 = vrot.slane %v1893, 6
        %v1972 = vsel %vm602, %v1971, %v1970
        %v1973 = vrot.slane %v1894, 5
        %v1974 = vsel %vm605, %v1973, %v1972
        %v1975 = vrot.slane %v1895, 4
        %v1976 = vsel %vm608, %v1975, %v1974
        %v1977 = vrot.slane %v1896, 3
        %v1978 = vsel %vm611, %v1977, %v1976
        %v1979 = vrot.slane %v1897, 2
        %v1980 = vsel %vm614, %v1979, %v1978
        %v1981 = vrot.slane %v1898, 1
        %v1982 = vsel %vm617, %v1981, %v1980
        %v1983 = vrot.slane %v1900, 7
        %v1984 = vsel %vm599, %v1983, %v1899
        %v1985 = vrot.slane %v1901, 6
        %v1986 = vsel %vm602, %v1985, %v1984
        %v1987 = vrot.slane %v1902, 5
        %v1988 = vsel %vm605, %v1987, %v1986
        %v1989 = vrot.slane %v1903, 4
        %v1990 = vsel %vm608, %v1989, %v1988
        %v1991 = vrot.slane %v1904, 3
        %v1992 = vsel %vm611, %v1991, %v1990
        %v1993 = vrot.slane %v1905, 2
        %v1994 = vsel %vm614, %v1993, %v1992
        %v1995 = vrot.slane %v1906, 1
        %v1996 = vsel %vm617, %v1995, %v1994
        %v1997 = vrot.slane %v1908, 7
        %v1998 = vsel %vm599, %v1997, %v1907
        %v1999 = vrot.slane %v1909, 6
        %v2000 = vsel %vm602, %v1999, %v1998
        %v2001 = vrot.slane %v1910, 5
        %v2002 = vsel %vm605, %v2001, %v2000
        %v2003 = vrot.slane %v1911, 4
        %v2004 = vsel %vm608, %v2003, %v2002
        %v2005 = vrot.slane %v1912, 3
        %v2006 = vsel %vm611, %v2005, %v2004
        %v2007 = vrot.slane %v1913, 2
        %v2008 = vsel %vm614, %v2007, %v2006
        %v2009 = vrot.slane %v1914, 1
        %v2010 = vsel %vm617, %v2009, %v2008
        %v2011 = vrot.slane %v1916, 7
        %v2012 = vsel %vm599, %v2011, %v1915
        %v2013 = vrot.slane %v1917, 6
        %v2014 = vsel %vm602, %v2013, %v2012
        %v2015 = vrot.slane %v1918, 5
        %v2016 = vsel %vm605, %v2015, %v2014
        %v2021 = vsel %vm675, %v2016, 0
        %2023 = vmatprep.subr.mxu0 0.0
        %2024 = vmatpush1.msra.mxu0 %v1968
        %2025 = vmatprep.subr.mxu0 0.0
        %2026 = vmatpush1.msra.mxu0 %v1982
        %2027 = vmatprep.subr.mxu0 0.0
        %2028 = vmatpush1.msra.mxu0 %v1996
        %2029 = vmatprep.subr.mxu0 0.0
        %2030 = vmatpush1.msra.mxu0 %v2010
        %2031 = vmatprep.subr.mxu0 0.0
        %2032 = vmatpush1.msra.mxu0 %v2021
        %2033 = vmatprep.subr.mxu0 0.0
        %2034 = vmatpush1.msra.mxu0 0.0
        %2035 = vmatprep.subr.mxu0 0.0
        %2036 = vmatpush1.msra.mxu0 0.0
        %2037 = vmatprep.subr.mxu0 0.0
        %2038 = vmatpush1.msra.mxu0 0.0
        %2039 = vmatprep.subr.mxu0 0.0
        %2040 = vmatpush1.msra.mxu0 0.0
        %2041 = vmatprep.subr.mxu0 0.0
        %2042 = vmatpush1.msra.mxu0 0.0
        %2043 = vmatprep.subr.mxu0 0.0
        %2044 = vmatpush1.msra.mxu0 0.0
        %2045 = vmatprep.subr.mxu0 0.0
        %2046 = vmatpush1.msra.mxu0 0.0
        %2047 = vmatprep.subr.mxu0 0.0
        %2048 = vmatpush1.msra.mxu0 0.0
        %2049 = vmatprep.subr.mxu0 0.0
        %2050 = vmatpush1.msra.mxu0 0.0
        %2051 = vmatprep.subr.mxu0 0.0
        %2052 = vmatpush1.msra.mxu0 0.0
        %2053 = vmatprep.subr.mxu0 0.0
        %2054 = vmatpush1.msra.mxu0 0.0
        %2055 = vmatprep.subr.mxu0 0.0
        %2056 = vmatpush1.msra.mxu0 0.0
        %2057 = vmatprep.subr.mxu0 0.0
        %2058 = vmatpush1.msra.mxu0 0.0
        %2059 = vmatprep.subr.mxu0 0.0
        %2060 = vmatpush1.msra.mxu0 0.0
        %2061 = vmatprep.subr.mxu0 0.0
        %2062 = vmatpush1.msra.mxu0 0.0
        %2063 = vmatprep.subr.mxu0 0.0
        %2064 = vmatpush1.msra.mxu0 0.0
        %2065 = vmatprep.subr.mxu0 0.0
        %2066 = vmatpush1.msra.mxu0 0.0
        %2067 = vmatprep.subr.mxu0 0.0
        %2068 = vmatpush1.msra.mxu0 0.0
        %2069 = vmatprep.subr.mxu0 0.0
        %2070 = vmatpush1.msra.mxu0 0.0
        %2071 = vmatprep.subr.mxu0 0.0
        %2072 = vmatpush1.msra.mxu0 0.0
        %2073 = vmatprep.subr.mxu0 0.0
        %2074 = vmatpush1.msra.mxu0 0.0
        %2075 = vmatprep.subr.mxu0 0.0
        %2076 = vmatpush1.msra.mxu0 0.0
        %2077 = vmatprep.subr.mxu0 0.0
        %2078 = vmatpush1.msra.mxu0 0.0
        %2079 = vmatprep.subr.mxu0 0.0
        %2080 = vmatpush1.msra.mxu0 0.0
        %2081 = vmatprep.subr.mxu0 0.0
        %2082 = vmatpush1.msra.mxu0 0.0
        %2083 = vmatprep.subr.mxu0 0.0
        %2084 = vmatpush1.msra.mxu0 0.0
        %2085 = vmatprep.subr.mxu0 0.0
        %2086 = vmatpush1.msra.mxu0 0.0
        %2087 = vmatprep.mubr.f32.mxu0 0.0
        %2088 = vmatmul.mubr.f32.gmra.mrb[0].mxu0 %v673
        %v2089 = vpop.f32.mrb[0].mxu0
        %v2090 = vadd.f32 0.0, %v2089
        %v2091 = vpop.f32.mrb[0].mxu0
        %2092 = vdwg.mxu0
        %2094 = vrot.lane.b32.xlu0 %v2090, 96
        %v2095 = vpop.permute.xlu0 %2094
        %vm2097 = vcmask 917248
        %2098 = vst.msk [vmem:[%s164] sm:$0xff] %vm2097, %v2095
        %v2099 = vsel %vm188, %v2090, 0.0
        %2100 = vadd.xlane.f32.xlu0 %v2099
        %v2101 = vpop.xlane.xlu0 %2100
        %v2102 = vadd.f32 %v1877, %v2101
        %v2103 = vmul.f32 %v2090, %v2090
        %v2104 = vsel %vm188, %v2103, 0.0
        %2105 = vadd.xlane.f32.xlu0 %v2104
        %v2106 = vpop.xlane.xlu0 %2105
        %v2107 = vadd.f32 %v1882, %v2106
        %v2108 = vld [vmem:[#allocation2 + $0x7] sm:$0x1]
        %v2109 = vld [vmem:[#allocation2 + $0x17] sm:$0x1]
        %v2110 = vld [vmem:[#allocation2 + $0x27] sm:$0x1]
        %v2111 = vld [vmem:[#allocation2 + $0x37] sm:$0x1]
        %v2112 = vld [vmem:[#allocation2 + $0x47] sm:$0x1]
        %v2113 = vld [vmem:[#allocation2 + $0x57] sm:$0x1]
        %v2114 = vld [vmem:[#allocation2 + $0x67] sm:$0x1]
        %v2115 = vld [vmem:[#allocation2 + $0x77] sm:$0x1]
        %v2116 = vld [vmem:[#allocation2 + $0x87] sm:$0x1]
        %v2117 = vld [vmem:[#allocation2 + $0x97] sm:$0x1]
        %v2118 = vld [vmem:[#allocation2 + $0xa7] sm:$0x1]
        %v2119 = vld [vmem:[#allocation2 + $0xb7] sm:$0x1]
        %v2120 = vld [vmem:[#allocation2 + $0xc7] sm:$0x1]
        %v2121 = vld [vmem:[#allocation2 + $0xd7] sm:$0x1]
        %v2122 = vld [vmem:[#allocation2 + $0xe7] sm:$0x1]
        %v2123 = vld [vmem:[#allocation2 + $0xf7] sm:$0x1]
        %v2124 = vld [vmem:[#allocation2 + $0x107] sm:$0x1]
        %v2125 = vld [vmem:[#allocation2 + $0x117] sm:$0x1]
        %v2126 = vld [vmem:[#allocation2 + $0x127] sm:$0x1]
        %v2127 = vld [vmem:[#allocation2 + $0x137] sm:$0x1]
        %v2128 = vld [vmem:[#allocation2 + $0x147] sm:$0x1]
        %v2129 = vld [vmem:[#allocation2 + $0x157] sm:$0x1]
        %v2130 = vld [vmem:[#allocation2 + $0x167] sm:$0x1]
        %v2131 = vld [vmem:[#allocation2 + $0x177] sm:$0x1]
        %v2132 = vld [vmem:[#allocation2 + $0x187] sm:$0x1]
        %v2133 = vld [vmem:[#allocation2 + $0x197] sm:$0x1]
        %v2134 = vld [vmem:[#allocation2 + $0x1a7] sm:$0x1]
        %v2135 = vld [vmem:[#allocation2 + $0x1b7] sm:$0x1]
        %v2136 = vld [vmem:[#allocation2 + $0x1c7] sm:$0x1]
        %v2137 = vld [vmem:[#allocation2 + $0x1d7] sm:$0x1]
        %v2138 = vld [vmem:[#allocation2 + $0x1e7] sm:$0x1]
        %v2139 = vld [vmem:[#allocation2 + $0x1f7] sm:$0x1]
        %v2140 = vld [vmem:[#allocation2 + $0x207] sm:$0x1]
        %v2141 = vld [vmem:[#allocation2 + $0x217] sm:$0x1]
        %v2142 = vld [vmem:[#allocation2 + $0x227] sm:$0x1]
        %v2143 = vld [vmem:[#allocation2 + $0x237] sm:$0x1]
        %v2180 = vrot.slane %v2109, 7
        %v2181 = vsel %vm599, %v2180, %v2108
        %v2182 = vrot.slane %v2110, 6
        %v2183 = vsel %vm602, %v2182, %v2181
        %v2184 = vrot.slane %v2111, 5
        %v2185 = vsel %vm605, %v2184, %v2183
        %v2186 = vrot.slane %v2112, 4
        %v2187 = vsel %vm608, %v2186, %v2185
        %v2188 = vrot.slane %v2113, 3
        %v2189 = vsel %vm611, %v2188, %v2187
        %v2190 = vrot.slane %v2114, 2
        %v2191 = vsel %vm614, %v2190, %v2189
        %v2192 = vrot.slane %v2115, 1
        %v2193 = vsel %vm617, %v2192, %v2191
        %v2194 = vrot.slane %v2117, 7
        %v2195 = vsel %vm599, %v2194, %v2116
        %v2196 = vrot.slane %v2118, 6
        %v2197 = vsel %vm602, %v2196, %v2195
        %v2198 = vrot.slane %v2119, 5
        %v2199 = vsel %vm605, %v2198, %v2197
        %v2200 = vrot.slane %v2120, 4
        %v2201 = vsel %vm608, %v2200, %v2199
        %v2202 = vrot.slane %v2121, 3
        %v2203 = vsel %vm611, %v2202, %v2201
        %v2204 = vrot.slane %v2122, 2
        %v2205 = vsel %vm614, %v2204, %v2203
        %v2206 = vrot.slane %v2123, 1
        %v2207 = vsel %vm617, %v2206, %v2205
        %v2208 = vrot.slane %v2125, 7
        %v2209 = vsel %vm599, %v2208, %v2124
        %v2210 = vrot.slane %v2126, 6
        %v2211 = vsel %vm602, %v2210, %v2209
        %v2212 = vrot.slane %v2127, 5
        %v2213 = vsel %vm605, %v2212, %v2211
        %v2214 = vrot.slane %v2128, 4
        %v2215 = vsel %vm608, %v2214, %v2213
        %v2216 = vrot.slane %v2129, 3
        %v2217 = vsel %vm611, %v2216, %v2215
        %v2218 = vrot.slane %v2130, 2
        %v2219 = vsel %vm614, %v2218, %v2217
        %v2220 = vrot.slane %v2131, 1
        %v2221 = vsel %vm617, %v2220, %v2219
        %v2222 = vrot.slane %v2133, 7
        %v2223 = vsel %vm599, %v2222, %v2132
        %v2224 = vrot.slane %v2134, 6
        %v2225 = vsel %vm602, %v2224, %v2223
        %v2226 = vrot.slane %v2135, 5
        %v2227 = vsel %vm605, %v2226, %v2225
        %v2228 = vrot.slane %v2136, 4
        %v2229 = vsel %vm608, %v2228, %v2227
        %v2230 = vrot.slane %v2137, 3
        %v2231 = vsel %vm611, %v2230, %v2229
        %v2232 = vrot.slane %v2138, 2
        %v2233 = vsel %vm614, %v2232, %v2231
        %v2234 = vrot.slane %v2139, 1
        %v2235 = vsel %vm617, %v2234, %v2233
        %v2236 = vrot.slane %v2141, 7
        %v2237 = vsel %vm599, %v2236, %v2140
        %v2238 = vrot.slane %v2142, 6
        %v2239 = vsel %vm602, %v2238, %v2237
        %v2240 = vrot.slane %v2143, 5
        %v2241 = vsel %vm605, %v2240, %v2239
        %v2246 = vsel %vm675, %v2241, 0
        %2248 = vmatprep.subr.mxu0 0.0
        %2249 = vmatpush1.msra.mxu0 %v2193
        %2250 = vmatprep.subr.mxu0 0.0
        %2251 = vmatpush1.msra.mxu0 %v2207
        %2252 = vmatprep.subr.mxu0 0.0
        %2253 = vmatpush1.msra.mxu0 %v2221
        %2254 = vmatprep.subr.mxu0 0.0
        %2255 = vmatpush1.msra.mxu0 %v2235
        %2256 = vmatprep.subr.mxu0 0.0
        %2257 = vmatpush1.msra.mxu0 %v2246
        %2258 = vmatprep.subr.mxu0 0.0
        %2259 = vmatpush1.msra.mxu0 0.0
        %2260 = vmatprep.subr.mxu0 0.0
        %2261 = vmatpush1.msra.mxu0 0.0
        %2262 = vmatprep.subr.mxu0 0.0
        %2263 = vmatpush1.msra.mxu0 0.0
        %2264 = vmatprep.subr.mxu0 0.0
        %2265 = vmatpush1.msra.mxu0 0.0
        %2266 = vmatprep.subr.mxu0 0.0
        %2267 = vmatpush1.msra.mxu0 0.0
        %2268 = vmatprep.subr.mxu0 0.0
        %2269 = vmatpush1.msra.mxu0 0.0
        %2270 = vmatprep.subr.mxu0 0.0
        %2271 = vmatpush1.msra.mxu0 0.0
        %2272 = vmatprep.subr.mxu0 0.0
        %2273 = vmatpush1.msra.mxu0 0.0
        %2274 = vmatprep.subr.mxu0 0.0
        %2275 = vmatpush1.msra.mxu0 0.0
        %2276 = vmatprep.subr.mxu0 0.0
        %2277 = vmatpush1.msra.mxu0 0.0
        %2278 = vmatprep.subr.mxu0 0.0
        %2279 = vmatpush1.msra.mxu0 0.0
        %2280 = vmatprep.subr.mxu0 0.0
        %2281 = vmatpush1.msra.mxu0 0.0
        %2282 = vmatprep.subr.mxu0 0.0
        %2283 = vmatpush1.msra.mxu0 0.0
        %2284 = vmatprep.subr.mxu0 0.0
        %2285 = vmatpush1.msra.mxu0 0.0
        %2286 = vmatprep.subr.mxu0 0.0
        %2287 = vmatpush1.msra.mxu0 0.0
        %2288 = vmatprep.subr.mxu0 0.0
        %2289 = vmatpush1.msra.mxu0 0.0
        %2290 = vmatprep.subr.mxu0 0.0
        %2291 = vmatpush1.msra.mxu0 0.0
        %2292 = vmatprep.subr.mxu0 0.0
        %2293 = vmatpush1.msra.mxu0 0.0
        %2294 = vmatprep.subr.mxu0 0.0
        %2295 = vmatpush1.msra.mxu0 0.0
        %2296 = vmatprep.subr.mxu0 0.0
        %2297 = vmatpush1.msra.mxu0 0.0
        %2298 = vmatprep.subr.mxu0 0.0
        %2299 = vmatpush1.msra.mxu0 0.0
        %2300 = vmatprep.subr.mxu0 0.0
        %2301 = vmatpush1.msra.mxu0 0.0
        %2302 = vmatprep.subr.mxu0 0.0
        %2303 = vmatpush1.msra.mxu0 0.0
        %2304 = vmatprep.subr.mxu0 0.0
        %2305 = vmatpush1.msra.mxu0 0.0
        %2306 = vmatprep.subr.mxu0 0.0
        %2307 = vmatpush1.msra.mxu0 0.0
        %2308 = vmatprep.subr.mxu0 0.0
        %2309 = vmatpush1.msra.mxu0 0.0
        %2310 = vmatprep.subr.mxu0 0.0
        %2311 = vmatpush1.msra.mxu0 0.0
        %2312 = vmatprep.mubr.f32.mxu0 0.0
        %2313 = vmatmul.mubr.f32.gmra.mrb[0].mxu0 %v673
        %v2314 = vpop.f32.mrb[0].mxu0
        %v2315 = vadd.f32 0.0, %v2314
        %v2316 = vpop.f32.mrb[0].mxu0
        %2317 = vdwg.mxu0
        %2319 = vrot.lane.b32.xlu0 %v2315, 112
        %v2320 = vpop.permute.xlu0 %2319
        %vm2322 = vcmask 1048448
        %2323 = vst.msk [vmem:[%s164] sm:$0xff] %vm2322, %v2320
        %v2324 = vsel %vm188, %v2315, 0.0
        %2325 = vadd.xlane.f32.xlu0 %v2324
        %v2326 = vpop.xlane.xlu0 %2325
        %v2327 = vadd.f32 %v2102, %v2326
        %v2328 = vmul.f32 %v2315, %v2315
        %v2329 = vsel %vm188, %v2328, 0.0
        %2330 = vadd.xlane.f32.xlu0 %v2329
        %v2331 = vpop.xlane.xlu0 %2330
        %v2332 = vadd.f32 %v2107, %v2331
        %v2333 = vld [vmem:[#allocation2 + $0x8] sm:$0x1]
        %v2334 = vld [vmem:[#allocation2 + $0x18] sm:$0x1]
        %v2335 = vld [vmem:[#allocation2 + $0x28] sm:$0x1]
        %v2336 = vld [vmem:[#allocation2 + $0x38] sm:$0x1]
        %v2337 = vld [vmem:[#allocation2 + $0x48] sm:$0x1]
        %v2338 = vld [vmem:[#allocation2 + $0x58] sm:$0x1]
        %v2339 = vld [vmem:[#allocation2 + $0x68] sm:$0x1]
        %v2340 = vld [vmem:[#allocation2 + $0x78] sm:$0x1]
        %v2341 = vld [vmem:[#allocation2 + $0x88] sm:$0x1]
        %v2342 = vld [vmem:[#allocation2 + $0x98] sm:$0x1]
        %v2343 = vld [vmem:[#allocation2 + $0xa8] sm:$0x1]
        %v2344 = vld [vmem:[#allocation2 + $0xb8] sm:$0x1]
        %v2345 = vld [vmem:[#allocation2 + $0xc8] sm:$0x1]
        %v2346 = vld [vmem:[#allocation2 + $0xd8] sm:$0x1]
        %v2347 = vld [vmem:[#allocation2 + $0xe8] sm:$0x1]
        %v2348 = vld [vmem:[#allocation2 + $0xf8] sm:$0x1]
        %v2349 = vld [vmem:[#allocation2 + $0x108] sm:$0x1]
        %v2350 = vld [vmem:[#allocation2 + $0x118] sm:$0x1]
        %v2351 = vld [vmem:[#allocation2 + $0x128] sm:$0x1]
        %v2352 = vld [vmem:[#allocation2 + $0x138] sm:$0x1]
        %v2353 = vld [vmem:[#allocation2 + $0x148] sm:$0x1]
        %v2354 = vld [vmem:[#allocation2 + $0x158] sm:$0x1]
        %v2355 = vld [vmem:[#allocation2 + $0x168] sm:$0x1]
        %v2356 = vld [vmem:[#allocation2 + $0x178] sm:$0x1]
        %v2357 = vld [vmem:[#allocation2 + $0x188] sm:$0x1]
        %v2358 = vld [vmem:[#allocation2 + $0x198] sm:$0x1]
        %v2359 = vld [vmem:[#allocation2 + $0x1a8] sm:$0x1]
        %v2360 = vld [vmem:[#allocation2 + $0x1b8] sm:$0x1]
        %v2361 = vld [vmem:[#allocation2 + $0x1c8] sm:$0x1]
        %v2362 = vld [vmem:[#allocation2 + $0x1d8] sm:$0x1]
        %v2363 = vld [vmem:[#allocation2 + $0x1e8] sm:$0x1]
        %v2364 = vld [vmem:[#allocation2 + $0x1f8] sm:$0x1]
        %v2365 = vld [vmem:[#allocation2 + $0x208] sm:$0x1]
        %v2366 = vld [vmem:[#allocation2 + $0x218] sm:$0x1]
        %v2367 = vld [vmem:[#allocation2 + $0x228] sm:$0x1]
        %v2368 = vld [vmem:[#allocation2 + $0x238] sm:$0x1]
        %v2405 = vrot.slane %v2334, 7
        %v2406 = vsel %vm599, %v2405, %v2333
        %v2407 = vrot.slane %v2335, 6
        %v2408 = vsel %vm602, %v2407, %v2406
        %v2409 = vrot.slane %v2336, 5
        %v2410 = vsel %vm605, %v2409, %v2408
        %v2411 = vrot.slane %v2337, 4
        %v2412 = vsel %vm608, %v2411, %v2410
        %v2413 = vrot.slane %v2338, 3
        %v2414 = vsel %vm611, %v2413, %v2412
        %v2415 = vrot.slane %v2339, 2
        %v2416 = vsel %vm614, %v2415, %v2414
        %v2417 = vrot.slane %v2340, 1
        %v2418 = vsel %vm617, %v2417, %v2416
        %v2419 = vrot.slane %v2342, 7
        %v2420 = vsel %vm599, %v2419, %v2341
        %v2421 = vrot.slane %v2343, 6
        %v2422 = vsel %vm602, %v2421, %v2420
        %v2423 = vrot.slane %v2344, 5
        %v2424 = vsel %vm605, %v2423, %v2422
        %v2425 = vrot.slane %v2345, 4
        %v2426 = vsel %vm608, %v2425, %v2424
        %v2427 = vrot.slane %v2346, 3
        %v2428 = vsel %vm611, %v2427, %v2426
        %v2429 = vrot.slane %v2347, 2
        %v2430 = vsel %vm614, %v2429, %v2428
        %v2431 = vrot.slane %v2348, 1
        %v2432 = vsel %vm617, %v2431, %v2430
        %v2433 = vrot.slane %v2350, 7
        %v2434 = vsel %vm599, %v2433, %v2349
        %v2435 = vrot.slane %v2351, 6
        %v2436 = vsel %vm602, %v2435, %v2434
        %v2437 = vrot.slane %v2352, 5
        %v2438 = vsel %vm605, %v2437, %v2436
        %v2439 = vrot.slane %v2353, 4
        %v2440 = vsel %vm608, %v2439, %v2438
        %v2441 = vrot.slane %v2354, 3
        %v2442 = vsel %vm611, %v2441, %v2440
        %v2443 = vrot.slane %v2355, 2
        %v2444 = vsel %vm614, %v2443, %v2442
        %v2445 = vrot.slane %v2356, 1
        %v2446 = vsel %vm617, %v2445, %v2444
        %v2447 = vrot.slane %v2358, 7
        %v2448 = vsel %vm599, %v2447, %v2357
        %v2449 = vrot.slane %v2359, 6
        %v2450 = vsel %vm602, %v2449, %v2448
        %v2451 = vrot.slane %v2360, 5
        %v2452 = vsel %vm605, %v2451, %v2450
        %v2453 = vrot.slane %v2361, 4
        %v2454 = vsel %vm608, %v2453, %v2452
        %v2455 = vrot.slane %v2362, 3
        %v2456 = vsel %vm611, %v2455, %v2454
        %v2457 = vrot.slane %v2363, 2
        %v2458 = vsel %vm614, %v2457, %v2456
        %v2459 = vrot.slane %v2364, 1
        %v2460 = vsel %vm617, %v2459, %v2458
        %v2461 = vrot.slane %v2366, 7
        %v2462 = vsel %vm599, %v2461, %v2365
        %v2463 = vrot.slane %v2367, 6
        %v2464 = vsel %vm602, %v2463, %v2462
        %v2465 = vrot.slane %v2368, 5
        %v2466 = vsel %vm605, %v2465, %v2464
        %v2471 = vsel %vm675, %v2466, 0
        %2473 = vmatprep.subr.mxu0 0.0
        %2474 = vmatpush1.msra.mxu0 %v2418
        %2475 = vmatprep.subr.mxu0 0.0
        %2476 = vmatpush1.msra.mxu0 %v2432
        %2477 = vmatprep.subr.mxu0 0.0
        %2478 = vmatpush1.msra.mxu0 %v2446
        %2479 = vmatprep.subr.mxu0 0.0
        %2480 = vmatpush1.msra.mxu0 %v2460
        %2481 = vmatprep.subr.mxu0 0.0
        %2482 = vmatpush1.msra.mxu0 %v2471
        %2483 = vmatprep.subr.mxu0 0.0
        %2484 = vmatpush1.msra.mxu0 0.0
        %2485 = vmatprep.subr.mxu0 0.0
        %2486 = vmatpush1.msra.mxu0 0.0
        %2487 = vmatprep.subr.mxu0 0.0
        %2488 = vmatpush1.msra.mxu0 0.0
        %2489 = vmatprep.subr.mxu0 0.0
        %2490 = vmatpush1.msra.mxu0 0.0
        %2491 = vmatprep.subr.mxu0 0.0
        %2492 = vmatpush1.msra.mxu0 0.0
        %2493 = vmatprep.subr.mxu0 0.0
        %2494 = vmatpush1.msra.mxu0 0.0
        %2495 = vmatprep.subr.mxu0 0.0
        %2496 = vmatpush1.msra.mxu0 0.0
        %2497 = vmatprep.subr.mxu0 0.0
        %2498 = vmatpush1.msra.mxu0 0.0
        %2499 = vmatprep.subr.mxu0 0.0
        %2500 = vmatpush1.msra.mxu0 0.0
        %2501 = vmatprep.subr.mxu0 0.0
        %2502 = vmatpush1.msra.mxu0 0.0
        %2503 = vmatprep.subr.mxu0 0.0
        %2504 = vmatpush1.msra.mxu0 0.0
        %2505 = vmatprep.subr.mxu0 0.0
        %2506 = vmatpush1.msra.mxu0 0.0
        %2507 = vmatprep.subr.mxu0 0.0
        %2508 = vmatpush1.msra.mxu0 0.0
        %2509 = vmatprep.subr.mxu0 0.0
        %2510 = vmatpush1.msra.mxu0 0.0
        %2511 = vmatprep.subr.mxu0 0.0
        %2512 = vmatpush1.msra.mxu0 0.0
        %2513 = vmatprep.subr.mxu0 0.0
        %2514 = vmatpush1.msra.mxu0 0.0
        %2515 = vmatprep.subr.mxu0 0.0
        %2516 = vmatpush1.msra.mxu0 0.0
        %2517 = vmatprep.subr.mxu0 0.0
        %2518 = vmatpush1.msra.mxu0 0.0
        %2519 = vmatprep.subr.mxu0 0.0
        %2520 = vmatpush1.msra.mxu0 0.0
        %2521 = vmatprep.subr.mxu0 0.0
        %2522 = vmatpush1.msra.mxu0 0.0
        %2523 = vmatprep.subr.mxu0 0.0
        %2524 = vmatpush1.msra.mxu0 0.0
        %2525 = vmatprep.subr.mxu0 0.0
        %2526 = vmatpush1.msra.mxu0 0.0
        %2527 = vmatprep.subr.mxu0 0.0
        %2528 = vmatpush1.msra.mxu0 0.0
        %2529 = vmatprep.subr.mxu0 0.0
        %2530 = vmatpush1.msra.mxu0 0.0
        %2531 = vmatprep.subr.mxu0 0.0
        %2532 = vmatpush1.msra.mxu0 0.0
        %2533 = vmatprep.subr.mxu0 0.0
        %2534 = vmatpush1.msra.mxu0 0.0
        %2535 = vmatprep.subr.mxu0 0.0
        %2536 = vmatpush1.msra.mxu0 0.0
        %2537 = vmatprep.mubr.f32.mxu0 0.0
        %2538 = vmatmul.mubr.f32.gmra.mrb[0].mxu0 %v673
        %v2539 = vpop.f32.mrb[0].mxu0
        %v2540 = vadd.f32 0.0, %v2539
        %v2541 = vpop.f32.mrb[0].mxu0
        %2542 = vdwg.mxu0
        %2543 = vst.msk [vmem:[%s164 + $0x8] sm:$0xff] %vm188, %v2540
        %v2544 = vsel %vm188, %v2540, 0.0
        %2545 = vadd.xlane.f32.xlu0 %v2544
        %v2546 = vpop.xlane.xlu0 %2545
        %v2547 = vadd.f32 %v2327, %v2546
        %v2548 = vmul.f32 %v2540, %v2540
        %v2549 = vsel %vm188, %v2548, 0.0
        %2550 = vadd.xlane.f32.xlu0 %v2549
        %v2551 = vpop.xlane.xlu0 %2550
        %v2552 = vadd.f32 %v2332, %v2551
        %v2553 = vld [vmem:[#allocation2 + $0x9] sm:$0x1]
        %v2554 = vld [vmem:[#allocation2 + $0x19] sm:$0x1]
        %v2555 = vld [vmem:[#allocation2 + $0x29] sm:$0x1]
        %v2556 = vld [vmem:[#allocation2 + $0x39] sm:$0x1]
        %v2557 = vld [vmem:[#allocation2 + $0x49] sm:$0x1]
        %v2558 = vld [vmem:[#allocation2 + $0x59] sm:$0x1]
        %v2559 = vld [vmem:[#allocation2 + $0x69] sm:$0x1]
        %v2560 = vld [vmem:[#allocation2 + $0x79] sm:$0x1]
        %v2561 = vld [vmem:[#allocation2 + $0x89] sm:$0x1]
        %v2562 = vld [vmem:[#allocation2 + $0x99] sm:$0x1]
        %v2563 = vld [vmem:[#allocation2 + $0xa9] sm:$0x1]
        %v2564 = vld [vmem:[#allocation2 + $0xb9] sm:$0x1]
        %v2565 = vld [vmem:[#allocation2 + $0xc9] sm:$0x1]
        %v2566 = vld [vmem:[#allocation2 + $0xd9] sm:$0x1]
        %v2567 = vld [vmem:[#allocation2 + $0xe9] sm:$0x1]
        %v2568 = vld [vmem:[#allocation2 + $0xf9] sm:$0x1]
        %v2569 = vld [vmem:[#allocation2 + $0x109] sm:$0x1]
        %v2570 = vld [vmem:[#allocation2 + $0x119] sm:$0x1]
        %v2571 = vld [vmem:[#allocation2 + $0x129] sm:$0x1]
        %v2572 = vld [vmem:[#allocation2 + $0x139] sm:$0x1]
        %v2573 = vld [vmem:[#allocation2 + $0x149] sm:$0x1]
        %v2574 = vld [vmem:[#allocation2 + $0x159] sm:$0x1]
        %v2575 = vld [vmem:[#allocation2 + $0x169] sm:$0x1]
        %v2576 = vld [vmem:[#allocation2 + $0x179] sm:$0x1]
        %v2577 = vld [vmem:[#allocation2 + $0x189] sm:$0x1]
        %v2578 = vld [vmem:[#allocation2 + $0x199] sm:$0x1]
        %v2579 = vld [vmem:[#allocation2 + $0x1a9] sm:$0x1]
        %v2580 = vld [vmem:[#allocation2 + $0x1b9] sm:$0x1]
        %v2581 = vld [vmem:[#allocation2 + $0x1c9] sm:$0x1]
        %v2582 = vld [vmem:[#allocation2 + $0x1d9] sm:$0x1]
        %v2583 = vld [vmem:[#allocation2 + $0x1e9] sm:$0x1]
        %v2584 = vld [vmem:[#allocation2 + $0x1f9] sm:$0x1]
        %v2585 = vld [vmem:[#allocation2 + $0x209] sm:$0x1]
        %v2586 = vld [vmem:[#allocation2 + $0x219] sm:$0x1]
        %v2587 = vld [vmem:[#allocation2 + $0x229] sm:$0x1]
        %v2588 = vld [vmem:[#allocation2 + $0x239] sm:$0x1]
        %v2625 = vrot.slane %v2554, 7
        %v2626 = vsel %vm599, %v2625, %v2553
        %v2627 = vrot.slane %v2555, 6
        %v2628 = vsel %vm602, %v2627, %v2626
        %v2629 = vrot.slane %v2556, 5
        %v2630 = vsel %vm605, %v2629, %v2628
        %v2631 = vrot.slane %v2557, 4
        %v2632 = vsel %vm608, %v2631, %v2630
        %v2633 = vrot.slane %v2558, 3
        %v2634 = vsel %vm611, %v2633, %v2632
        %v2635 = vrot.slane %v2559, 2
        %v2636 = vsel %vm614, %v2635, %v2634
        %v2637 = vrot.slane %v2560, 1
        %v2638 = vsel %vm617, %v2637, %v2636
        %v2639 = vrot.slane %v2562, 7
        %v2640 = vsel %vm599, %v2639, %v2561
        %v2641 = vrot.slane %v2563, 6
        %v2642 = vsel %vm602, %v2641, %v2640
        %v2643 = vrot.slane %v2564, 5
        %v2644 = vsel %vm605, %v2643, %v2642
        %v2645 = vrot.slane %v2565, 4
        %v2646 = vsel %vm608, %v2645, %v2644
        %v2647 = vrot.slane %v2566, 3
        %v2648 = vsel %vm611, %v2647, %v2646
        %v2649 = vrot.slane %v2567, 2
        %v2650 = vsel %vm614, %v2649, %v2648
        %v2651 = vrot.slane %v2568, 1
        %v2652 = vsel %vm617, %v2651, %v2650
        %v2653 = vrot.slane %v2570, 7
        %v2654 = vsel %vm599, %v2653, %v2569
        %v2655 = vrot.slane %v2571, 6
        %v2656 = vsel %vm602, %v2655, %v2654
        %v2657 = vrot.slane %v2572, 5
        %v2658 = vsel %vm605, %v2657, %v2656
        %v2659 = vrot.slane %v2573, 4
        %v2660 = vsel %vm608, %v2659, %v2658
        %v2661 = vrot.slane %v2574, 3
        %v2662 = vsel %vm611, %v2661, %v2660
        %v2663 = vrot.slane %v2575, 2
        %v2664 = vsel %vm614, %v2663, %v2662
        %v2665 = vrot.slane %v2576, 1
        %v2666 = vsel %vm617, %v2665, %v2664
        %v2667 = vrot.slane %v2578, 7
        %v2668 = vsel %vm599, %v2667, %v2577
        %v2669 = vrot.slane %v2579, 6
        %v2670 = vsel %vm602, %v2669, %v2668
        %v2671 = vrot.slane %v2580, 5
        %v2672 = vsel %vm605, %v2671, %v2670
        %v2673 = vrot.slane %v2581, 4
        %v2674 = vsel %vm608, %v2673, %v2672
        %v2675 = vrot.slane %v2582, 3
        %v2676 = vsel %vm611, %v2675, %v2674
        %v2677 = vrot.slane %v2583, 2
        %v2678 = vsel %vm614, %v2677, %v2676
        %v2679 = vrot.slane %v2584, 1
        %v2680 = vsel %vm617, %v2679, %v2678
        %v2681 = vrot.slane %v2586, 7
        %v2682 = vsel %vm599, %v2681, %v2585
        %v2683 = vrot.slane %v2587, 6
        %v2684 = vsel %vm602, %v2683, %v2682
        %v2685 = vrot.slane %v2588, 5
        %v2686 = vsel %vm605, %v2685, %v2684
        %v2691 = vsel %vm675, %v2686, 0
        %2693 = vmatprep.subr.mxu0 0.0
        %2694 = vmatpush1.msra.mxu0 %v2638
        %2695 = vmatprep.subr.mxu0 0.0
        %2696 = vmatpush1.msra.mxu0 %v2652
        %2697 = vmatprep.subr.mxu0 0.0
        %2698 = vmatpush1.msra.mxu0 %v2666
        %2699 = vmatprep.subr.mxu0 0.0
        %2700 = vmatpush1.msra.mxu0 %v2680
        %2701 = vmatprep.subr.mxu0 0.0
        %2702 = vmatpush1.msra.mxu0 %v2691
        %2703 = vmatprep.subr.mxu0 0.0
        %2704 = vmatpush1.msra.mxu0 0.0
        %2705 = vmatprep.subr.mxu0 0.0
        %2706 = vmatpush1.msra.mxu0 0.0
        %2707 = vmatprep.subr.mxu0 0.0
        %2708 = vmatpush1.msra.mxu0 0.0
        %2709 = vmatprep.subr.mxu0 0.0
        %2710 = vmatpush1.msra.mxu0 0.0
        %2711 = vmatprep.subr.mxu0 0.0
        %2712 = vmatpush1.msra.mxu0 0.0
        %2713 = vmatprep.subr.mxu0 0.0
        %2714 = vmatpush1.msra.mxu0 0.0
        %2715 = vmatprep.subr.mxu0 0.0
        %2716 = vmatpush1.msra.mxu0 0.0
        %2717 = vmatprep.subr.mxu0 0.0
        %2718 = vmatpush1.msra.mxu0 0.0
        %2719 = vmatprep.subr.mxu0 0.0
        %2720 = vmatpush1.msra.mxu0 0.0
        %2721 = vmatprep.subr.mxu0 0.0
        %2722 = vmatpush1.msra.mxu0 0.0
        %2723 = vmatprep.subr.mxu0 0.0
        %2724 = vmatpush1.msra.mxu0 0.0
        %2725 = vmatprep.subr.mxu0 0.0
        %2726 = vmatpush1.msra.mxu0 0.0
        %2727 = vmatprep.subr.mxu0 0.0
        %2728 = vmatpush1.msra.mxu0 0.0
        %2729 = vmatprep.subr.mxu0 0.0
        %2730 = vmatpush1.msra.mxu0 0.0
        %2731 = vmatprep.subr.mxu0 0.0
        %2732 = vmatpush1.msra.mxu0 0.0
        %2733 = vmatprep.subr.mxu0 0.0
        %2734 = vmatpush1.msra.mxu0 0.0
        %2735 = vmatprep.subr.mxu0 0.0
        %2736 = vmatpush1.msra.mxu0 0.0
        %2737 = vmatprep.subr.mxu0 0.0
        %2738 = vmatpush1.msra.mxu0 0.0
        %2739 = vmatprep.subr.mxu0 0.0
        %2740 = vmatpush1.msra.mxu0 0.0
        %2741 = vmatprep.subr.mxu0 0.0
        %2742 = vmatpush1.msra.mxu0 0.0
        %2743 = vmatprep.subr.mxu0 0.0
        %2744 = vmatpush1.msra.mxu0 0.0
        %2745 = vmatprep.subr.mxu0 0.0
        %2746 = vmatpush1.msra.mxu0 0.0
        %2747 = vmatprep.subr.mxu0 0.0
        %2748 = vmatpush1.msra.mxu0 0.0
        %2749 = vmatprep.subr.mxu0 0.0
        %2750 = vmatpush1.msra.mxu0 0.0
        %2751 = vmatprep.subr.mxu0 0.0
        %2752 = vmatpush1.msra.mxu0 0.0
        %2753 = vmatprep.subr.mxu0 0.0
        %2754 = vmatpush1.msra.mxu0 0.0
        %2755 = vmatprep.subr.mxu0 0.0
        %2756 = vmatpush1.msra.mxu0 0.0
        %2757 = vmatprep.mubr.f32.mxu0 0.0
        %2758 = vmatmul.mubr.f32.gmra.mrb[0].mxu0 %v673
        %v2759 = vpop.f32.mrb[0].mxu0
        %v2760 = vadd.f32 0.0, %v2759
        %v2761 = vpop.f32.mrb[0].mxu0
        %2762 = vdwg.mxu0
        %2764 = vrot.lane.b32.xlu0 %v2760, 16
        %v2765 = vpop.permute.xlu0 %2764
        %2767 = vst.msk [vmem:[%s164 + $0x8] sm:$0xff] %vm972, %v2765
        %v2768 = vsel %vm188, %v2760, 0.0
        %2769 = vadd.xlane.f32.xlu0 %v2768
        %v2770 = vpop.xlane.xlu0 %2769
        %v2771 = vadd.f32 %v2547, %v2770
        %v2772 = vmul.f32 %v2760, %v2760
        %v2773 = vsel %vm188, %v2772, 0.0
        %2774 = vadd.xlane.f32.xlu0 %v2773
        %v2775 = vpop.xlane.xlu0 %2774
        %v2776 = vadd.f32 %v2552, %v2775
        %v2777 = vld [vmem:[#allocation2 + $0xa] sm:$0x1]
        %v2778 = vld [vmem:[#allocation2 + $0x1a] sm:$0x1]
        %v2779 = vld [vmem:[#allocation2 + $0x2a] sm:$0x1]
        %v2780 = vld [vmem:[#allocation2 + $0x3a] sm:$0x1]
        %v2781 = vld [vmem:[#allocation2 + $0x4a] sm:$0x1]
        %v2782 = vld [vmem:[#allocation2 + $0x5a] sm:$0x1]
        %v2783 = vld [vmem:[#allocation2 + $0x6a] sm:$0x1]
        %v2784 = vld [vmem:[#allocation2 + $0x7a] sm:$0x1]
        %v2785 = vld [vmem:[#allocation2 + $0x8a] sm:$0x1]
        %v2786 = vld [vmem:[#allocation2 + $0x9a] sm:$0x1]
        %v2787 = vld [vmem:[#allocation2 + $0xaa] sm:$0x1]
        %v2788 = vld [vmem:[#allocation2 + $0xba] sm:$0x1]
        %v2789 = vld [vmem:[#allocation2 + $0xca] sm:$0x1]
        %v2790 = vld [vmem:[#allocation2 + $0xda] sm:$0x1]
        %v2791 = vld [vmem:[#allocation2 + $0xea] sm:$0x1]
        %v2792 = vld [vmem:[#allocation2 + $0xfa] sm:$0x1]
        %v2793 = vld [vmem:[#allocation2 + $0x10a] sm:$0x1]
        %v2794 = vld [vmem:[#allocation2 + $0x11a] sm:$0x1]
        %v2795 = vld [vmem:[#allocation2 + $0x12a] sm:$0x1]
        %v2796 = vld [vmem:[#allocation2 + $0x13a] sm:$0x1]
        %v2797 = vld [vmem:[#allocation2 + $0x14a] sm:$0x1]
        %v2798 = vld [vmem:[#allocation2 + $0x15a] sm:$0x1]
        %v2799 = vld [vmem:[#allocation2 + $0x16a] sm:$0x1]
        %v2800 = vld [vmem:[#allocation2 + $0x17a] sm:$0x1]
        %v2801 = vld [vmem:[#allocation2 + $0x18a] sm:$0x1]
        %v2802 = vld [vmem:[#allocation2 + $0x19a] sm:$0x1]
        %v2803 = vld [vmem:[#allocation2 + $0x1aa] sm:$0x1]
        %v2804 = vld [vmem:[#allocation2 + $0x1ba] sm:$0x1]
        %v2805 = vld [vmem:[#allocation2 + $0x1ca] sm:$0x1]
        %v2806 = vld [vmem:[#allocation2 + $0x1da] sm:$0x1]
        %v2807 = vld [vmem:[#allocation2 + $0x1ea] sm:$0x1]
        %v2808 = vld [vmem:[#allocation2 + $0x1fa] sm:$0x1]
        %v2809 = vld [vmem:[#allocation2 + $0x20a] sm:$0x1]
        %v2810 = vld [vmem:[#allocation2 + $0x21a] sm:$0x1]
        %v2811 = vld [vmem:[#allocation2 + $0x22a] sm:$0x1]
        %v2812 = vld [vmem:[#allocation2 + $0x23a] sm:$0x1]
        %v2849 = vrot.slane %v2778, 7
        %v2850 = vsel %vm599, %v2849, %v2777
        %v2851 = vrot.slane %v2779, 6
        %v2852 = vsel %vm602, %v2851, %v2850
        %v2853 = vrot.slane %v2780, 5
        %v2854 = vsel %vm605, %v2853, %v2852
        %v2855 = vrot.slane %v2781, 4
        %v2856 = vsel %vm608, %v2855, %v2854
        %v2857 = vrot.slane %v2782, 3
        %v2858 = vsel %vm611, %v2857, %v2856
        %v2859 = vrot.slane %v2783, 2
        %v2860 = vsel %vm614, %v2859, %v2858
        %v2861 = vrot.slane %v2784, 1
        %v2862 = vsel %vm617, %v2861, %v2860
        %v2863 = vrot.slane %v2786, 7
        %v2864 = vsel %vm599, %v2863, %v2785
        %v2865 = vrot.slane %v2787, 6
        %v2866 = vsel %vm602, %v2865, %v2864
        %v2867 = vrot.slane %v2788, 5
        %v2868 = vsel %vm605, %v2867, %v2866
        %v2869 = vrot.slane %v2789, 4
        %v2870 = vsel %vm608, %v2869, %v2868
        %v2871 = vrot.slane %v2790, 3
        %v2872 = vsel %vm611, %v2871, %v2870
        %v2873 = vrot.slane %v2791, 2
        %v2874 = vsel %vm614, %v2873, %v2872
        %v2875 = vrot.slane %v2792, 1
        %v2876 = vsel %vm617, %v2875, %v2874
        %v2877 = vrot.slane %v2794, 7
        %v2878 = vsel %vm599, %v2877, %v2793
        %v2879 = vrot.slane %v2795, 6
        %v2880 = vsel %vm602, %v2879, %v2878
        %v2881 = vrot.slane %v2796, 5
        %v2882 = vsel %vm605, %v2881, %v2880
        %v2883 = vrot.slane %v2797, 4
        %v2884 = vsel %vm608, %v2883, %v2882
        %v2885 = vrot.slane %v2798, 3
        %v2886 = vsel %vm611, %v2885, %v2884
        %v2887 = vrot.slane %v2799, 2
        %v2888 = vsel %vm614, %v2887, %v2886
        %v2889 = vrot.slane %v2800, 1
        %v2890 = vsel %vm617, %v2889, %v2888
        %v2891 = vrot.slane %v2802, 7
        %v2892 = vsel %vm599, %v2891, %v2801
        %v2893 = vrot.slane %v2803, 6
        %v2894 = vsel %vm602, %v2893, %v2892
        %v2895 = vrot.slane %v2804, 5
        %v2896 = vsel %vm605, %v2895, %v2894
        %v2897 = vrot.slane %v2805, 4
        %v2898 = vsel %vm608, %v2897, %v2896
        %v2899 = vrot.slane %v2806, 3
        %v2900 = vsel %vm611, %v2899, %v2898
        %v2901 = vrot.slane %v2807, 2
        %v2902 = vsel %vm614, %v2901, %v2900
        %v2903 = vrot.slane %v2808, 1
        %v2904 = vsel %vm617, %v2903, %v2902
        %v2905 = vrot.slane %v2810, 7
        %v2906 = vsel %vm599, %v2905, %v2809
        %v2907 = vrot.slane %v2811, 6
        %v2908 = vsel %vm602, %v2907, %v2906
        %v2909 = vrot.slane %v2812, 5
        %v2910 = vsel %vm605, %v2909, %v2908
        %v2915 = vsel %vm675, %v2910, 0
        %2917 = vmatprep.subr.mxu0 0.0
        %2918 = vmatpush1.msra.mxu0 %v2862
        %2919 = vmatprep.subr.mxu0 0.0
        %2920 = vmatpush1.msra.mxu0 %v2876
        %2921 = vmatprep.subr.mxu0 0.0
        %2922 = vmatpush1.msra.mxu0 %v2890
        %2923 = vmatprep.subr.mxu0 0.0
        %2924 = vmatpush1.msra.mxu0 %v2904
        %2925 = vmatprep.subr.mxu0 0.0
        %2926 = vmatpush1.msra.mxu0 %v2915
        %2927 = vmatprep.subr.mxu0 0.0
        %2928 = vmatpush1.msra.mxu0 0.0
        %2929 = vmatprep.subr.mxu0 0.0
        %2930 = vmatpush1.msra.mxu0 0.0
        %2931 = vmatprep.subr.mxu0 0.0
        %2932 = vmatpush1.msra.mxu0 0.0
        %2933 = vmatprep.subr.mxu0 0.0
        %2934 = vmatpush1.msra.mxu0 0.0
        %2935 = vmatprep.subr.mxu0 0.0
        %2936 = vmatpush1.msra.mxu0 0.0
        %2937 = vmatprep.subr.mxu0 0.0
        %2938 = vmatpush1.msra.mxu0 0.0
        %2939 = vmatprep.subr.mxu0 0.0
        %2940 = vmatpush1.msra.mxu0 0.0
        %2941 = vmatprep.subr.mxu0 0.0
        %2942 = vmatpush1.msra.mxu0 0.0
        %2943 = vmatprep.subr.mxu0 0.0
        %2944 = vmatpush1.msra.mxu0 0.0
        %2945 = vmatprep.subr.mxu0 0.0
        %2946 = vmatpush1.msra.mxu0 0.0
        %2947 = vmatprep.subr.mxu0 0.0
        %2948 = vmatpush1.msra.mxu0 0.0
        %2949 = vmatprep.subr.mxu0 0.0
        %2950 = vmatpush1.msra.mxu0 0.0
        %2951 = vmatprep.subr.mxu0 0.0
        %2952 = vmatpush1.msra.mxu0 0.0
        %2953 = vmatprep.subr.mxu0 0.0
        %2954 = vmatpush1.msra.mxu0 0.0
        %2955 = vmatprep.subr.mxu0 0.0
        %2956 = vmatpush1.msra.mxu0 0.0
        %2957 = vmatprep.subr.mxu0 0.0
        %2958 = vmatpush1.msra.mxu0 0.0
        %2959 = vmatprep.subr.mxu0 0.0
        %2960 = vmatpush1.msra.mxu0 0.0
        %2961 = vmatprep.subr.mxu0 0.0
        %2962 = vmatpush1.msra.mxu0 0.0
        %2963 = vmatprep.subr.mxu0 0.0
        %2964 = vmatpush1.msra.mxu0 0.0
        %2965 = vmatprep.subr.mxu0 0.0
        %2966 = vmatpush1.msra.mxu0 0.0
        %2967 = vmatprep.subr.mxu0 0.0
        %2968 = vmatpush1.msra.mxu0 0.0
        %2969 = vmatprep.subr.mxu0 0.0
        %2970 = vmatpush1.msra.mxu0 0.0
        %2971 = vmatprep.subr.mxu0 0.0
        %2972 = vmatpush1.msra.mxu0 0.0
        %2973 = vmatprep.subr.mxu0 0.0
        %2974 = vmatpush1.msra.mxu0 0.0
        %2975 = vmatprep.subr.mxu0 0.0
        %2976 = vmatpush1.msra.mxu0 0.0
        %2977 = vmatprep.subr.mxu0 0.0
        %2978 = vmatpush1.msra.mxu0 0.0
        %2979 = vmatprep.subr.mxu0 0.0
        %2980 = vmatpush1.msra.mxu0 0.0
        %2981 = vmatprep.mubr.f32.mxu0 0.0
        %2982 = vmatmul.mubr.f32.gmra.mrb[0].mxu0 %v673
        %v2983 = vpop.f32.mrb[0].mxu0
        %v2984 = vadd.f32 0.0, %v2983
        %v2985 = vpop.f32.mrb[0].mxu0
        %2986 = vdwg.mxu0
        %2988 = vrot.lane.b32.xlu0 %v2984, 32
        %v2989 = vpop.permute.xlu0 %2988
        %2991 = vst.msk [vmem:[%s164 + $0x8] sm:$0xff] %vm1197, %v2989
        %v2992 = vsel %vm188, %v2984, 0.0
        %2993 = vadd.xlane.f32.xlu0 %v2992
        %v2994 = vpop.xlane.xlu0 %2993
        %v2995 = vadd.f32 %v2771, %v2994
        %v2996 = vmul.f32 %v2984, %v2984
        %v2997 = vsel %vm188, %v2996, 0.0
        %2998 = vadd.xlane.f32.xlu0 %v2997
        %v2999 = vpop.xlane.xlu0 %2998
        %v3000 = vadd.f32 %v2776, %v2999
        %v3001 = vld [vmem:[#allocation2 + $0xb] sm:$0x1]
        %v3002 = vld [vmem:[#allocation2 + $0x1b] sm:$0x1]
        %v3003 = vld [vmem:[#allocation2 + $0x2b] sm:$0x1]
        %v3004 = vld [vmem:[#allocation2 + $0x3b] sm:$0x1]
        %v3005 = vld [vmem:[#allocation2 + $0x4b] sm:$0x1]
        %v3006 = vld [vmem:[#allocation2 + $0x5b] sm:$0x1]
        %v3007 = vld [vmem:[#allocation2 + $0x6b] sm:$0x1]
        %v3008 = vld [vmem:[#allocation2 + $0x7b] sm:$0x1]
        %v3009 = vld [vmem:[#allocation2 + $0x8b] sm:$0x1]
        %v3010 = vld [vmem:[#allocation2 + $0x9b] sm:$0x1]
        %v3011 = vld [vmem:[#allocation2 + $0xab] sm:$0x1]
        %v3012 = vld [vmem:[#allocation2 + $0xbb] sm:$0x1]
        %v3013 = vld [vmem:[#allocation2 + $0xcb] sm:$0x1]
        %v3014 = vld [vmem:[#allocation2 + $0xdb] sm:$0x1]
        %v3015 = vld [vmem:[#allocation2 + $0xeb] sm:$0x1]
        %v3016 = vld [vmem:[#allocation2 + $0xfb] sm:$0x1]
        %v3017 = vld [vmem:[#allocation2 + $0x10b] sm:$0x1]
        %v3018 = vld [vmem:[#allocation2 + $0x11b] sm:$0x1]
        %v3019 = vld [vmem:[#allocation2 + $0x12b] sm:$0x1]
        %v3020 = vld [vmem:[#allocation2 + $0x13b] sm:$0x1]
        %v3021 = vld [vmem:[#allocation2 + $0x14b] sm:$0x1]
        %v3022 = vld [vmem:[#allocation2 + $0x15b] sm:$0x1]
        %v3023 = vld [vmem:[#allocation2 + $0x16b] sm:$0x1]
        %v3024 = vld [vmem:[#allocation2 + $0x17b] sm:$0x1]
        %v3025 = vld [vmem:[#allocation2 + $0x18b] sm:$0x1]
        %v3026 = vld [vmem:[#allocation2 + $0x19b] sm:$0x1]
        %v3027 = vld [vmem:[#allocation2 + $0x1ab] sm:$0x1]
        %v3028 = vld [vmem:[#allocation2 + $0x1bb] sm:$0x1]
        %v3029 = vld [vmem:[#allocation2 + $0x1cb] sm:$0x1]
        %v3030 = vld [vmem:[#allocation2 + $0x1db] sm:$0x1]
        %v3031 = vld [vmem:[#allocation2 + $0x1eb] sm:$0x1]
        %v3032 = vld [vmem:[#allocation2 + $0x1fb] sm:$0x1]
        %v3033 = vld [vmem:[#allocation2 + $0x20b] sm:$0x1]
        %v3034 = vld [vmem:[#allocation2 + $0x21b] sm:$0x1]
        %v3035 = vld [vmem:[#allocation2 + $0x22b] sm:$0x1]
        %v3036 = vld [vmem:[#allocation2 + $0x23b] sm:$0x1]
        %v3073 = vrot.slane %v3002, 7
        %v3074 = vsel %vm599, %v3073, %v3001
        %v3075 = vrot.slane %v3003, 6
        %v3076 = vsel %vm602, %v3075, %v3074
        %v3077 = vrot.slane %v3004, 5
        %v3078 = vsel %vm605, %v3077, %v3076
        %v3079 = vrot.slane %v3005, 4
        %v3080 = vsel %vm608, %v3079, %v3078
        %v3081 = vrot.slane %v3006, 3
        %v3082 = vsel %vm611, %v3081, %v3080
        %v3083 = vrot.slane %v3007, 2
        %v3084 = vsel %vm614, %v3083, %v3082
        %v3085 = vrot.slane %v3008, 1
        %v3086 = vsel %vm617, %v3085, %v3084
        %v3087 = vrot.slane %v3010, 7
        %v3088 = vsel %vm599, %v3087, %v3009
        %v3089 = vrot.slane %v3011, 6
        %v3090 = vsel %vm602, %v3089, %v3088
        %v3091 = vrot.slane %v3012, 5
        %v3092 = vsel %vm605, %v3091, %v3090
        %v3093 = vrot.slane %v3013, 4
        %v3094 = vsel %vm608, %v3093, %v3092
        %v3095 = vrot.slane %v3014, 3
        %v3096 = vsel %vm611, %v3095, %v3094
        %v3097 = vrot.slane %v3015, 2
        %v3098 = vsel %vm614, %v3097, %v3096
        %v3099 = vrot.slane %v3016, 1
        %v3100 = vsel %vm617, %v3099, %v3098
        %v3101 = vrot.slane %v3018, 7
        %v3102 = vsel %vm599, %v3101, %v3017
        %v3103 = vrot.slane %v3019, 6
        %v3104 = vsel %vm602, %v3103, %v3102
        %v3105 = vrot.slane %v3020, 5
        %v3106 = vsel %vm605, %v3105, %v3104
        %v3107 = vrot.slane %v3021, 4
        %v3108 = vsel %vm608, %v3107, %v3106
        %v3109 = vrot.slane %v3022, 3
        %v3110 = vsel %vm611, %v3109, %v3108
        %v3111 = vrot.slane %v3023, 2
        %v3112 = vsel %vm614, %v3111, %v3110
        %v3113 = vrot.slane %v3024, 1
        %v3114 = vsel %vm617, %v3113, %v3112
        %v3115 = vrot.slane %v3026, 7
        %v3116 = vsel %vm599, %v3115, %v3025
        %v3117 = vrot.slane %v3027, 6
        %v3118 = vsel %vm602, %v3117, %v3116
        %v3119 = vrot.slane %v3028, 5
        %v3120 = vsel %vm605, %v3119, %v3118
        %v3121 = vrot.slane %v3029, 4
        %v3122 = vsel %vm608, %v3121, %v3120
        %v3123 = vrot.slane %v3030, 3
        %v3124 = vsel %vm611, %v3123, %v3122
        %v3125 = vrot.slane %v3031, 2
        %v3126 = vsel %vm614, %v3125, %v3124
        %v3127 = vrot.slane %v3032, 1
        %v3128 = vsel %vm617, %v3127, %v3126
        %v3129 = vrot.slane %v3034, 7
        %v3130 = vsel %vm599, %v3129, %v3033
        %v3131 = vrot.slane %v3035, 6
        %v3132 = vsel %vm602, %v3131, %v3130
        %v3133 = vrot.slane %v3036, 5
        %v3134 = vsel %vm605, %v3133, %v3132
        %v3139 = vsel %vm675, %v3134, 0
        %3141 = vmatprep.subr.mxu0 0.0
        %3142 = vmatpush1.msra.mxu0 %v3086
        %3143 = vmatprep.subr.mxu0 0.0
        %3144 = vmatpush1.msra.mxu0 %v3100
        %3145 = vmatprep.subr.mxu0 0.0
        %3146 = vmatpush1.msra.mxu0 %v3114
        %3147 = vmatprep.subr.mxu0 0.0
        %3148 = vmatpush1.msra.mxu0 %v3128
        %3149 = vmatprep.subr.mxu0 0.0
        %3150 = vmatpush1.msra.mxu0 %v3139
        %3151 = vmatprep.subr.mxu0 0.0
        %3152 = vmatpush1.msra.mxu0 0.0
        %3153 = vmatprep.subr.mxu0 0.0
        %3154 = vmatpush1.msra.mxu0 0.0
        %3155 = vmatprep.subr.mxu0 0.0
        %3156 = vmatpush1.msra.mxu0 0.0
        %3157 = vmatprep.subr.mxu0 0.0
        %3158 = vmatpush1.msra.mxu0 0.0
        %3159 = vmatprep.subr.mxu0 0.0
        %3160 = vmatpush1.msra.mxu0 0.0
        %3161 = vmatprep.subr.mxu0 0.0
        %3162 = vmatpush1.msra.mxu0 0.0
        %3163 = vmatprep.subr.mxu0 0.0
        %3164 = vmatpush1.msra.mxu0 0.0
        %3165 = vmatprep.subr.mxu0 0.0
        %3166 = vmatpush1.msra.mxu0 0.0
        %3167 = vmatprep.subr.mxu0 0.0
        %3168 = vmatpush1.msra.mxu0 0.0
        %3169 = vmatprep.subr.mxu0 0.0
        %3170 = vmatpush1.msra.mxu0 0.0
        %3171 = vmatprep.subr.mxu0 0.0
        %3172 = vmatpush1.msra.mxu0 0.0
        %3173 = vmatprep.subr.mxu0 0.0
        %3174 = vmatpush1.msra.mxu0 0.0
        %3175 = vmatprep.subr.mxu0 0.0
        %3176 = vmatpush1.msra.mxu0 0.0
        %3177 = vmatprep.subr.mxu0 0.0
        %3178 = vmatpush1.msra.mxu0 0.0
        %3179 = vmatprep.subr.mxu0 0.0
        %3180 = vmatpush1.msra.mxu0 0.0
        %3181 = vmatprep.subr.mxu0 0.0
        %3182 = vmatpush1.msra.mxu0 0.0
        %3183 = vmatprep.subr.mxu0 0.0
        %3184 = vmatpush1.msra.mxu0 0.0
        %3185 = vmatprep.subr.mxu0 0.0
        %3186 = vmatpush1.msra.mxu0 0.0
        %3187 = vmatprep.subr.mxu0 0.0
        %3188 = vmatpush1.msra.mxu0 0.0
        %3189 = vmatprep.subr.mxu0 0.0
        %3190 = vmatpush1.msra.mxu0 0.0
        %3191 = vmatprep.subr.mxu0 0.0
        %3192 = vmatpush1.msra.mxu0 0.0
        %3193 = vmatprep.subr.mxu0 0.0
        %3194 = vmatpush1.msra.mxu0 0.0
        %3195 = vmatprep.subr.mxu0 0.0
        %3196 = vmatpush1.msra.mxu0 0.0
        %3197 = vmatprep.subr.mxu0 0.0
        %3198 = vmatpush1.msra.mxu0 0.0
        %3199 = vmatprep.subr.mxu0 0.0
        %3200 = vmatpush1.msra.mxu0 0.0
        %3201 = vmatprep.subr.mxu0 0.0
        %3202 = vmatpush1.msra.mxu0 0.0
        %3203 = vmatprep.subr.mxu0 0.0
        %3204 = vmatpush1.msra.mxu0 0.0
        %3205 = vmatprep.mubr.f32.mxu0 0.0
        %3206 = vmatmul.mubr.f32.gmra.mrb[0].mxu0 %v673
        %v3207 = vpop.f32.mrb[0].mxu0
        %v3208 = vadd.f32 0.0, %v3207
        %v3209 = vpop.f32.mrb[0].mxu0
        %3210 = vdwg.mxu0
        %3212 = vrot.lane.b32.xlu0 %v3208, 48
        %v3213 = vpop.permute.xlu0 %3212
        %3215 = vst.msk [vmem:[%s164 + $0x8] sm:$0xff] %vm1422, %v3213
        %v3216 = vsel %vm188, %v3208, 0.0
        %3217 = vadd.xlane.f32.xlu0 %v3216
        %v3218 = vpop.xlane.xlu0 %3217
        %v3219 = vadd.f32 %v2995, %v3218
        %v3220 = vmul.f32 %v3208, %v3208
        %v3221 = vsel %vm188, %v3220, 0.0
        %3222 = vadd.xlane.f32.xlu0 %v3221
        %v3223 = vpop.xlane.xlu0 %3222
        %v3224 = vadd.f32 %v3000, %v3223
        %v3225 = vld [vmem:[#allocation2 + $0xc] sm:$0x1]
        %v3226 = vld [vmem:[#allocation2 + $0x1c] sm:$0x1]
        %v3227 = vld [vmem:[#allocation2 + $0x2c] sm:$0x1]
        %v3228 = vld [vmem:[#allocation2 + $0x3c] sm:$0x1]
        %v3229 = vld [vmem:[#allocation2 + $0x4c] sm:$0x1]
        %v3230 = vld [vmem:[#allocation2 + $0x5c] sm:$0x1]
        %v3231 = vld [vmem:[#allocation2 + $0x6c] sm:$0x1]
        %v3232 = vld [vmem:[#allocation2 + $0x7c] sm:$0x1]
        %v3233 = vld [vmem:[#allocation2 + $0x8c] sm:$0x1]
        %v3234 = vld [vmem:[#allocation2 + $0x9c] sm:$0x1]
        %v3235 = vld [vmem:[#allocation2 + $0xac] sm:$0x1]
        %v3236 = vld [vmem:[#allocation2 + $0xbc] sm:$0x1]
        %v3237 = vld [vmem:[#allocation2 + $0xcc] sm:$0x1]
        %v3238 = vld [vmem:[#allocation2 + $0xdc] sm:$0x1]
        %v3239 = vld [vmem:[#allocation2 + $0xec] sm:$0x1]
        %v3240 = vld [vmem:[#allocation2 + $0xfc] sm:$0x1]
        %v3241 = vld [vmem:[#allocation2 + $0x10c] sm:$0x1]
        %v3242 = vld [vmem:[#allocation2 + $0x11c] sm:$0x1]
        %v3243 = vld [vmem:[#allocation2 + $0x12c] sm:$0x1]
        %v3244 = vld [vmem:[#allocation2 + $0x13c] sm:$0x1]
        %v3245 = vld [vmem:[#allocation2 + $0x14c] sm:$0x1]
        %v3246 = vld [vmem:[#allocation2 + $0x15c] sm:$0x1]
        %v3247 = vld [vmem:[#allocation2 + $0x16c] sm:$0x1]
        %v3248 = vld [vmem:[#allocation2 + $0x17c] sm:$0x1]
        %v3249 = vld [vmem:[#allocation2 + $0x18c] sm:$0x1]
        %v3250 = vld [vmem:[#allocation2 + $0x19c] sm:$0x1]
        %v3251 = vld [vmem:[#allocation2 + $0x1ac] sm:$0x1]
        %v3252 = vld [vmem:[#allocation2 + $0x1bc] sm:$0x1]
        %v3253 = vld [vmem:[#allocation2 + $0x1cc] sm:$0x1]
        %v3254 = vld [vmem:[#allocation2 + $0x1dc] sm:$0x1]
        %v3255 = vld [vmem:[#allocation2 + $0x1ec] sm:$0x1]
        %v3256 = vld [vmem:[#allocation2 + $0x1fc] sm:$0x1]
        %v3257 = vld [vmem:[#allocation2 + $0x20c] sm:$0x1]
        %v3258 = vld [vmem:[#allocation2 + $0x21c] sm:$0x1]
        %v3259 = vld [vmem:[#allocation2 + $0x22c] sm:$0x1]
        %v3260 = vld [vmem:[#allocation2 + $0x23c] sm:$0x1]
        %v3297 = vrot.slane %v3226, 7
        %v3298 = vsel %vm599, %v3297, %v3225
        %v3299 = vrot.slane %v3227, 6
        %v3300 = vsel %vm602, %v3299, %v3298
        %v3301 = vrot.slane %v3228, 5
        %v3302 = vsel %vm605, %v3301, %v3300
        %v3303 = vrot.slane %v3229, 4
        %v3304 = vsel %vm608, %v3303, %v3302
        %v3305 = vrot.slane %v3230, 3
        %v3306 = vsel %vm611, %v3305, %v3304
        %v3307 = vrot.slane %v3231, 2
        %v3308 = vsel %vm614, %v3307, %v3306
        %v3309 = vrot.slane %v3232, 1
        %v3310 = vsel %vm617, %v3309, %v3308
        %v3311 = vrot.slane %v3234, 7
        %v3312 = vsel %vm599, %v3311, %v3233
        %v3313 = vrot.slane %v3235, 6
        %v3314 = vsel %vm602, %v3313, %v3312
        %v3315 = vrot.slane %v3236, 5
        %v3316 = vsel %vm605, %v3315, %v3314
        %v3317 = vrot.slane %v3237, 4
        %v3318 = vsel %vm608, %v3317, %v3316
        %v3319 = vrot.slane %v3238, 3
        %v3320 = vsel %vm611, %v3319, %v3318
        %v3321 = vrot.slane %v3239, 2
        %v3322 = vsel %vm614, %v3321, %v3320
        %v3323 = vrot.slane %v3240, 1
        %v3324 = vsel %vm617, %v3323, %v3322
        %v3325 = vrot.slane %v3242, 7
        %v3326 = vsel %vm599, %v3325, %v3241
        %v3327 = vrot.slane %v3243, 6
        %v3328 = vsel %vm602, %v3327, %v3326
        %v3329 = vrot.slane %v3244, 5
        %v3330 = vsel %vm605, %v3329, %v3328
        %v3331 = vrot.slane %v3245, 4
        %v3332 = vsel %vm608, %v3331, %v3330
        %v3333 = vrot.slane %v3246, 3
        %v3334 = vsel %vm611, %v3333, %v3332
        %v3335 = vrot.slane %v3247, 2
        %v3336 = vsel %vm614, %v3335, %v3334
        %v3337 = vrot.slane %v3248, 1
        %v3338 = vsel %vm617, %v3337, %v3336
        %v3339 = vrot.slane %v3250, 7
        %v3340 = vsel %vm599, %v3339, %v3249
        %v3341 = vrot.slane %v3251, 6
        %v3342 = vsel %vm602, %v3341, %v3340
        %v3343 = vrot.slane %v3252, 5
        %v3344 = vsel %vm605, %v3343, %v3342
        %v3345 = vrot.slane %v3253, 4
        %v3346 = vsel %vm608, %v3345, %v3344
        %v3347 = vrot.slane %v3254, 3
        %v3348 = vsel %vm611, %v3347, %v3346
        %v3349 = vrot.slane %v3255, 2
        %v3350 = vsel %vm614, %v3349, %v3348
        %v3351 = vrot.slane %v3256, 1
        %v3352 = vsel %vm617, %v3351, %v3350
        %v3353 = vrot.slane %v3258, 7
        %v3354 = vsel %vm599, %v3353, %v3257
        %v3355 = vrot.slane %v3259, 6
        %v3356 = vsel %vm602, %v3355, %v3354
        %v3357 = vrot.slane %v3260, 5
        %v3358 = vsel %vm605, %v3357, %v3356
        %v3363 = vsel %vm675, %v3358, 0
        %3365 = vmatprep.subr.mxu0 0.0
        %3366 = vmatpush1.msra.mxu0 %v3310
        %3367 = vmatprep.subr.mxu0 0.0
        %3368 = vmatpush1.msra.mxu0 %v3324
        %3369 = vmatprep.subr.mxu0 0.0
        %3370 = vmatpush1.msra.mxu0 %v3338
        %3371 = vmatprep.subr.mxu0 0.0
        %3372 = vmatpush1.msra.mxu0 %v3352
        %3373 = vmatprep.subr.mxu0 0.0
        %3374 = vmatpush1.msra.mxu0 %v3363
        %3375 = vmatprep.subr.mxu0 0.0
        %3376 = vmatpush1.msra.mxu0 0.0
        %3377 = vmatprep.subr.mxu0 0.0
        %3378 = vmatpush1.msra.mxu0 0.0
        %3379 = vmatprep.subr.mxu0 0.0
        %3380 = vmatpush1.msra.mxu0 0.0
        %3381 = vmatprep.subr.mxu0 0.0
        %3382 = vmatpush1.msra.mxu0 0.0
        %3383 = vmatprep.subr.mxu0 0.0
        %3384 = vmatpush1.msra.mxu0 0.0
        %3385 = vmatprep.subr.mxu0 0.0
        %3386 = vmatpush1.msra.mxu0 0.0
        %3387 = vmatprep.subr.mxu0 0.0
        %3388 = vmatpush1.msra.mxu0 0.0
        %3389 = vmatprep.subr.mxu0 0.0
        %3390 = vmatpush1.msra.mxu0 0.0
        %3391 = vmatprep.subr.mxu0 0.0
        %3392 = vmatpush1.msra.mxu0 0.0
        %3393 = vmatprep.subr.mxu0 0.0
        %3394 = vmatpush1.msra.mxu0 0.0
        %3395 = vmatprep.subr.mxu0 0.0
        %3396 = vmatpush1.msra.mxu0 0.0
        %3397 = vmatprep.subr.mxu0 0.0
        %3398 = vmatpush1.msra.mxu0 0.0
        %3399 = vmatprep.subr.mxu0 0.0
        %3400 = vmatpush1.msra.mxu0 0.0
        %3401 = vmatprep.subr.mxu0 0.0
        %3402 = vmatpush1.msra.mxu0 0.0
        %3403 = vmatprep.subr.mxu0 0.0
        %3404 = vmatpush1.msra.mxu0 0.0
        %3405 = vmatprep.subr.mxu0 0.0
        %3406 = vmatpush1.msra.mxu0 0.0
        %3407 = vmatprep.subr.mxu0 0.0
        %3408 = vmatpush1.msra.mxu0 0.0
        %3409 = vmatprep.subr.mxu0 0.0
        %3410 = vmatpush1.msra.mxu0 0.0
        %3411 = vmatprep.subr.mxu0 0.0
        %3412 = vmatpush1.msra.mxu0 0.0
        %3413 = vmatprep.subr.mxu0 0.0
        %3414 = vmatpush1.msra.mxu0 0.0
        %3415 = vmatprep.subr.mxu0 0.0
        %3416 = vmatpush1.msra.mxu0 0.0
        %3417 = vmatprep.subr.mxu0 0.0
        %3418 = vmatpush1.msra.mxu0 0.0
        %3419 = vmatprep.subr.mxu0 0.0
        %3420 = vmatpush1.msra.mxu0 0.0
        %3421 = vmatprep.subr.mxu0 0.0
        %3422 = vmatpush1.msra.mxu0 0.0
        %3423 = vmatprep.subr.mxu0 0.0
        %3424 = vmatpush1.msra.mxu0 0.0
        %3425 = vmatprep.subr.mxu0 0.0
        %3426 = vmatpush1.msra.mxu0 0.0
        %3427 = vmatprep.subr.mxu0 0.0
        %3428 = vmatpush1.msra.mxu0 0.0
        %3429 = vmatprep.mubr.f32.mxu0 0.0
        %3430 = vmatmul.mubr.f32.gmra.mrb[0].mxu0 %v673
        %v3431 = vpop.f32.mrb[0].mxu0
        %v3432 = vadd.f32 0.0, %v3431
        %v3433 = vpop.f32.mrb[0].mxu0
        %3434 = vdwg.mxu0
        %3436 = vrot.lane.b32.xlu0 %v3432, 64
        %v3437 = vpop.permute.xlu0 %3436
        %3439 = vst.msk [vmem:[%s164 + $0x8] sm:$0xff] %vm1647, %v3437
        %v3440 = vsel %vm188, %v3432, 0.0
        %3441 = vadd.xlane.f32.xlu0 %v3440
        %v3442 = vpop.xlane.xlu0 %3441
        %v3443 = vadd.f32 %v3219, %v3442
        %v3444 = vmul.f32 %v3432, %v3432
        %v3445 = vsel %vm188, %v3444, 0.0
        %3446 = vadd.xlane.f32.xlu0 %v3445
        %v3447 = vpop.xlane.xlu0 %3446
        %v3448 = vadd.f32 %v3224, %v3447
        %v3449 = vld [vmem:[#allocation2 + $0xd] sm:$0x1]
        %v3450 = vld [vmem:[#allocation2 + $0x1d] sm:$0x1]
        %v3451 = vld [vmem:[#allocation2 + $0x2d] sm:$0x1]
        %v3452 = vld [vmem:[#allocation2 + $0x3d] sm:$0x1]
        %v3453 = vld [vmem:[#allocation2 + $0x4d] sm:$0x1]
        %v3454 = vld [vmem:[#allocation2 + $0x5d] sm:$0x1]
        %v3455 = vld [vmem:[#allocation2 + $0x6d] sm:$0x1]
        %v3456 = vld [vmem:[#allocation2 + $0x7d] sm:$0x1]
        %v3457 = vld [vmem:[#allocation2 + $0x8d] sm:$0x1]
        %v3458 = vld [vmem:[#allocation2 + $0x9d] sm:$0x1]
        %v3459 = vld [vmem:[#allocation2 + $0xad] sm:$0x1]
        %v3460 = vld [vmem:[#allocation2 + $0xbd] sm:$0x1]
        %v3461 = vld [vmem:[#allocation2 + $0xcd] sm:$0x1]
        %v3462 = vld [vmem:[#allocation2 + $0xdd] sm:$0x1]
        %v3463 = vld [vmem:[#allocation2 + $0xed] sm:$0x1]
        %v3464 = vld [vmem:[#allocation2 + $0xfd] sm:$0x1]
        %v3465 = vld [vmem:[#allocation2 + $0x10d] sm:$0x1]
        %v3466 = vld [vmem:[#allocation2 + $0x11d] sm:$0x1]
        %v3467 = vld [vmem:[#allocation2 + $0x12d] sm:$0x1]
        %v3468 = vld [vmem:[#allocation2 + $0x13d] sm:$0x1]
        %v3469 = vld [vmem:[#allocation2 + $0x14d] sm:$0x1]
        %v3470 = vld [vmem:[#allocation2 + $0x15d] sm:$0x1]
        %v3471 = vld [vmem:[#allocation2 + $0x16d] sm:$0x1]
        %v3472 = vld [vmem:[#allocation2 + $0x17d] sm:$0x1]
        %v3473 = vld [vmem:[#allocation2 + $0x18d] sm:$0x1]
        %v3474 = vld [vmem:[#allocation2 + $0x19d] sm:$0x1]
        %v3475 = vld [vmem:[#allocation2 + $0x1ad] sm:$0x1]
        %v3476 = vld [vmem:[#allocation2 + $0x1bd] sm:$0x1]
        %v3477 = vld [vmem:[#allocation2 + $0x1cd] sm:$0x1]
        %v3478 = vld [vmem:[#allocation2 + $0x1dd] sm:$0x1]
        %v3479 = vld [vmem:[#allocation2 + $0x1ed] sm:$0x1]
        %v3480 = vld [vmem:[#allocation2 + $0x1fd] sm:$0x1]
        %v3481 = vld [vmem:[#allocation2 + $0x20d] sm:$0x1]
        %v3482 = vld [vmem:[#allocation2 + $0x21d] sm:$0x1]
        %v3483 = vld [vmem:[#allocation2 + $0x22d] sm:$0x1]
        %v3484 = vld [vmem:[#allocation2 + $0x23d] sm:$0x1]
        %v3521 = vrot.slane %v3450, 7
        %v3522 = vsel %vm599, %v3521, %v3449
        %v3523 = vrot.slane %v3451, 6
        %v3524 = vsel %vm602, %v3523, %v3522
        %v3525 = vrot.slane %v3452, 5
        %v3526 = vsel %vm605, %v3525, %v3524
        %v3527 = vrot.slane %v3453, 4
        %v3528 = vsel %vm608, %v3527, %v3526
        %v3529 = vrot.slane %v3454, 3
        %v3530 = vsel %vm611, %v3529, %v3528
        %v3531 = vrot.slane %v3455, 2
        %v3532 = vsel %vm614, %v3531, %v3530
        %v3533 = vrot.slane %v3456, 1
        %v3534 = vsel %vm617, %v3533, %v3532
        %v3535 = vrot.slane %v3458, 7
        %v3536 = vsel %vm599, %v3535, %v3457
        %v3537 = vrot.slane %v3459, 6
        %v3538 = vsel %vm602, %v3537, %v3536
        %v3539 = vrot.slane %v3460, 5
        %v3540 = vsel %vm605, %v3539, %v3538
        %v3541 = vrot.slane %v3461, 4
        %v3542 = vsel %vm608, %v3541, %v3540
        %v3543 = vrot.slane %v3462, 3
        %v3544 = vsel %vm611, %v3543, %v3542
        %v3545 = vrot.slane %v3463, 2
        %v3546 = vsel %vm614, %v3545, %v3544
        %v3547 = vrot.slane %v3464, 1
        %v3548 = vsel %vm617, %v3547, %v3546
        %v3549 = vrot.slane %v3466, 7
        %v3550 = vsel %vm599, %v3549, %v3465
        %v3551 = vrot.slane %v3467, 6
        %v3552 = vsel %vm602, %v3551, %v3550
        %v3553 = vrot.slane %v3468, 5
        %v3554 = vsel %vm605, %v3553, %v3552
        %v3555 = vrot.slane %v3469, 4
        %v3556 = vsel %vm608, %v3555, %v3554
        %v3557 = vrot.slane %v3470, 3
        %v3558 = vsel %vm611, %v3557, %v3556
        %v3559 = vrot.slane %v3471, 2
        %v3560 = vsel %vm614, %v3559, %v3558
        %v3561 = vrot.slane %v3472, 1
        %v3562 = vsel %vm617, %v3561, %v3560
        %v3563 = vrot.slane %v3474, 7
        %v3564 = vsel %vm599, %v3563, %v3473
        %v3565 = vrot.slane %v3475, 6
        %v3566 = vsel %vm602, %v3565, %v3564
        %v3567 = vrot.slane %v3476, 5
        %v3568 = vsel %vm605, %v3567, %v3566
        %v3569 = vrot.slane %v3477, 4
        %v3570 = vsel %vm608, %v3569, %v3568
        %v3571 = vrot.slane %v3478, 3
        %v3572 = vsel %vm611, %v3571, %v3570
        %v3573 = vrot.slane %v3479, 2
        %v3574 = vsel %vm614, %v3573, %v3572
        %v3575 = vrot.slane %v3480, 1
        %v3576 = vsel %vm617, %v3575, %v3574
        %v3577 = vrot.slane %v3482, 7
        %v3578 = vsel %vm599, %v3577, %v3481
        %v3579 = vrot.slane %v3483, 6
        %v3580 = vsel %vm602, %v3579, %v3578
        %v3581 = vrot.slane %v3484, 5
        %v3582 = vsel %vm605, %v3581, %v3580
        %v3587 = vsel %vm675, %v3582, 0
        %3589 = vmatprep.subr.mxu0 0.0
        %3590 = vmatpush1.msra.mxu0 %v3534
        %3591 = vmatprep.subr.mxu0 0.0
        %3592 = vmatpush1.msra.mxu0 %v3548
        %3593 = vmatprep.subr.mxu0 0.0
        %3594 = vmatpush1.msra.mxu0 %v3562
        %3595 = vmatprep.subr.mxu0 0.0
        %3596 = vmatpush1.msra.mxu0 %v3576
        %3597 = vmatprep.subr.mxu0 0.0
        %3598 = vmatpush1.msra.mxu0 %v3587
        %3599 = vmatprep.subr.mxu0 0.0
        %3600 = vmatpush1.msra.mxu0 0.0
        %3601 = vmatprep.subr.mxu0 0.0
        %3602 = vmatpush1.msra.mxu0 0.0
        %3603 = vmatprep.subr.mxu0 0.0
        %3604 = vmatpush1.msra.mxu0 0.0
        %3605 = vmatprep.subr.mxu0 0.0
        %3606 = vmatpush1.msra.mxu0 0.0
        %3607 = vmatprep.subr.mxu0 0.0
        %3608 = vmatpush1.msra.mxu0 0.0
        %3609 = vmatprep.subr.mxu0 0.0
        %3610 = vmatpush1.msra.mxu0 0.0
        %3611 = vmatprep.subr.mxu0 0.0
        %3612 = vmatpush1.msra.mxu0 0.0
        %3613 = vmatprep.subr.mxu0 0.0
        %3614 = vmatpush1.msra.mxu0 0.0
        %3615 = vmatprep.subr.mxu0 0.0
        %3616 = vmatpush1.msra.mxu0 0.0
        %3617 = vmatprep.subr.mxu0 0.0
        %3618 = vmatpush1.msra.mxu0 0.0
        %3619 = vmatprep.subr.mxu0 0.0
        %3620 = vmatpush1.msra.mxu0 0.0
        %3621 = vmatprep.subr.mxu0 0.0
        %3622 = vmatpush1.msra.mxu0 0.0
        %3623 = vmatprep.subr.mxu0 0.0
        %3624 = vmatpush1.msra.mxu0 0.0
        %3625 = vmatprep.subr.mxu0 0.0
        %3626 = vmatpush1.msra.mxu0 0.0
        %3627 = vmatprep.subr.mxu0 0.0
        %3628 = vmatpush1.msra.mxu0 0.0
        %3629 = vmatprep.subr.mxu0 0.0
        %3630 = vmatpush1.msra.mxu0 0.0
        %3631 = vmatprep.subr.mxu0 0.0
        %3632 = vmatpush1.msra.mxu0 0.0
        %3633 = vmatprep.subr.mxu0 0.0
        %3634 = vmatpush1.msra.mxu0 0.0
        %3635 = vmatprep.subr.mxu0 0.0
        %3636 = vmatpush1.msra.mxu0 0.0
        %3637 = vmatprep.subr.mxu0 0.0
        %3638 = vmatpush1.msra.mxu0 0.0
        %3639 = vmatprep.subr.mxu0 0.0
        %3640 = vmatpush1.msra.mxu0 0.0
        %3641 = vmatprep.subr.mxu0 0.0
        %3642 = vmatpush1.msra.mxu0 0.0
        %3643 = vmatprep.subr.mxu0 0.0
        %3644 = vmatpush1.msra.mxu0 0.0
        %3645 = vmatprep.subr.mxu0 0.0
        %3646 = vmatpush1.msra.mxu0 0.0
        %3647 = vmatprep.subr.mxu0 0.0
        %3648 = vmatpush1.msra.mxu0 0.0
        %3649 = vmatprep.subr.mxu0 0.0
        %3650 = vmatpush1.msra.mxu0 0.0
        %3651 = vmatprep.subr.mxu0 0.0
        %3652 = vmatpush1.msra.mxu0 0.0
        %3653 = vmatprep.mubr.f32.mxu0 0.0
        %3654 = vmatmul.mubr.f32.gmra.mrb[0].mxu0 %v673
        %v3655 = vpop.f32.mrb[0].mxu0
        %v3656 = vadd.f32 0.0, %v3655
        %v3657 = vpop.f32.mrb[0].mxu0
        %3658 = vdwg.mxu0
        %3660 = vrot.lane.b32.xlu0 %v3656, 80
        %v3661 = vpop.permute.xlu0 %3660
        %3663 = vst.msk [vmem:[%s164 + $0x8] sm:$0xff] %vm1872, %v3661
        %v3664 = vsel %vm188, %v3656, 0.0
        %3665 = vadd.xlane.f32.xlu0 %v3664
        %v3666 = vpop.xlane.xlu0 %3665
        %v3667 = vadd.f32 %v3443, %v3666
        %v3668 = vmul.f32 %v3656, %v3656
        %v3669 = vsel %vm188, %v3668, 0.0
        %3670 = vadd.xlane.f32.xlu0 %v3669
        %v3671 = vpop.xlane.xlu0 %3670
        %v3672 = vadd.f32 %v3448, %v3671
        %v3673 = vld [vmem:[#allocation2 + $0xe] sm:$0x1]
        %v3674 = vld [vmem:[#allocation2 + $0x1e] sm:$0x1]
        %v3675 = vld [vmem:[#allocation2 + $0x2e] sm:$0x1]
        %v3676 = vld [vmem:[#allocation2 + $0x3e] sm:$0x1]
        %v3677 = vld [vmem:[#allocation2 + $0x4e] sm:$0x1]
        %v3678 = vld [vmem:[#allocation2 + $0x5e] sm:$0x1]
        %v3679 = vld [vmem:[#allocation2 + $0x6e] sm:$0x1]
        %v3680 = vld [vmem:[#allocation2 + $0x7e] sm:$0x1]
        %v3681 = vld [vmem:[#allocation2 + $0x8e] sm:$0x1]
        %v3682 = vld [vmem:[#allocation2 + $0x9e] sm:$0x1]
        %v3683 = vld [vmem:[#allocation2 + $0xae] sm:$0x1]
        %v3684 = vld [vmem:[#allocation2 + $0xbe] sm:$0x1]
        %v3685 = vld [vmem:[#allocation2 + $0xce] sm:$0x1]
        %v3686 = vld [vmem:[#allocation2 + $0xde] sm:$0x1]
        %v3687 = vld [vmem:[#allocation2 + $0xee] sm:$0x1]
        %v3688 = vld [vmem:[#allocation2 + $0xfe] sm:$0x1]
        %v3689 = vld [vmem:[#allocation2 + $0x10e] sm:$0x1]
        %v3690 = vld [vmem:[#allocation2 + $0x11e] sm:$0x1]
        %v3691 = vld [vmem:[#allocation2 + $0x12e] sm:$0x1]
        %v3692 = vld [vmem:[#allocation2 + $0x13e] sm:$0x1]
        %v3693 = vld [vmem:[#allocation2 + $0x14e] sm:$0x1]
        %v3694 = vld [vmem:[#allocation2 + $0x15e] sm:$0x1]
        %v3695 = vld [vmem:[#allocation2 + $0x16e] sm:$0x1]
        %v3696 = vld [vmem:[#allocation2 + $0x17e] sm:$0x1]
        %v3697 = vld [vmem:[#allocation2 + $0x18e] sm:$0x1]
        %v3698 = vld [vmem:[#allocation2 + $0x19e] sm:$0x1]
        %v3699 = vld [vmem:[#allocation2 + $0x1ae] sm:$0x1]
        %v3700 = vld [vmem:[#allocation2 + $0x1be] sm:$0x1]
        %v3701 = vld [vmem:[#allocation2 + $0x1ce] sm:$0x1]
        %v3702 = vld [vmem:[#allocation2 + $0x1de] sm:$0x1]
        %v3703 = vld [vmem:[#allocation2 + $0x1ee] sm:$0x1]
        %v3704 = vld [vmem:[#allocation2 + $0x1fe] sm:$0x1]
        %v3705 = vld [vmem:[#allocation2 + $0x20e] sm:$0x1]
        %v3706 = vld [vmem:[#allocation2 + $0x21e] sm:$0x1]
        %v3707 = vld [vmem:[#allocation2 + $0x22e] sm:$0x1]
        %v3708 = vld [vmem:[#allocation2 + $0x23e] sm:$0x1]
        %v3745 = vrot.slane %v3674, 7
        %v3746 = vsel %vm599, %v3745, %v3673
        %v3747 = vrot.slane %v3675, 6
        %v3748 = vsel %vm602, %v3747, %v3746
        %v3749 = vrot.slane %v3676, 5
        %v3750 = vsel %vm605, %v3749, %v3748
        %v3751 = vrot.slane %v3677, 4
        %v3752 = vsel %vm608, %v3751, %v3750
        %v3753 = vrot.slane %v3678, 3
        %v3754 = vsel %vm611, %v3753, %v3752
        %v3755 = vrot.slane %v3679, 2
        %v3756 = vsel %vm614, %v3755, %v3754
        %v3757 = vrot.slane %v3680, 1
        %v3758 = vsel %vm617, %v3757, %v3756
        %v3759 = vrot.slane %v3682, 7
        %v3760 = vsel %vm599, %v3759, %v3681
        %v3761 = vrot.slane %v3683, 6
        %v3762 = vsel %vm602, %v3761, %v3760
        %v3763 = vrot.slane %v3684, 5
        %v3764 = vsel %vm605, %v3763, %v3762
        %v3765 = vrot.slane %v3685, 4
        %v3766 = vsel %vm608, %v3765, %v3764
        %v3767 = vrot.slane %v3686, 3
        %v3768 = vsel %vm611, %v3767, %v3766
        %v3769 = vrot.slane %v3687, 2
        %v3770 = vsel %vm614, %v3769, %v3768
        %v3771 = vrot.slane %v3688, 1
        %v3772 = vsel %vm617, %v3771, %v3770
        %v3773 = vrot.slane %v3690, 7
        %v3774 = vsel %vm599, %v3773, %v3689
        %v3775 = vrot.slane %v3691, 6
        %v3776 = vsel %vm602, %v3775, %v3774
        %v3777 = vrot.slane %v3692, 5
        %v3778 = vsel %vm605, %v3777, %v3776
        %v3779 = vrot.slane %v3693, 4
        %v3780 = vsel %vm608, %v3779, %v3778
        %v3781 = vrot.slane %v3694, 3
        %v3782 = vsel %vm611, %v3781, %v3780
        %v3783 = vrot.slane %v3695, 2
        %v3784 = vsel %vm614, %v3783, %v3782
        %v3785 = vrot.slane %v3696, 1
        %v3786 = vsel %vm617, %v3785, %v3784
        %v3787 = vrot.slane %v3698, 7
        %v3788 = vsel %vm599, %v3787, %v3697
        %v3789 = vrot.slane %v3699, 6
        %v3790 = vsel %vm602, %v3789, %v3788
        %v3791 = vrot.slane %v3700, 5
        %v3792 = vsel %vm605, %v3791, %v3790
        %v3793 = vrot.slane %v3701, 4
        %v3794 = vsel %vm608, %v3793, %v3792
        %v3795 = vrot.slane %v3702, 3
        %v3796 = vsel %vm611, %v3795, %v3794
        %v3797 = vrot.slane %v3703, 2
        %v3798 = vsel %vm614, %v3797, %v3796
        %v3799 = vrot.slane %v3704, 1
        %v3800 = vsel %vm617, %v3799, %v3798
        %v3801 = vrot.slane %v3706, 7
        %v3802 = vsel %vm599, %v3801, %v3705
        %v3803 = vrot.slane %v3707, 6
        %v3804 = vsel %vm602, %v3803, %v3802
        %v3805 = vrot.slane %v3708, 5
        %v3806 = vsel %vm605, %v3805, %v3804
        %v3811 = vsel %vm675, %v3806, 0
        %3813 = vmatprep.subr.mxu0 0.0
        %3814 = vmatpush1.msra.mxu0 %v3758
        %3815 = vmatprep.subr.mxu0 0.0
        %3816 = vmatpush1.msra.mxu0 %v3772
        %3817 = vmatprep.subr.mxu0 0.0
        %3818 = vmatpush1.msra.mxu0 %v3786
        %3819 = vmatprep.subr.mxu0 0.0
        %3820 = vmatpush1.msra.mxu0 %v3800
        %3821 = vmatprep.subr.mxu0 0.0
        %3822 = vmatpush1.msra.mxu0 %v3811
        %3823 = vmatprep.subr.mxu0 0.0
        %3824 = vmatpush1.msra.mxu0 0.0
        %3825 = vmatprep.subr.mxu0 0.0
        %3826 = vmatpush1.msra.mxu0 0.0
        %3827 = vmatprep.subr.mxu0 0.0
        %3828 = vmatpush1.msra.mxu0 0.0
        %3829 = vmatprep.subr.mxu0 0.0
        %3830 = vmatpush1.msra.mxu0 0.0
        %3831 = vmatprep.subr.mxu0 0.0
        %3832 = vmatpush1.msra.mxu0 0.0
        %3833 = vmatprep.subr.mxu0 0.0
        %3834 = vmatpush1.msra.mxu0 0.0
        %3835 = vmatprep.subr.mxu0 0.0
        %3836 = vmatpush1.msra.mxu0 0.0
        %3837 = vmatprep.subr.mxu0 0.0
        %3838 = vmatpush1.msra.mxu0 0.0
        %3839 = vmatprep.subr.mxu0 0.0
        %3840 = vmatpush1.msra.mxu0 0.0
        %3841 = vmatprep.subr.mxu0 0.0
        %3842 = vmatpush1.msra.mxu0 0.0
        %3843 = vmatprep.subr.mxu0 0.0
        %3844 = vmatpush1.msra.mxu0 0.0
        %3845 = vmatprep.subr.mxu0 0.0
        %3846 = vmatpush1.msra.mxu0 0.0
        %3847 = vmatprep.subr.mxu0 0.0
        %3848 = vmatpush1.msra.mxu0 0.0
        %3849 = vmatprep.subr.mxu0 0.0
        %3850 = vmatpush1.msra.mxu0 0.0
        %3851 = vmatprep.subr.mxu0 0.0
        %3852 = vmatpush1.msra.mxu0 0.0
        %3853 = vmatprep.subr.mxu0 0.0
        %3854 = vmatpush1.msra.mxu0 0.0
        %3855 = vmatprep.subr.mxu0 0.0
        %3856 = vmatpush1.msra.mxu0 0.0
        %3857 = vmatprep.subr.mxu0 0.0
        %3858 = vmatpush1.msra.mxu0 0.0
        %3859 = vmatprep.subr.mxu0 0.0
        %3860 = vmatpush1.msra.mxu0 0.0
        %3861 = vmatprep.subr.mxu0 0.0
        %3862 = vmatpush1.msra.mxu0 0.0
        %3863 = vmatprep.subr.mxu0 0.0
        %3864 = vmatpush1.msra.mxu0 0.0
        %3865 = vmatprep.subr.mxu0 0.0
        %3866 = vmatpush1.msra.mxu0 0.0
        %3867 = vmatprep.subr.mxu0 0.0
        %3868 = vmatpush1.msra.mxu0 0.0
        %3869 = vmatprep.subr.mxu0 0.0
        %3870 = vmatpush1.msra.mxu0 0.0
        %3871 = vmatprep.subr.mxu0 0.0
        %3872 = vmatpush1.msra.mxu0 0.0
        %3873 = vmatprep.subr.mxu0 0.0
        %3874 = vmatpush1.msra.mxu0 0.0
        %3875 = vmatprep.subr.mxu0 0.0
        %3876 = vmatpush1.msra.mxu0 0.0
        %3877 = vmatprep.mubr.f32.mxu0 0.0
        %3878 = vmatmul.mubr.f32.gmra.mrb[0].mxu0 %v673
        %v3879 = vpop.f32.mrb[0].mxu0
        %v3880 = vadd.f32 0.0, %v3879
        %v3881 = vpop.f32.mrb[0].mxu0
        %3882 = vdwg.mxu0
        %3884 = vrot.lane.b32.xlu0 %v3880, 96
        %v3885 = vpop.permute.xlu0 %3884
        %3887 = vst.msk [vmem:[%s164 + $0x8] sm:$0xff] %vm2097, %v3885
        %v3888 = vsel %vm188, %v3880, 0.0
        %3889 = vadd.xlane.f32.xlu0 %v3888
        %v3890 = vpop.xlane.xlu0 %3889
        %v3891 = vadd.f32 %v3667, %v3890
        %v3892 = vmul.f32 %v3880, %v3880
        %v3893 = vsel %vm188, %v3892, 0.0
        %3894 = vadd.xlane.f32.xlu0 %v3893
        %v3895 = vpop.xlane.xlu0 %3894
        %v3896 = vadd.f32 %v3672, %v3895
        %v3897 = vld [vmem:[#allocation2 + $0xf] sm:$0x1]
        %v3898 = vld [vmem:[#allocation2 + $0x1f] sm:$0x1]
        %v3899 = vld [vmem:[#allocation2 + $0x2f] sm:$0x1]
        %v3900 = vld [vmem:[#allocation2 + $0x3f] sm:$0x1]
        %v3901 = vld [vmem:[#allocation2 + $0x4f] sm:$0x1]
        %v3902 = vld [vmem:[#allocation2 + $0x5f] sm:$0x1]
        %v3903 = vld [vmem:[#allocation2 + $0x6f] sm:$0x1]
        %v3904 = vld [vmem:[#allocation2 + $0x7f] sm:$0x1]
        %v3905 = vld [vmem:[#allocation2 + $0x8f] sm:$0x1]
        %v3906 = vld [vmem:[#allocation2 + $0x9f] sm:$0x1]
        %v3907 = vld [vmem:[#allocation2 + $0xaf] sm:$0x1]
        %v3908 = vld [vmem:[#allocation2 + $0xbf] sm:$0x1]
        %v3909 = vld [vmem:[#allocation2 + $0xcf] sm:$0x1]
        %v3910 = vld [vmem:[#allocation2 + $0xdf] sm:$0x1]
        %v3911 = vld [vmem:[#allocation2 + $0xef] sm:$0x1]
        %v3912 = vld [vmem:[#allocation2 + $0xff] sm:$0x1]
        %v3913 = vld [vmem:[#allocation2 + $0x10f] sm:$0x1]
        %v3914 = vld [vmem:[#allocation2 + $0x11f] sm:$0x1]
        %v3915 = vld [vmem:[#allocation2 + $0x12f] sm:$0x1]
        %v3916 = vld [vmem:[#allocation2 + $0x13f] sm:$0x1]
        %v3917 = vld [vmem:[#allocation2 + $0x14f] sm:$0x1]
        %v3918 = vld [vmem:[#allocation2 + $0x15f] sm:$0x1]
        %v3919 = vld [vmem:[#allocation2 + $0x16f] sm:$0x1]
        %v3920 = vld [vmem:[#allocation2 + $0x17f] sm:$0x1]
        %v3921 = vld [vmem:[#allocation2 + $0x18f] sm:$0x1]
        %v3922 = vld [vmem:[#allocation2 + $0x19f] sm:$0x1]
        %v3923 = vld [vmem:[#allocation2 + $0x1af] sm:$0x1]
        %v3924 = vld [vmem:[#allocation2 + $0x1bf] sm:$0x1]
        %v3925 = vld [vmem:[#allocation2 + $0x1cf] sm:$0x1]
        %v3926 = vld [vmem:[#allocation2 + $0x1df] sm:$0x1]
        %v3927 = vld [vmem:[#allocation2 + $0x1ef] sm:$0x1]
        %v3928 = vld [vmem:[#allocation2 + $0x1ff] sm:$0x1]
        %v3929 = vld [vmem:[#allocation2 + $0x20f] sm:$0x1]
        %v3930 = vld [vmem:[#allocation2 + $0x21f] sm:$0x1]
        %v3931 = vld [vmem:[#allocation2 + $0x22f] sm:$0x1]
        %v3932 = vld [vmem:[#allocation2 + $0x23f] sm:$0x1]
        %v3969 = vrot.slane %v3898, 7
        %v3970 = vsel %vm599, %v3969, %v3897
        %v3971 = vrot.slane %v3899, 6
        %v3972 = vsel %vm602, %v3971, %v3970
        %v3973 = vrot.slane %v3900, 5
        %v3974 = vsel %vm605, %v3973, %v3972
        %v3975 = vrot.slane %v3901, 4
        %v3976 = vsel %vm608, %v3975, %v3974
        %v3977 = vrot.slane %v3902, 3
        %v3978 = vsel %vm611, %v3977, %v3976
        %v3979 = vrot.slane %v3903, 2
        %v3980 = vsel %vm614, %v3979, %v3978
        %v3981 = vrot.slane %v3904, 1
        %v3982 = vsel %vm617, %v3981, %v3980
        %v3983 = vrot.slane %v3906, 7
        %v3984 = vsel %vm599, %v3983, %v3905
        %v3985 = vrot.slane %v3907, 6
        %v3986 = vsel %vm602, %v3985, %v3984
        %v3987 = vrot.slane %v3908, 5
        %v3988 = vsel %vm605, %v3987, %v3986
        %v3989 = vrot.slane %v3909, 4
        %v3990 = vsel %vm608, %v3989, %v3988
        %v3991 = vrot.slane %v3910, 3
        %v3992 = vsel %vm611, %v3991, %v3990
        %v3993 = vrot.slane %v3911, 2
        %v3994 = vsel %vm614, %v3993, %v3992
        %v3995 = vrot.slane %v3912, 1
        %v3996 = vsel %vm617, %v3995, %v3994
        %v3997 = vrot.slane %v3914, 7
        %v3998 = vsel %vm599, %v3997, %v3913
        %v3999 = vrot.slane %v3915, 6
        %v4000 = vsel %vm602, %v3999, %v3998
        %v4001 = vrot.slane %v3916, 5
        %v4002 = vsel %vm605, %v4001, %v4000
        %v4003 = vrot.slane %v3917, 4
        %v4004 = vsel %vm608, %v4003, %v4002
        %v4005 = vrot.slane %v3918, 3
        %v4006 = vsel %vm611, %v4005, %v4004
        %v4007 = vrot.slane %v3919, 2
        %v4008 = vsel %vm614, %v4007, %v4006
        %v4009 = vrot.slane %v3920, 1
        %v4010 = vsel %vm617, %v4009, %v4008
        %v4011 = vrot.slane %v3922, 7
        %v4012 = vsel %vm599, %v4011, %v3921
        %v4013 = vrot.slane %v3923, 6
        %v4014 = vsel %vm602, %v4013, %v4012
        %v4015 = vrot.slane %v3924, 5
        %v4016 = vsel %vm605, %v4015, %v4014
        %v4017 = vrot.slane %v3925, 4
        %v4018 = vsel %vm608, %v4017, %v4016
        %v4019 = vrot.slane %v3926, 3
        %v4020 = vsel %vm611, %v4019, %v4018
        %v4021 = vrot.slane %v3927, 2
        %v4022 = vsel %vm614, %v4021, %v4020
        %v4023 = vrot.slane %v3928, 1
        %v4024 = vsel %vm617, %v4023, %v4022
        %v4025 = vrot.slane %v3930, 7
        %v4026 = vsel %vm599, %v4025, %v3929
        %v4027 = vrot.slane %v3931, 6
        %v4028 = vsel %vm602, %v4027, %v4026
        %v4029 = vrot.slane %v3932, 5
        %v4030 = vsel %vm605, %v4029, %v4028
        %v4035 = vsel %vm675, %v4030, 0
        %4037 = vmatprep.subr.mxu0 0.0
        %4038 = vmatpush1.msra.mxu0 %v3982
        %4039 = vmatprep.subr.mxu0 0.0
        %4040 = vmatpush1.msra.mxu0 %v3996
        %4041 = vmatprep.subr.mxu0 0.0
        %4042 = vmatpush1.msra.mxu0 %v4010
        %4043 = vmatprep.subr.mxu0 0.0
        %4044 = vmatpush1.msra.mxu0 %v4024
        %4045 = vmatprep.subr.mxu0 0.0
        %4046 = vmatpush1.msra.mxu0 %v4035
        %4047 = vmatprep.subr.mxu0 0.0
        %4048 = vmatpush1.msra.mxu0 0.0
        %4049 = vmatprep.subr.mxu0 0.0
        %4050 = vmatpush1.msra.mxu0 0.0
        %4051 = vmatprep.subr.mxu0 0.0
        %4052 = vmatpush1.msra.mxu0 0.0
        %4053 = vmatprep.subr.mxu0 0.0
        %4054 = vmatpush1.msra.mxu0 0.0
        %4055 = vmatprep.subr.mxu0 0.0
        %4056 = vmatpush1.msra.mxu0 0.0
        %4057 = vmatprep.subr.mxu0 0.0
        %4058 = vmatpush1.msra.mxu0 0.0
        %4059 = vmatprep.subr.mxu0 0.0
        %4060 = vmatpush1.msra.mxu0 0.0
        %4061 = vmatprep.subr.mxu0 0.0
        %4062 = vmatpush1.msra.mxu0 0.0
        %4063 = vmatprep.subr.mxu0 0.0
        %4064 = vmatpush1.msra.mxu0 0.0
        %4065 = vmatprep.subr.mxu0 0.0
        %4066 = vmatpush1.msra.mxu0 0.0
        %4067 = vmatprep.subr.mxu0 0.0
        %4068 = vmatpush1.msra.mxu0 0.0
        %4069 = vmatprep.subr.mxu0 0.0
        %4070 = vmatpush1.msra.mxu0 0.0
        %4071 = vmatprep.subr.mxu0 0.0
        %4072 = vmatpush1.msra.mxu0 0.0
        %4073 = vmatprep.subr.mxu0 0.0
        %4074 = vmatpush1.msra.mxu0 0.0
        %4075 = vmatprep.subr.mxu0 0.0
        %4076 = vmatpush1.msra.mxu0 0.0
        %4077 = vmatprep.subr.mxu0 0.0
        %4078 = vmatpush1.msra.mxu0 0.0
        %4079 = vmatprep.subr.mxu0 0.0
        %4080 = vmatpush1.msra.mxu0 0.0
        %4081 = vmatprep.subr.mxu0 0.0
        %4082 = vmatpush1.msra.mxu0 0.0
        %4083 = vmatprep.subr.mxu0 0.0
        %4084 = vmatpush1.msra.mxu0 0.0
        %4085 = vmatprep.subr.mxu0 0.0
        %4086 = vmatpush1.msra.mxu0 0.0
        %4087 = vmatprep.subr.mxu0 0.0
        %4088 = vmatpush1.msra.mxu0 0.0
        %4089 = vmatprep.subr.mxu0 0.0
        %4090 = vmatpush1.msra.mxu0 0.0
        %4091 = vmatprep.subr.mxu0 0.0
        %4092 = vmatpush1.msra.mxu0 0.0
        %4093 = vmatprep.subr.mxu0 0.0
        %4094 = vmatpush1.msra.mxu0 0.0
        %4095 = vmatprep.subr.mxu0 0.0
        %4096 = vmatpush1.msra.mxu0 0.0
        %4097 = vmatprep.subr.mxu0 0.0
        %4098 = vmatpush1.msra.mxu0 0.0
        %4099 = vmatprep.subr.mxu0 0.0
        %4100 = vmatpush1.msra.mxu0 0.0
        %4101 = vmatprep.mubr.f32.mxu0 0.0
        %4102 = vmatmul.mubr.f32.gmra.mrb[0].mxu0 %v673
        %v4103 = vpop.f32.mrb[0].mxu0
        %v4104 = vadd.f32 0.0, %v4103
        %v4105 = vpop.f32.mrb[0].mxu0
        %4106 = vdwg.mxu0
        %4108 = vrot.lane.b32.xlu0 %v4104, 112
        %v4109 = vpop.permute.xlu0 %4108
        %4111 = vst.msk [vmem:[%s164 + $0x8] sm:$0xff] %vm2322, %v4109
        %v4112 = vsel %vm188, %v4104, 0.0
        %4113 = vadd.xlane.f32.xlu0 %v4112
        %v4114 = vpop.xlane.xlu0 %4113
        %v4115 = vadd.f32 %v3891, %v4114
        %v4116 = vmul.f32 %v4104, %v4104
        %v4117 = vsel %vm188, %v4116, 0.0
        %4118 = vadd.xlane.f32.xlu0 %v4117
        %v4119 = vpop.xlane.xlu0 %4118
        %v4120 = vadd.f32 %v3896, %v4119
        %vm4121 = vcmask 7168
        %4122 = vst.msk [vmem:[%s179] sm:$0xff] %vm4121, %v4115
        %vm4123 = vcmask 15368
        %4124 = vst.msk [vmem:[%s179] sm:$0xff] %vm4123, %v4120
        %s4125 = sand.u32 %s73, 1
        %s4126 = scalar_lea.sflag [#allocation4], %s4125
        %s4127 = sand.u32 %s73, 1
        %s4128 = smul.addr %s4127, 16
        %s4129 = scalar_lea.vmem [#allocation3], %s4128
        %p4130 = scmp.lt.s32.totalorder %s18, 1
        %s4131 = scalar_select %p4130, %s18, 1
        %s4132 = smul.addr %s4131, 8
        %s4133 = scalar_lea.vmem %s3, %s4132
        // Predicated region
        $region29: #{tpu_custom_call.1} parent=27 // pred_check
          %p4134 = pneg %p83
        $region30: #{tpu_custom_call.1} parent=27 // pred_check_branch
          %4136 = sbr.rel (%p4134) target = $region32
        $region31: #{tpu_custom_call.1} parent=27 // pred_region
          %s4138 = ssub.s32 256, 256
          %4139 = vsyncadd %s4126, %s4138
          %s4140 = smul.addr %s18, 2
          %s4141 = smul.addr %s4140, 128
          %s4142 = scalar_lea.hbm %s2, %s4141
          %s4144 = sshll.u32 %s4129, 4
          %s4145 = int_to_ptr.vmem [resolvable:$true] %s4144
          %4147 = dma.vmem_to_hbm [thread:$0]  %s4145, 256, %s4142, %s4126
        $region32: #{tpu_custom_call.1} parent=27 // pred_fallthru
          _
        // Predicated region
        $region33: #{tpu_custom_call.1} parent=27 // pred_check
          %p4148 = pneg %p109
        $region34: #{tpu_custom_call.1} parent=27 // pred_check_branch
          %4150 = sbr.rel (%p4148) target = $region36
        $region35: #{tpu_custom_call.1} parent=27 // pred_region
          _
        $region36: #{tpu_custom_call.1} parent=27 // pred_fallthru
          _
      $region28: #{tpu_custom_call.1} parent=5 // pred_fallthru
        _
      %p4151 = scmp.le.s32.totalorder 2, %s13
      // Predicated region
      $region37: #{tpu_custom_call.1} parent=5 // pred_check
        %p4152 = pneg %p4151
      $region38: #{tpu_custom_call.1} parent=5 // pred_check_branch
        %4154 = sbr.rel (%p4152) target = $region40
      $region39: #{tpu_custom_call.1} parent=5 // pred_region
        %s4155 = ssub.s32 %s13, 2
        // Predicated region
        $region41: #{tpu_custom_call.1} parent=39 // pred_check
          %p4156 = pneg %p89
        $region42: #{tpu_custom_call.1} parent=39 // pred_check_branch
          %4158 = sbr.rel (%p4156) target = $region44
        $region43: #{tpu_custom_call.1} parent=39 // pred_region
          %s4159 = sand.u32 %s74, 1
          %s4160 = scalar_lea.sflag [#allocation4], %s4159
          %s4161 = sand.u32 %s74, 1
          %s4162 = smul.addr %s4161, 16
          %s4163 = scalar_lea.vmem [#allocation3], %s4162
          %4164 = dma.done %s4160, 256
        $region44: #{tpu_custom_call.1} parent=39 // pred_fallthru
          _
        // Predicated region
        $region45: #{tpu_custom_call.1} parent=39 // pred_check
          %p4165 = pneg %p115
        $region46: #{tpu_custom_call.1} parent=39 // pred_check_branch
          %4167 = sbr.rel (%p4165) target = $region48
        $region47: #{tpu_custom_call.1} parent=39 // pred_region
          %p4168 = scmp.lt.s32.totalorder %s19, 1
          %s4169 = scalar_select %p4168, %s19, 1
          %s4170 = smul.addr %s4169, 8
          %s4171 = scalar_lea.vmem %s3, %s4170
        $region48: #{tpu_custom_call.1} parent=39 // pred_fallthru
          _
      $region40: #{tpu_custom_call.1} parent=5 // pred_fallthru
        _
    $region6: #{tpu_custom_call.1} parent=1 // loop_footer
      %s17 = sadd.s32 1, %s13
    $region7: #{tpu_custom_call.1} parent=1 // loop_footer_branch
      %12 = sbr.rel target = $region3
    $region8: #{tpu_custom_call.1} parent=1 // loop_exit
      _
    %4172 = vsyncpa [#allocation4], 1
    %s4173 = scalar_lea.sflag [#allocation4], 1
    %4174 = vsyncpa %s4173, 1

</llo_original>
